<compile_context>
chip_gen: v7x
topology: tpu7x:2x2x1
jax: 0.10.0
libtpu: 0.0.40
codegen_flags: <defaults>
</compile_context>

<pallas_src>
import functools

import numpy as np
import jax
import jax.numpy as jnp
from jax.experimental import pallas as pl
from jax.experimental.pallas import tpu as pltpu


def pxl_attn_kernel(x_ref, wa_ref, ba_ref, wf_ref, bf_ref, msk_ref, out_ref,
                    *, S, H, W, C):
    """One batch block per grid step; all intermediates stay in VMEM.

    x_ref:   (M, S*C)    bf16  per-satellite features, satellites packed on lanes
    wa_ref:  (S*C, S*C)  bf16  block-diagonal 1x1-conv weights (logits = x @ wa)
    ba_ref:  (1, S*C)    f32   concatenated 1x1-conv biases
    wf_ref:  (9*C, NCP)  bf16  K-concatenated, lane-padded 3x3 weights
    bf_ref:  (1, NCP)    f32   lane-padded final bias
    msk_ref: (M, 9)      f32   {0,1} border masks per 3x3 tap (k = kh*3+kw)
    out_ref: (M, NCP)    bf16  lane-dense output slab
    """
    M = x_ref.shape[0]

    x_bf = x_ref[...]                                   # bf16 MXU operand
    x_f32 = x_bf.astype(jnp.float32)                    # f32 VPU path

    # ---- all S PixelWiseAttention 1x1 convs as ONE block-diagonal matmul
    logits = jnp.dot(x_bf, wa_ref[...],
                     preferred_element_type=jnp.float32) + ba_ref[...]
    att = x_f32 * jax.nn.sigmoid(logits)                # (M, S*C) f32

    # ---- softmax over the satellite axis + weighted fusion
    if S == 2:
        # closed form: softmax([a0, a1])[0] = sigmoid(a0 - a1)
        w0 = jax.nn.sigmoid(att[:, :C] - att[:, C:])
        y0 = x_f32[:, :C]
        y1 = x_f32[:, C:]
        fused = y1 + (y0 - y1) * w0                     # (M, C) f32
    else:
        # streamed reduction: no stacked e / wsm tensors
        a_s = [att[:, s * C:(s + 1) * C] for s in range(S)]
        y_s = [x_f32[:, s * C:(s + 1) * C] for s in range(S)]
        m = a_s[0]
        for s in range(1, S):
            m = jnp.maximum(m, a_s[s])
        e0 = jnp.exp(a_s[0] - m)
        den = e0
        num = y_s[0] * e0
        for s in range(1, S):
            es = jnp.exp(a_s[s] - m)
            den = den + es
            num = num + y_s[s] * es
        fused = num * pl.reciprocal(den, approx=True)

    # ---- final 3x3 conv (padding=1) as ONE (M, 9C) x (9C, NCP) matmul.
    # Tap k=(kh,kw): value at flat row j is fused[(j + d) mod M] with
    # d = (kh-1)*W + (kw-1), zeroed by the precomputed border mask wherever
    # the tap would read conv padding (also kills wrap across image edges).
    msk = msk_ref[...]                                  # (M, 9) f32
    taps = []
    for kh in range(3):
        for kw in range(3):
            d = (kh - 1) * W + (kw - 1)
            k = kh * 3 + kw
            if d == 0:
                t = fused
            else:
                t = pltpu.roll(fused, (-d) % M, axis=0) * msk[:, k:k + 1]
            taps.append(t.astype(jnp.bfloat16))
    patches = jnp.concatenate(taps, axis=-1)            # (M, 9C) bf16
    out = jnp.dot(patches, wf_ref[...], preferred_element_type=jnp.float32)
    out_ref[...] = (out + bf_ref[...]).astype(out_ref.dtype)


def _choose_block_b(B, HW, max_rows=2048):
    """Largest divisor of B s.t. block_B*HW <= max_rows and >=2 grid steps."""
    best = 1
    for d in range(1, B + 1):
        if B % d:
            continue
        if d * HW > max_rows:
            continue
        if B > 1 and B // d < 2:      # keep both v7x TensorCores busy
            continue
        best = d
    return best


def _tap_masks(block_B, H, W):
    """(block_B*H*W, 9) f32 {0,1} masks; column k = kh*3+kw of the 3x3 stencil."""
    hh, ww = np.meshgrid(np.arange(H), np.arange(W), indexing="ij")
    cols = []
    for kh in range(3):
        for kw in range(3):
            dh, dw = kh - 1, kw - 1
            ok = ((hh + dh >= 0) & (hh + dh < H) &
                  (ww + dw >= 0) & (ww + dw < W))
            cols.append(ok.reshape(-1))
    m = np.stack(cols, axis=-1).astype(np.float32)       # (H*W, 9)
    return np.tile(m, (block_B, 1))                      # (block_B*H*W, 9)


def _vmem_limit_bytes(M_blk, S, C, NCP):
    """Footprint-derived VMEM limit (v7x has only 64 MiB physical)."""
    sc = S * C
    bytes_in = M_blk * sc * 2                            # bf16 input block
    bytes_out = M_blk * NCP * 2                          # bf16 output block
    bytes_msk = M_blk * 9 * 4
    bytes_w = sc * sc * 2 + 9 * C * NCP * 2 + (sc + NCP) * 4
    bytes_tmp = (M_blk * sc * 4 * 3          # f32 x / logits / att
                 + M_blk * C * 4 * 4         # fused + softmax temporaries
                 + M_blk * 9 * C * 2         # bf16 patches
                 + M_blk * NCP * 4)          # f32 matmul accumulator
    est = 2 * (bytes_in + bytes_out + bytes_msk) + bytes_w + bytes_tmp
    return int(min(64 * 2**20, max(32 * 2**20, 2 * est)))


def init_params(key, S, C, num_classes):
    ks = jax.random.split(key, 4)
    scale = 0.1
    return {
        # wa[s]: transposed 1x1-conv weight, logits = y @ wa[s] + ba[s]
        "wa": scale * jax.random.normal(ks[0], (S, C, C), jnp.float32),
        "ba": scale * jax.random.normal(ks[1], (S, 1, C), jnp.float32),
        # wf[k] (k = kh*3+kw): transposed 3x3-conv weight for tap (kh, kw)
        "wf": scale * jax.random.normal(ks[2], (9, C, num_classes), jnp.float32),
        "bf": scale * jax.random.normal(ks[3], (num_classes,), jnp.float32),
    }


@jax.jit
def pxl_attn_forward(feats_nchw, params):
    """feats_nchw: (S, B, C, H, W) per-satellite backbone features (NCHW)."""
    S, B, C, H, W = feats_nchw.shape
    HW = H * W
    NC = params["wf"].shape[-1]
    NCP = pl.cdiv(NC, 128) * 128                 # lane-dense padded class dim

    block_B = _choose_block_b(B, HW)
    M_blk = block_B * HW
    n_steps = B // block_B

    # (S,B,C,H,W) -> (B,H,W,S,C) -> (B*HW, S*C); bf16 MXU operands
    # (accumulation stays f32 in-kernel; transpose+cast fuse into one XLA copy).
    # TODO(synk): at production sizes consider ingesting NCHW and relayouting
    # C->lanes inside the kernel to avoid this HBM round trip.
    x = jnp.transpose(feats_nchw, (1, 3, 4, 0, 2)).reshape(B * HW, S * C)
    x = x.astype(jnp.bfloat16)

    # block-diagonal 1x1-conv weight and concatenated bias
    wa_bd = jnp.zeros((S * C, S * C), jnp.float32)
    for s in range(S):
        wa_bd = wa_bd.at[s * C:(s + 1) * C, s * C:(s + 1) * C].set(params["wa"][s])
    wa_bd = wa_bd.astype(jnp.bfloat16)
    ba_cat = params["ba"][:, 0, :].reshape(1, S * C).astype(jnp.float32)

    # K-concatenated, lane-padded 3x3 weights + bias
    wf = params["wf"].reshape(9 * C, NC).astype(jnp.bfloat16)
    wf = jnp.zeros((9 * C, NCP), jnp.bfloat16).at[:, :NC].set(wf)
    bf = jnp.zeros((1, NCP), jnp.float32).at[0, :NC].set(params["bf"])

    masks = jnp.asarray(_tap_masks(block_B, H, W))       # (M_blk, 9) f32

    out = pl.pallas_call(
        functools.partial(pxl_attn_kernel, S=S, H=H, W=W, C=C),
        out_shape=jax.ShapeDtypeStruct((B * HW, NCP), jnp.bfloat16),
        grid=(n_steps,),
        in_specs=[
            pl.BlockSpec((M_blk, S * C), lambda b: (b, 0)),
            pl.BlockSpec((S * C, S * C), lambda b: (0, 0)),
            pl.BlockSpec((1, S * C), lambda b: (0, 0)),
            pl.BlockSpec((9 * C, NCP), lambda b: (0, 0)),
            pl.BlockSpec((1, NCP), lambda b: (0, 0)),
            pl.BlockSpec((M_blk, 9), lambda b: (0, 0)),
        ],
        out_specs=pl.BlockSpec((M_blk, NCP), lambda b: (b, 0)),
        compiler_params=pltpu.CompilerParams(
            dimension_semantics=("parallel",),           # batch blocks -> both TCs
            vmem_limit_bytes=_vmem_limit_bytes(M_blk, S, C, NCP)),
    )(x, wa_bd, ba_cat, wf, bf, masks)

    out = out[:, :NC].astype(jnp.float32).reshape(B, H, W, NC)
    return jnp.transpose(out, (0, 3, 1, 2))              # (B, NC, H, W)


def reference_forward(feats_nchw, params):
    """Pure-JAX f32 reference of the PyTorch forward (for a tolerance check)."""
    S, B, C, H, W = feats_nchw.shape
    NC = params["wf"].shape[-1]
    ys, atts = [], []
    for s in range(S):
        y = feats_nchw[s]                                            # (B,C,H,W)
        logits = jnp.einsum("bchw,cd->bdhw", y, params["wa"][s])
        logits = logits + params["ba"][s, 0].reshape(1, C, 1, 1)
        ys.append(y)
        atts.append(y * jax.nn.sigmoid(logits))
    Y = jnp.stack(ys, 0)
    A = jnp.stack(atts, 0)
    Wsm = jax.nn.softmax(A, axis=0)
    fused = jnp.sum(Y * Wsm, axis=0)                                 # (B,C,H,W)
    fp = jnp.pad(fused, ((0, 0), (0, 0), (1, 1), (1, 1)))
    out = jnp.zeros((B, NC, H, W), jnp.float32)
    for kh in range(3):
        for kw in range(3):
            out = out + jnp.einsum("bchw,cn->bnhw",
                                   fp[:, :, kh:kh + H, kw:kw + W],
                                   params["wf"][kh * 3 + kw])
    return out + params["bf"].reshape(1, NC, 1, 1)


if __name__ == "__main__":
    S = 2             # number of satellites
    B = 2             # batch
    C = 32            # CFG.out_conv[-1]
    H = W = 16        # spatial
    NUM_CLASSES = 4   # CFG.num_classes

    key = jax.random.PRNGKey(0)
    k_feat, k_param = jax.random.split(key)
    # Synthetic per-satellite backbone outputs (NCHW, stacked over satellites).
    feats = jax.random.normal(k_feat, (S, B, C, H, W), jnp.float32)
    params = init_params(k_param, S, C, NUM_CLASSES)

    y_pred = pxl_attn_forward(feats, params)
    jax.block_until_ready(y_pred)
    assert y_pred.shape == (B, NUM_CLASSES, H, W)

    # bf16 matmul operands / bf16 output slab vs f32 reference -> relaxed tol.
    y_ref = reference_forward(feats, params)
    max_err = float(jnp.max(jnp.abs(y_pred - y_ref)))
    assert max_err < 0.1, f"max abs err {max_err}"
    print("KERNEL_OK")
</pallas_src>

<mosaic_0001>
module attributes {stable_mosaic.version = 11 : i64} {
  func.func @pxl_attn_kernel(%arg0: i32, %arg1: memref<256x64xbf16, #tpu.memory_space<vmem>>, %arg2: memref<64x64xbf16, #tpu.memory_space<vmem>>, %arg3: memref<1x64xf32, #tpu.memory_space<vmem>>, %arg4: memref<288x128xbf16, #tpu.memory_space<vmem>>, %arg5: memref<1x128xf32, #tpu.memory_space<vmem>>, %arg6: memref<256x9xf32, #tpu.memory_space<vmem>>, %arg7: memref<256x128xbf16, #tpu.memory_space<vmem>>) attributes {dimension_semantics = [#tpu.dimension_semantics<parallel>], iteration_bounds = array<i64: 2>, scalar_prefetch = 0 : i64, scratch_operands = 0 : i64, tpu.core_type = #tpu.core_type<tc>, window_params = [{transform_indices = @transform_0, window_bounds = array<i64: 256, 64>}, {pipeline_mode = #tpu.pipeline_mode<synchronous>, transform_indices = @transform_1, window_bounds = array<i64: 64, 64>}, {pipeline_mode = #tpu.pipeline_mode<synchronous>, transform_indices = @transform_2, window_bounds = array<i64: 1, 64>}, {pipeline_mode = #tpu.pipeline_mode<synchronous>, transform_indices = @transform_3, window_bounds = array<i64: 288, 128>}, {pipeline_mode = #tpu.pipeline_mode<synchronous>, transform_indices = @transform_4, window_bounds = array<i64: 1, 128>}, {pipeline_mode = #tpu.pipeline_mode<synchronous>, transform_indices = @transform_5, window_bounds = array<i64: 256, 9>}, {transform_indices = @transform_6, window_bounds = array<i64: 256, 128>}]} {
    %c0 = arith.constant 0 : index
    %c0_0 = arith.constant 0 : index
    %0 = vector.load %arg1[%c0, %c0_0] : memref<256x64xbf16, #tpu.memory_space<vmem>>, vector<256x64xbf16>
    %1 = arith.extf %0 : vector<256x64xbf16> to vector<256x64xf32>
    %c0_1 = arith.constant 0 : index
    %c0_2 = arith.constant 0 : index
    %2 = vector.load %arg2[%c0_1, %c0_2] : memref<64x64xbf16, #tpu.memory_space<vmem>>, vector<64x64xbf16>
    %cst = arith.constant dense<0.000000e+00> : vector<256x64xf32>
    %3 = tpu.matmul %0, %2, %cst {dimension_numbers = #tpu.dot_dimension_numbers<[1], [0], [0], [1], [0, 0, 1, 1], [], []>} : vector<256x64xbf16>, vector<64x64xbf16>, vector<256x64xf32> -> vector<256x64xf32>
    %c0_3 = arith.constant 0 : index
    %c0_4 = arith.constant 0 : index
    %4 = vector.load %arg3[%c0_3, %c0_4] : memref<1x64xf32, #tpu.memory_space<vmem>>, vector<1x64xf32>
    %5 = vector.broadcast %4 : vector<1x64xf32> to vector<256x64xf32>
    %6 = arith.addf %3, %5 : vector<256x64xf32>
    %7 = arith.negf %6 : vector<256x64xf32>
    %8 = math.exp %7 : vector<256x64xf32>
    %cst_5 = arith.constant 1.000000e+00 : f32
    %9 = vector.broadcast %cst_5 : f32 to vector<256x64xf32>
    %10 = arith.addf %9, %8 : vector<256x64xf32>
    %11 = arith.divf %9, %10 : vector<256x64xf32>
    %12 = arith.mulf %1, %11 : vector<256x64xf32>
    %13 = vector.extract_strided_slice %12 {offsets = [0, 0], sizes = [256, 32], strides = [1, 1]} : vector<256x64xf32> to vector<256x32xf32>
    %14 = vector.extract_strided_slice %12 {offsets = [0, 32], sizes = [256, 32], strides = [1, 1]} : vector<256x64xf32> to vector<256x32xf32>
    %15 = arith.subf %13, %14 : vector<256x32xf32>
    %16 = arith.negf %15 : vector<256x32xf32>
    %17 = math.exp %16 : vector<256x32xf32>
    %cst_6 = arith.constant 1.000000e+00 : f32
    %18 = vector.broadcast %cst_6 : f32 to vector<256x32xf32>
    %19 = arith.addf %18, %17 : vector<256x32xf32>
    %20 = arith.divf %18, %19 : vector<256x32xf32>
    %21 = vector.extract_strided_slice %1 {offsets = [0, 0], sizes = [256, 32], strides = [1, 1]} : vector<256x64xf32> to vector<256x32xf32>
    %22 = vector.extract_strided_slice %1 {offsets = [0, 32], sizes = [256, 32], strides = [1, 1]} : vector<256x64xf32> to vector<256x32xf32>
    %23 = arith.subf %21, %22 : vector<256x32xf32>
    %24 = arith.mulf %23, %20 : vector<256x32xf32>
    %25 = arith.addf %22, %24 : vector<256x32xf32>
    %c0_7 = arith.constant 0 : index
    %c0_8 = arith.constant 0 : index
    %26 = vector.load %arg6[%c0_7, %c0_8] : memref<256x9xf32, #tpu.memory_space<vmem>>, vector<256x9xf32>
    %c17_i32 = arith.constant 17 : i32
    %27 = tpu.dynamic_rotate %25 by %c17_i32 dim 0 : vector<256x32xf32>, i32 -> vector<256x32xf32>
    %28 = vector.extract_strided_slice %26 {offsets = [0, 0], sizes = [256, 1], strides = [1, 1]} : vector<256x9xf32> to vector<256x1xf32>
    %29 = vector.broadcast %28 : vector<256x1xf32> to vector<256x32xf32>
    %30 = arith.mulf %27, %29 : vector<256x32xf32>
    %31 = arith.truncf %30 : vector<256x32xf32> to vector<256x32xbf16>
    %c16_i32 = arith.constant 16 : i32
    %32 = tpu.dynamic_rotate %25 by %c16_i32 dim 0 : vector<256x32xf32>, i32 -> vector<256x32xf32>
    %33 = vector.extract_strided_slice %26 {offsets = [0, 1], sizes = [256, 1], strides = [1, 1]} : vector<256x9xf32> to vector<256x1xf32>
    %34 = vector.broadcast %33 : vector<256x1xf32> to vector<256x32xf32>
    %35 = arith.mulf %32, %34 : vector<256x32xf32>
    %36 = arith.truncf %35 : vector<256x32xf32> to vector<256x32xbf16>
    %c15_i32 = arith.constant 15 : i32
    %37 = tpu.dynamic_rotate %25 by %c15_i32 dim 0 : vector<256x32xf32>, i32 -> vector<256x32xf32>
    %38 = vector.extract_strided_slice %26 {offsets = [0, 2], sizes = [256, 1], strides = [1, 1]} : vector<256x9xf32> to vector<256x1xf32>
    %39 = vector.broadcast %38 : vector<256x1xf32> to vector<256x32xf32>
    %40 = arith.mulf %37, %39 : vector<256x32xf32>
    %41 = arith.truncf %40 : vector<256x32xf32> to vector<256x32xbf16>
    %c1_i32 = arith.constant 1 : i32
    %42 = tpu.dynamic_rotate %25 by %c1_i32 dim 0 : vector<256x32xf32>, i32 -> vector<256x32xf32>
    %43 = vector.extract_strided_slice %26 {offsets = [0, 3], sizes = [256, 1], strides = [1, 1]} : vector<256x9xf32> to vector<256x1xf32>
    %44 = vector.broadcast %43 : vector<256x1xf32> to vector<256x32xf32>
    %45 = arith.mulf %42, %44 : vector<256x32xf32>
    %46 = arith.truncf %45 : vector<256x32xf32> to vector<256x32xbf16>
    %47 = arith.truncf %25 : vector<256x32xf32> to vector<256x32xbf16>
    %c255_i32 = arith.constant 255 : i32
    %48 = tpu.dynamic_rotate %25 by %c255_i32 dim 0 : vector<256x32xf32>, i32 -> vector<256x32xf32>
    %49 = vector.extract_strided_slice %26 {offsets = [0, 5], sizes = [256, 1], strides = [1, 1]} : vector<256x9xf32> to vector<256x1xf32>
    %50 = vector.broadcast %49 : vector<256x1xf32> to vector<256x32xf32>
    %51 = arith.mulf %48, %50 : vector<256x32xf32>
    %52 = arith.truncf %51 : vector<256x32xf32> to vector<256x32xbf16>
    %c241_i32 = arith.constant 241 : i32
    %53 = tpu.dynamic_rotate %25 by %c241_i32 dim 0 : vector<256x32xf32>, i32 -> vector<256x32xf32>
    %54 = vector.extract_strided_slice %26 {offsets = [0, 6], sizes = [256, 1], strides = [1, 1]} : vector<256x9xf32> to vector<256x1xf32>
    %55 = vector.broadcast %54 : vector<256x1xf32> to vector<256x32xf32>
    %56 = arith.mulf %53, %55 : vector<256x32xf32>
    %57 = arith.truncf %56 : vector<256x32xf32> to vector<256x32xbf16>
    %c240_i32 = arith.constant 240 : i32
    %58 = tpu.dynamic_rotate %25 by %c240_i32 dim 0 : vector<256x32xf32>, i32 -> vector<256x32xf32>
    %59 = vector.extract_strided_slice %26 {offsets = [0, 7], sizes = [256, 1], strides = [1, 1]} : vector<256x9xf32> to vector<256x1xf32>
    %60 = vector.broadcast %59 : vector<256x1xf32> to vector<256x32xf32>
    %61 = arith.mulf %58, %60 : vector<256x32xf32>
    %62 = arith.truncf %61 : vector<256x32xf32> to vector<256x32xbf16>
    %c239_i32 = arith.constant 239 : i32
    %63 = tpu.dynamic_rotate %25 by %c239_i32 dim 0 : vector<256x32xf32>, i32 -> vector<256x32xf32>
    %64 = vector.extract_strided_slice %26 {offsets = [0, 8], sizes = [256, 1], strides = [1, 1]} : vector<256x9xf32> to vector<256x1xf32>
    %65 = vector.broadcast %64 : vector<256x1xf32> to vector<256x32xf32>
    %66 = arith.mulf %63, %65 : vector<256x32xf32>
    %67 = arith.truncf %66 : vector<256x32xf32> to vector<256x32xbf16>
    %68 = tpu.concatenate %31, %36, %41, %46, %47, %52, %57, %62, %67 in 1 : vector<256x32xbf16>, vector<256x32xbf16>, vector<256x32xbf16>, vector<256x32xbf16>, vector<256x32xbf16>, vector<256x32xbf16>, vector<256x32xbf16>, vector<256x32xbf16>, vector<256x32xbf16> -> vector<256x288xbf16>
    %c0_9 = arith.constant 0 : index
    %c0_10 = arith.constant 0 : index
    %69 = vector.load %arg4[%c0_9, %c0_10] : memref<288x128xbf16, #tpu.memory_space<vmem>>, vector<288x128xbf16>
    %cst_11 = arith.constant dense<0.000000e+00> : vector<256x128xf32>
    %70 = tpu.matmul %68, %69, %cst_11 {dimension_numbers = #tpu.dot_dimension_numbers<[1], [0], [0], [1], [0, 0, 1, 1], [], []>} : vector<256x288xbf16>, vector<288x128xbf16>, vector<256x128xf32> -> vector<256x128xf32>
    %c0_12 = arith.constant 0 : index
    %c0_13 = arith.constant 0 : index
    %71 = vector.load %arg5[%c0_12, %c0_13] : memref<1x128xf32, #tpu.memory_space<vmem>>, vector<1x128xf32>
    %72 = vector.broadcast %71 : vector<1x128xf32> to vector<256x128xf32>
    %73 = arith.addf %70, %72 : vector<256x128xf32>
    %74 = arith.truncf %73 : vector<256x128xf32> to vector<256x128xbf16>
    %c0_14 = arith.constant 0 : index
    %c0_15 = arith.constant 0 : index
    %75 = vector.load %arg7[%c0_14, %c0_15] : memref<256x128xbf16, #tpu.memory_space<vmem>>, vector<256x128xbf16>
    tpu.vector_store %arg7[%c0_14, %c0_15], %74 {strides = array<i32>} : memref<256x128xbf16, #tpu.memory_space<vmem>>, vector<256x128xbf16>,
    return
  }
  func.func @transform_0(%arg0: i32) -> (i32, i32) {
    %c0_i32 = arith.constant 0 : i32
    %c0_i32_0 = arith.constant 0 : i32
    return %arg0, %c0_i32 : i32, i32
  }
  func.func @transform_1(%arg0: i32) -> (i32, i32) {
    %c0_i32 = arith.constant 0 : i32
    %c0_i32_0 = arith.constant 0 : i32
    %c0_i32_1 = arith.constant 0 : i32
    return %c0_i32, %c0_i32_0 : i32, i32
  }
  func.func @transform_2(%arg0: i32) -> (i32, i32) {
    %c0_i32 = arith.constant 0 : i32
    %c0_i32_0 = arith.constant 0 : i32
    %c0_i32_1 = arith.constant 0 : i32
    return %c0_i32, %c0_i32_0 : i32, i32
  }
  func.func @transform_3(%arg0: i32) -> (i32, i32) {
    %c0_i32 = arith.constant 0 : i32
    %c0_i32_0 = arith.constant 0 : i32
    %c0_i32_1 = arith.constant 0 : i32
    return %c0_i32, %c0_i32_0 : i32, i32
  }
  func.func @transform_4(%arg0: i32) -> (i32, i32) {
    %c0_i32 = arith.constant 0 : i32
    %c0_i32_0 = arith.constant 0 : i32
    %c0_i32_1 = arith.constant 0 : i32
    return %c0_i32, %c0_i32_0 : i32, i32
  }
  func.func @transform_5(%arg0: i32) -> (i32, i32) {
    %c0_i32 = arith.constant 0 : i32
    %c0_i32_0 = arith.constant 0 : i32
    %c0_i32_1 = arith.constant 0 : i32
    return %c0_i32, %c0_i32_0 : i32, i32
  }
  func.func @transform_6(%arg0: i32) -> (i32, i32) {
    %c0_i32 = arith.constant 0 : i32
    %c0_i32_0 = arith.constant 0 : i32
    return %arg0, %c0_i32 : i32, i32
  }
}

</mosaic_0001>

<llo_original>
// kernel: squeeze.5
$region0: #{squeeze.5}
  %s0 = inlined_call_operand.vmem [shape: f32[2,32], index: 0, kind: input, shape index: {}]
  %s1 = inlined_call_operand.vmem [shape: f32[1,64], index: 1, kind: output, shape index: {}]
  $region1: #{squeeze.5} parent=0
    #allocation0 [shape = 'u8[4096]{0}', space=vmem, size = 0x1000, scoped, tag = 'scoped mem for output reshape']
    #allocation1 [shape = 'u8[4096]{0}', space=vmem, size = 0x1000, scoped, tag = 'scoped mem for input reshape']
    %s3 = sshllo.u32 0, 2
    %v4 = vld [vmem:[%s0] sm:%s3]
    %5 = vst [vmem:[#allocation1] sm:%s3] %v4
    %v6 = vld [vmem:[#allocation1] sm:$0x1]
    %vm7 = vcmask 261120
    %8 = vst.msk [vmem:[#allocation0] sm:$0x1] %vm7, %v6
    %s9 = scalar_lea.vmem [#allocation1], 1
    %v10 = vld [vmem:[%s9] sm:$0x1]
    %11 = vrot.lane.b32.xlu0 %v10, 32
    %v12 = vpop.permute.xlu0 %11
    %vm13 = vcmask 523520
    %14 = vst.msk [vmem:[#allocation0] sm:$0x1] %vm13, %v12
    %s16 = sshllo.u32 0, 1
    %v18 = vld [vmem:[#allocation0] sm:%s16]
    %s19 = sshllo.u32 0, 1
    %20 = vst [vmem:[%s1] sm:%s19] %v18

// kernel: pxl_attn_forward.1
$region0: #{pxl_attn_forward.1}
  #allocation0 [shape = 'u32[]', space=smem, size = 0x4, offset = 0x4, fixed_abs, tag = 'smem constant byte address 0x4 - core index']
  #allocation1 [shape = 'u32[144,128]{1,0:T(1,128)}', space=vmem, size = 0x12000, scoped, tag = 'internal scratch']
  %s0 = inlined_call_operand.vmem [shape: bf16[512,64], index: 0, kind: input, shape index: {}]
  %s1 = inlined_call_operand.vmem [shape: bf16[64,64], index: 1, kind: input, shape index: {}]
  %s2 = inlined_call_operand.vmem [shape: f32[1,64], index: 2, kind: input, shape index: {}]
  %s3 = inlined_call_operand.vmem [shape: bf16[288,128], index: 3, kind: input, shape index: {}]
  %s4 = inlined_call_operand.vmem [shape: f32[1,128], index: 4, kind: input, shape index: {}]
  %s5 = inlined_call_operand.vmem [shape: f32[256,9], index: 5, kind: input, shape index: {}]
  %s6 = inlined_call_operand.vmem [shape: bf16[512,128], index: 6, kind: output, shape index: {}]
  %s7 = sld [smem:[#allocation0]]
  $region57: #{pxl_attn_forward.1} parent=0
    _
  %s9 = ssub.s32 1, %s7
  %s10 = scalar_select 0, %s9, %s7
  loop: start=0, step=1, limit=4
  $region2: #{pxl_attn_forward.1} parent=0 // loop_pre_header
    _
  $region3: #{pxl_attn_forward.1} parent=0 // loop_header
    %s12 = sphi 0, %s16
    %p13 = scmp.ge.s32.totalorder %s12, 4
    %s22 = sphi 0, %s24
    %s25 = sphi 0, %s22
    %s26 = sphi 0, %s25
    %s42 = sphi 0, %s26
    %s46 = sphi 0, %s46
    %s48 = sphi 0, %s46
    %s49 = sphi 0, %s48
    %s63 = sphi 0, %s49
    %s67 = sphi 0, %s67
    %s69 = sphi 0, %s67
    %s70 = sphi 0, %s69
    %s84 = sphi 0, %s70
    %s88 = sphi 0, %s88
    %s90 = sphi 0, %s88
    %s91 = sphi 0, %s90
    %s105 = sphi 0, %s91
    %s109 = sphi 0, %s109
    %s111 = sphi 0, %s109
    %s112 = sphi 0, %s111
    %s126 = sphi 0, %s112
    %s130 = sphi 0, %s130
    %s132 = sphi 0, %s130
    %s133 = sphi 0, %s132
    %s147 = sphi 0, %s133
    %s153 = sphi 0, %s155
    %s156 = sphi 0, %s153
    %s157 = sphi 0, %s156
    %s173 = sphi 0, %s157
  $region4: #{pxl_attn_forward.1} parent=0 // loop_header_branch
    %15 = sbr.rel (%p13) target = $region8
  $region5: #{pxl_attn_forward.1} parent=0 // loop_body
    %s17 = ssub.s32 %s12, 1
    %s18 = ssub.s32 %s12, 2
    %s19 = sadd.s32 %s12, 1
    %s20 = ssub.s32 %s12, %s19
    %p21 = scmp.eq.s32.totalorder %s20, 0
    %s23 = sadd.s32 %s22, 1
    %s24 = scalar_select %p21, %s22, %s23
    %p27 = pneg %p21
    %p28 = scmp.eq.s32.totalorder %s12, 1
    %p29 = por %p27, %p28
    %p30 = scmp.ne.s32.totalorder %s22, %s25
    %p31 = scmp.eq.s32.totalorder %s12, 0
    %p32 = por %p30, %p31
    %p33 = scmp.ne.s32.totalorder %s22, %s25
    %p34 = scmp.eq.s32.totalorder %s17, 1
    %p35 = por %p33, %p34
    %p36 = scmp.ne.s32.totalorder %s25, %s26
    %p37 = scmp.eq.s32.totalorder %s17, 0
    %p38 = por %p36, %p37
    %p39 = scmp.ne.s32.totalorder %s25, %s26
    %p40 = scmp.eq.s32.totalorder %s18, 1
    %p41 = por %p39, %p40
    %p43 = scmp.ne.s32.totalorder %s26, %s42
    %p44 = scmp.eq.s32.totalorder %s18, 0
    %p45 = por %p43, %p44
    %s47 = sadd.s32 %s46, 1
    %p50 = scmp.eq.s32.totalorder %s12, 1
    %p51 = scmp.ne.s32.totalorder %s46, %s48
    %p52 = scmp.eq.s32.totalorder %s12, 0
    %p53 = por %p51, %p52
    %p54 = scmp.ne.s32.totalorder %s46, %s48
    %p55 = scmp.eq.s32.totalorder %s17, 1
    %p56 = por %p54, %p55
    %p57 = scmp.ne.s32.totalorder %s48, %s49
    %p58 = scmp.eq.s32.totalorder %s17, 0
    %p59 = por %p57, %p58
    %p60 = scmp.ne.s32.totalorder %s48, %s49
    %p61 = scmp.eq.s32.totalorder %s18, 1
    %p62 = por %p60, %p61
    %p64 = scmp.ne.s32.totalorder %s49, %s63
    %p65 = scmp.eq.s32.totalorder %s18, 0
    %p66 = por %p64, %p65
    %s68 = sadd.s32 %s67, 1
    %p71 = scmp.eq.s32.totalorder %s12, 1
    %p72 = scmp.ne.s32.totalorder %s67, %s69
    %p73 = scmp.eq.s32.totalorder %s12, 0
    %p74 = por %p72, %p73
    %p75 = scmp.ne.s32.totalorder %s67, %s69
    %p76 = scmp.eq.s32.totalorder %s17, 1
    %p77 = por %p75, %p76
    %p78 = scmp.ne.s32.totalorder %s69, %s70
    %p79 = scmp.eq.s32.totalorder %s17, 0
    %p80 = por %p78, %p79
    %p81 = scmp.ne.s32.totalorder %s69, %s70
    %p82 = scmp.eq.s32.totalorder %s18, 1
    %p83 = por %p81, %p82
    %p85 = scmp.ne.s32.totalorder %s70, %s84
    %p86 = scmp.eq.s32.totalorder %s18, 0
    %p87 = por %p85, %p86
    %s89 = sadd.s32 %s88, 1
    %p92 = scmp.eq.s32.totalorder %s12, 1
    %p93 = scmp.ne.s32.totalorder %s88, %s90
    %p94 = scmp.eq.s32.totalorder %s12, 0
    %p95 = por %p93, %p94
    %p96 = scmp.ne.s32.totalorder %s88, %s90
    %p97 = scmp.eq.s32.totalorder %s17, 1
    %p98 = por %p96, %p97
    %p99 = scmp.ne.s32.totalorder %s90, %s91
    %p100 = scmp.eq.s32.totalorder %s17, 0
    %p101 = por %p99, %p100
    %p102 = scmp.ne.s32.totalorder %s90, %s91
    %p103 = scmp.eq.s32.totalorder %s18, 1
    %p104 = por %p102, %p103
    %p106 = scmp.ne.s32.totalorder %s91, %s105
    %p107 = scmp.eq.s32.totalorder %s18, 0
    %p108 = por %p106, %p107
    %s110 = sadd.s32 %s109, 1
    %p113 = scmp.eq.s32.totalorder %s12, 1
    %p114 = scmp.ne.s32.totalorder %s109, %s111
    %p115 = scmp.eq.s32.totalorder %s12, 0
    %p116 = por %p114, %p115
    %p117 = scmp.ne.s32.totalorder %s109, %s111
    %p118 = scmp.eq.s32.totalorder %s17, 1
    %p119 = por %p117, %p118
    %p120 = scmp.ne.s32.totalorder %s111, %s112
    %p121 = scmp.eq.s32.totalorder %s17, 0
    %p122 = por %p120, %p121
    %p123 = scmp.ne.s32.totalorder %s111, %s112
    %p124 = scmp.eq.s32.totalorder %s18, 1
    %p125 = por %p123, %p124
    %p127 = scmp.ne.s32.totalorder %s112, %s126
    %p128 = scmp.eq.s32.totalorder %s18, 0
    %p129 = por %p127, %p128
    %s131 = sadd.s32 %s130, 1
    %p134 = scmp.eq.s32.totalorder %s12, 1
    %p135 = scmp.ne.s32.totalorder %s130, %s132
    %p136 = scmp.eq.s32.totalorder %s12, 0
    %p137 = por %p135, %p136
    %p138 = scmp.ne.s32.totalorder %s130, %s132
    %p139 = scmp.eq.s32.totalorder %s17, 1
    %p140 = por %p138, %p139
    %p141 = scmp.ne.s32.totalorder %s132, %s133
    %p142 = scmp.eq.s32.totalorder %s17, 0
    %p143 = por %p141, %p142
    %p144 = scmp.ne.s32.totalorder %s132, %s133
    %p145 = scmp.eq.s32.totalorder %s18, 1
    %p146 = por %p144, %p145
    %p148 = scmp.ne.s32.totalorder %s133, %s147
    %p149 = scmp.eq.s32.totalorder %s18, 0
    %p150 = por %p148, %p149
    %s151 = ssub.s32 %s12, %s19
    %p152 = scmp.eq.s32.totalorder %s151, 0
    %s154 = sadd.s32 %s153, 1
    %s155 = scalar_select %p152, %s153, %s154
    %p158 = pneg %p152
    %p159 = scmp.eq.s32.totalorder %s12, 1
    %p160 = por %p158, %p159
    %p161 = scmp.ne.s32.totalorder %s153, %s156
    %p162 = scmp.eq.s32.totalorder %s12, 0
    %p163 = por %p161, %p162
    %p164 = scmp.ne.s32.totalorder %s153, %s156
    %p165 = scmp.eq.s32.totalorder %s17, 1
    %p166 = por %p164, %p165
    %p167 = scmp.ne.s32.totalorder %s156, %s157
    %p168 = scmp.eq.s32.totalorder %s17, 0
    %p169 = por %p167, %p168
    %p170 = scmp.ne.s32.totalorder %s156, %s157
    %p171 = scmp.eq.s32.totalorder %s18, 1
    %p172 = por %p170, %p171
    %p174 = scmp.ne.s32.totalorder %s157, %s173
    %p175 = scmp.eq.s32.totalorder %s18, 0
    %p176 = por %p174, %p175
    %p177 = scmp.le.s32.totalorder 1, %s12
    %p178 = scmp.lt.s32.totalorder %s12, 3
    %p179 = pnand %p177, %p178
    %p180 = pneg %p179
    // Predicated region
    $region9: #{pxl_attn_forward.1} parent=5 // pred_check
      _
    $region10: #{pxl_attn_forward.1} parent=5 // pred_check_branch
      %182 = sbr.rel (%p179) target = $region12
    $region11: #{pxl_attn_forward.1} parent=5 // pred_region
      %s183 = ssub.s32 %s12, 1
      // Predicated region
      $region13: #{pxl_attn_forward.1} parent=11 // pred_check
        %p184 = pneg %p59
      $region14: #{pxl_attn_forward.1} parent=11 // pred_check_branch
        %186 = sbr.rel (%p184) target = $region16
      $region15: #{pxl_attn_forward.1} parent=11 // pred_region
        _
      $region16: #{pxl_attn_forward.1} parent=11 // pred_fallthru
        _
      // Predicated region
      $region17: #{pxl_attn_forward.1} parent=11 // pred_check
        %p187 = pneg %p80
      $region18: #{pxl_attn_forward.1} parent=11 // pred_check_branch
        %189 = sbr.rel (%p187) target = $region20
      $region19: #{pxl_attn_forward.1} parent=11 // pred_region
        _
      $region20: #{pxl_attn_forward.1} parent=11 // pred_fallthru
        _
      // Predicated region
      $region21: #{pxl_attn_forward.1} parent=11 // pred_check
        %p190 = pneg %p101
      $region22: #{pxl_attn_forward.1} parent=11 // pred_check_branch
        %192 = sbr.rel (%p190) target = $region24
      $region23: #{pxl_attn_forward.1} parent=11 // pred_region
        _
      $region24: #{pxl_attn_forward.1} parent=11 // pred_fallthru
        _
      // Predicated region
      $region25: #{pxl_attn_forward.1} parent=11 // pred_check
        %p193 = pneg %p122
      $region26: #{pxl_attn_forward.1} parent=11 // pred_check_branch
        %195 = sbr.rel (%p193) target = $region28
      $region27: #{pxl_attn_forward.1} parent=11 // pred_region
        _
      $region28: #{pxl_attn_forward.1} parent=11 // pred_fallthru
        _
      // Predicated region
      $region29: #{pxl_attn_forward.1} parent=11 // pred_check
        %p196 = pneg %p143
      $region30: #{pxl_attn_forward.1} parent=11 // pred_check_branch
        %198 = sbr.rel (%p196) target = $region32
      $region31: #{pxl_attn_forward.1} parent=11 // pred_region
        _
      $region32: #{pxl_attn_forward.1} parent=11 // pred_fallthru
        _
    $region12: #{pxl_attn_forward.1} parent=5 // pred_fallthru
      _
    %p199 = scmp.lt.s32.totalorder %s12, 2
    // Predicated region
    $region33: #{pxl_attn_forward.1} parent=5 // pred_check
      %p200 = pneg %p199
    $region34: #{pxl_attn_forward.1} parent=5 // pred_check_branch
      %202 = sbr.rel (%p200) target = $region36
    $region35: #{pxl_attn_forward.1} parent=5 // pred_region
      // Predicated region
      $region37: #{pxl_attn_forward.1} parent=35 // pred_check
        %p203 = pneg %p32
      $region38: #{pxl_attn_forward.1} parent=35 // pred_check_branch
        %205 = sbr.rel (%p203) target = $region40
      $region39: #{pxl_attn_forward.1} parent=35 // pred_region
        %s206 = smul.u32 32, %s12
        %p207 = scmp.lt.s32.totalorder %s206, 63
        %s208 = scalar_select %p207, %s206, 63
        %s209 = smul.addr %s208, 4
        %s210 = scalar_lea.vmem %s0, %s209
        %s211 = smul.u32 32, %s12
      $region40: #{pxl_attn_forward.1} parent=35 // pred_fallthru
        _
    $region36: #{pxl_attn_forward.1} parent=5 // pred_fallthru
      _
    %p212 = scmp.le.s32.totalorder 1, %s12
    %p213 = scmp.lt.s32.totalorder %s12, 3
    %p214 = pnand %p212, %p213
    %p215 = pneg %p214
    // Predicated region
    $region41: #{pxl_attn_forward.1} parent=5 // pred_check
      _
    $region42: #{pxl_attn_forward.1} parent=5 // pred_check_branch
      %217 = sbr.rel (%p214) target = $region44
    $region43: #{pxl_attn_forward.1} parent=5 // pred_region
      %s218 = ssub.s32 %s12, 1
      %s219 = smul.u32 32, %s17
      %p220 = scmp.lt.s32.totalorder %s219, 63
      %s221 = scalar_select %p220, %s219, 63
      %s222 = smul.addr %s221, 4
      %s223 = scalar_lea.vmem %s0, %s222
      %p224 = pneg %p38
      %p225 = pneg %p35
      %p226 = pneg %p59
      %p227 = pneg %p56
      %p228 = pneg %p80
      %p229 = pneg %p77
      %p230 = pneg %p101
      %p231 = pneg %p98
      %p232 = pneg %p122
      %p233 = pneg %p119
      %p234 = pneg %p143
      %p235 = pneg %p140
      %p236 = pneg %p169
      %p237 = pneg %p166
      %s238 = smul.u32 32, %s17
      %p239 = scmp.lt.s32.totalorder %s238, 63
      %s240 = scalar_select %p239, %s238, 63
      %s241 = smul.addr %s240, 4
      %s242 = scalar_lea.vmem %s6, %s241
      %s243 = smul.u32 32, %s17
      %p244 = scmp.lt.s32.totalorder %s243, 63
      %s245 = scalar_select %p244, %s243, 63
      %s246 = smul.addr %s245, 4
      %s247 = scalar_lea.vmem %s0, %s246
      %s248 = smul.u32 32, %s17
      %s249 = smul.u32 32, %s17
      %p250 = scmp.lt.s32.totalorder %s249, 63
      %s251 = scalar_select %p250, %s249, 63
      %s252 = smul.addr %s251, 4
      %s253 = scalar_lea.vmem %s6, %s252
      %s254 = smul.u32 32, %s17
      %v256 = vld [vmem:[%s247] sm:$0xf]
      %v257 = vld [vmem:[%s247 + $0x4] sm:$0xf]
      %v258 = vld [vmem:[%s247 + $0x8] sm:$0xf]
      %v259 = vld [vmem:[%s247 + $0xc] sm:$0xf]
      %v260 = vld [vmem:[%s247 + $0x10] sm:$0xf]
      %v261 = vld [vmem:[%s247 + $0x14] sm:$0xf]
      %v262 = vld [vmem:[%s247 + $0x18] sm:$0xf]
      %v263 = vld [vmem:[%s247 + $0x1c] sm:$0xf]
      %v264 = vld [vmem:[%s247 + $0x20] sm:$0xf]
      %v265 = vld [vmem:[%s247 + $0x24] sm:$0xf]
      %v266 = vld [vmem:[%s247 + $0x28] sm:$0xf]
      %v267 = vld [vmem:[%s247 + $0x2c] sm:$0xf]
      %v268 = vld [vmem:[%s247 + $0x30] sm:$0xf]
      %v269 = vld [vmem:[%s247 + $0x34] sm:$0xf]
      %v270 = vld [vmem:[%s247 + $0x38] sm:$0xf]
      %v271 = vld [vmem:[%s247 + $0x3c] sm:$0xf]
      %v272 = vld [vmem:[%s247 + $0x40] sm:$0xf]
      %v273 = vld [vmem:[%s247 + $0x44] sm:$0xf]
      %v274 = vld [vmem:[%s247 + $0x48] sm:$0xf]
      %v275 = vld [vmem:[%s247 + $0x4c] sm:$0xf]
      %v276 = vld [vmem:[%s247 + $0x50] sm:$0xf]
      %v277 = vld [vmem:[%s247 + $0x54] sm:$0xf]
      %v278 = vld [vmem:[%s247 + $0x58] sm:$0xf]
      %v279 = vld [vmem:[%s247 + $0x5c] sm:$0xf]
      %v280 = vld [vmem:[%s247 + $0x60] sm:$0xf]
      %v281 = vld [vmem:[%s247 + $0x64] sm:$0xf]
      %v282 = vld [vmem:[%s247 + $0x68] sm:$0xf]
      %v283 = vld [vmem:[%s247 + $0x6c] sm:$0xf]
      %v284 = vld [vmem:[%s247 + $0x70] sm:$0xf]
      %v285 = vld [vmem:[%s247 + $0x74] sm:$0xf]
      %v286 = vld [vmem:[%s247 + $0x78] sm:$0xf]
      %v287 = vld [vmem:[%s247 + $0x7c] sm:$0xf]
      %v288 = vunpack.c.l.bf16 %v256
      %v289 = vunpack.c.l.bf16 %v257
      %v290 = vunpack.c.l.bf16 %v258
      %v291 = vunpack.c.l.bf16 %v259
      %v292 = vunpack.c.l.bf16 %v260
      %v293 = vunpack.c.l.bf16 %v261
      %v294 = vunpack.c.l.bf16 %v262
      %v295 = vunpack.c.l.bf16 %v263
      %v296 = vunpack.c.l.bf16 %v264
      %v297 = vunpack.c.l.bf16 %v265
      %v298 = vunpack.c.l.bf16 %v266
      %v299 = vunpack.c.l.bf16 %v267
      %v300 = vunpack.c.l.bf16 %v268
      %v301 = vunpack.c.l.bf16 %v269
      %v302 = vunpack.c.l.bf16 %v270
      %v303 = vunpack.c.l.bf16 %v271
      %v304 = vunpack.c.l.bf16 %v272
      %v305 = vunpack.c.l.bf16 %v273
      %v306 = vunpack.c.l.bf16 %v274
      %v307 = vunpack.c.l.bf16 %v275
      %v308 = vunpack.c.l.bf16 %v276
      %v309 = vunpack.c.l.bf16 %v277
      %v310 = vunpack.c.l.bf16 %v278
      %v311 = vunpack.c.l.bf16 %v279
      %v312 = vunpack.c.l.bf16 %v280
      %v313 = vunpack.c.l.bf16 %v281
      %v314 = vunpack.c.l.bf16 %v282
      %v315 = vunpack.c.l.bf16 %v283
      %v316 = vunpack.c.l.bf16 %v284
      %v317 = vunpack.c.l.bf16 %v285
      %v318 = vunpack.c.l.bf16 %v286
      %v319 = vunpack.c.l.bf16 %v287
      %v320 = vld [vmem:[%s1] sm:$0xf]
      %v321 = vld [vmem:[%s1 + $0x4] sm:$0xf]
      %v322 = vld [vmem:[%s1 + $0x8] sm:$0xf]
      %v323 = vld [vmem:[%s1 + $0xc] sm:$0xf]
      %v324 = vld [vmem:[%s1 + $0x10] sm:$0xf]
      %v325 = vld [vmem:[%s1 + $0x14] sm:$0xf]
      %v326 = vld [vmem:[%s1 + $0x18] sm:$0xf]
      %v327 = vld [vmem:[%s1 + $0x1c] sm:$0xf]
      %v328 = vld [vmem:[%s2] sm:$0x1]
      %v330 = vlaneseq
      %v331 = vshrl.u32 %v330, 7
      %v332 = vsub.s32 0, %v331
      %v333 = vrot.slane %v328, %v332
      %v367 = vunpack.c.l.b16 %v256
      %v368 = vunpack.c.l.b16 %v257
      %v369 = vunpack.c.l.b16 %v258
      %v370 = vunpack.c.l.b16 %v259
      %v371 = vunpack.c.l.b16 %v260
      %v372 = vunpack.c.l.b16 %v261
      %v373 = vunpack.c.l.b16 %v262
      %v374 = vunpack.c.l.b16 %v263
      %v375 = vunpack.c.l.b16 %v264
      %v376 = vunpack.c.l.b16 %v265
      %v377 = vunpack.c.l.b16 %v266
      %v378 = vunpack.c.l.b16 %v267
      %v379 = vunpack.c.l.b16 %v268
      %v380 = vunpack.c.l.b16 %v269
      %v381 = vunpack.c.l.b16 %v270
      %v382 = vunpack.c.l.b16 %v271
      %v383 = vunpack.c.l.b16 %v272
      %v384 = vunpack.c.l.b16 %v273
      %v385 = vunpack.c.l.b16 %v274
      %v386 = vunpack.c.l.b16 %v275
      %v387 = vunpack.c.l.b16 %v276
      %v388 = vunpack.c.l.b16 %v277
      %v389 = vunpack.c.l.b16 %v278
      %v390 = vunpack.c.l.b16 %v279
      %v391 = vunpack.c.l.b16 %v280
      %v392 = vunpack.c.l.b16 %v281
      %v393 = vunpack.c.l.b16 %v282
      %v394 = vunpack.c.l.b16 %v283
      %v395 = vunpack.c.l.b16 %v284
      %v396 = vunpack.c.l.b16 %v285
      %v397 = vunpack.c.l.b16 %v286
      %v398 = vunpack.c.l.b16 %v287
      %v399 = vpack.c.b16 %v368, %v367
      %v400 = vpack.c.b16 %v370, %v369
      %v401 = vpack.c.b16 %v372, %v371
      %v402 = vpack.c.b16 %v374, %v373
      %v403 = vpack.c.b16 %v376, %v375
      %v404 = vpack.c.b16 %v378, %v377
      %v405 = vpack.c.b16 %v380, %v379
      %v406 = vpack.c.b16 %v382, %v381
      %v407 = vpack.c.b16 %v384, %v383
      %v408 = vpack.c.b16 %v386, %v385
      %v409 = vpack.c.b16 %v388, %v387
      %v410 = vpack.c.b16 %v390, %v389
      %v411 = vpack.c.b16 %v392, %v391
      %v412 = vpack.c.b16 %v394, %v393
      %v413 = vpack.c.b16 %v396, %v395
      %v414 = vpack.c.b16 %v398, %v397
      %v423 = vunpack.c.l.b16 %v320
      %v424 = vunpack.c.l.b16 %v321
      %v425 = vunpack.c.l.b16 %v322
      %v426 = vunpack.c.l.b16 %v323
      %v427 = vunpack.c.l.b16 %v324
      %v428 = vunpack.c.l.b16 %v325
      %v429 = vunpack.c.l.b16 %v326
      %v430 = vunpack.c.l.b16 %v327
      %v431 = vpack.c.b16 %v424, %v423
      %v432 = vpack.c.b16 %v426, %v425
      %v433 = vpack.c.b16 %v428, %v427
      %v434 = vpack.c.b16 %v430, %v429
      %vm439 = vcmask 523264
      %v441 = vsel %vm439, %v399, 0
      %v444 = vsel %vm439, %v400, 0
      %v447 = vsel %vm439, %v401, 0
      %v450 = vsel %vm439, %v402, 0
      %v453 = vsel %vm439, %v403, 0
      %v456 = vsel %vm439, %v404, 0
      %v459 = vsel %vm439, %v405, 0
      %v462 = vsel %vm439, %v406, 0
      %v465 = vsel %vm439, %v407, 0
      %v468 = vsel %vm439, %v408, 0
      %v471 = vsel %vm439, %v409, 0
      %v474 = vsel %vm439, %v410, 0
      %v477 = vsel %vm439, %v411, 0
      %v480 = vsel %vm439, %v412, 0
      %v483 = vsel %vm439, %v413, 0
      %v486 = vsel %vm439, %v414, 0
      %488 = vmatprep.subr.bf16.mxu0 0
      %489 = vmatpush1.bf16.msra.mxu0 %v431
      %490 = vmatprep.subr.bf16.mxu0 0
      %491 = vmatpush1.bf16.msra.mxu0 %v432
      %492 = vmatprep.subr.bf16.mxu0 0
      %493 = vmatpush1.bf16.msra.mxu0 %v433
      %494 = vmatprep.subr.bf16.mxu0 0
      %495 = vmatpush1.bf16.msra.mxu0 %v434
      %496 = vmatprep.subr.bf16.mxu0 0
      %497 = vmatpush1.bf16.msra.mxu0 0
      %498 = vmatprep.subr.bf16.mxu0 0
      %499 = vmatpush1.bf16.msra.mxu0 0
      %500 = vmatprep.subr.bf16.mxu0 0
      %501 = vmatpush1.bf16.msra.mxu0 0
      %502 = vmatprep.subr.bf16.mxu0 0
      %503 = vmatpush1.bf16.msra.mxu0 0
      %504 = vmatprep.subr.bf16.mxu0 0
      %505 = vmatpush1.bf16.msra.mxu0 0
      %506 = vmatprep.subr.bf16.mxu0 0
      %507 = vmatpush1.bf16.msra.mxu0 0
      %508 = vmatprep.subr.bf16.mxu0 0
      %509 = vmatpush1.bf16.msra.mxu0 0
      %510 = vmatprep.subr.bf16.mxu0 0
      %511 = vmatpush1.bf16.msra.mxu0 0
      %512 = vmatprep.subr.bf16.mxu0 0
      %513 = vmatpush1.bf16.msra.mxu0 0
      %514 = vmatprep.subr.bf16.mxu0 0
      %515 = vmatpush1.bf16.msra.mxu0 0
      %516 = vmatprep.subr.bf16.mxu0 0
      %517 = vmatpush1.bf16.msra.mxu0 0
      %518 = vmatprep.subr.bf16.mxu0 0
      %519 = vmatpush1.bf16.msra.mxu0 0
      %520 = vmatprep.mubr.bf16.mxu0 0
      %521 = vmatmul.mubr.bf16.gmra.mrb[0].mxu0 %v441
      %v522 = vpop.f32.mrb[0].mxu0
      %v523 = vadd.f32 %v333, %v522
      %v524 = vpop.f32.mrb[0].mxu0
      %v525 = vpop.f32.mrb[0].mxu0
      %v526 = vadd.f32 %v333, %v525
      %v527 = vpop.f32.mrb[0].mxu0
      %528 = vmatprep.mubr.bf16.mxu0 0
      %529 = vmatmul.mubr.bf16.gmra.mrb[0].mxu0 %v444
      %v530 = vpop.f32.mrb[0].mxu0
      %v531 = vadd.f32 %v333, %v530
      %v532 = vpop.f32.mrb[0].mxu0
      %v533 = vpop.f32.mrb[0].mxu0
      %v534 = vadd.f32 %v333, %v533
      %v535 = vpop.f32.mrb[0].mxu0
      %536 = vmatprep.mubr.bf16.mxu0 0
      %537 = vmatmul.mubr.bf16.gmra.mrb[0].mxu0 %v447
      %v538 = vpop.f32.mrb[0].mxu0
      %v539 = vadd.f32 %v333, %v538
      %v540 = vpop.f32.mrb[0].mxu0
      %v541 = vpop.f32.mrb[0].mxu0
      %v542 = vadd.f32 %v333, %v541
      %v543 = vpop.f32.mrb[0].mxu0
      %544 = vmatprep.mubr.bf16.mxu0 0
      %545 = vmatmul.mubr.bf16.gmra.mrb[0].mxu0 %v450
      %v546 = vpop.f32.mrb[0].mxu0
      %v547 = vadd.f32 %v333, %v546
      %v548 = vpop.f32.mrb[0].mxu0
      %v549 = vpop.f32.mrb[0].mxu0
      %v550 = vadd.f32 %v333, %v549
      %v551 = vpop.f32.mrb[0].mxu0
      %552 = vmatprep.mubr.bf16.mxu0 0
      %553 = vmatmul.mubr.bf16.gmra.mrb[0].mxu0 %v453
      %v554 = vpop.f32.mrb[0].mxu0
      %v555 = vadd.f32 %v333, %v554
      %v556 = vpop.f32.mrb[0].mxu0
      %v557 = vpop.f32.mrb[0].mxu0
      %v558 = vadd.f32 %v333, %v557
      %v559 = vpop.f32.mrb[0].mxu0
      %560 = vmatprep.mubr.bf16.mxu0 0
      %561 = vmatmul.mubr.bf16.gmra.mrb[0].mxu0 %v456
      %v562 = vpop.f32.mrb[0].mxu0
      %v563 = vadd.f32 %v333, %v562
      %v564 = vpop.f32.mrb[0].mxu0
      %v565 = vpop.f32.mrb[0].mxu0
      %v566 = vadd.f32 %v333, %v565
      %v567 = vpop.f32.mrb[0].mxu0
      %568 = vmatprep.mubr.bf16.mxu0 0
      %569 = vmatmul.mubr.bf16.gmra.mrb[0].mxu0 %v459
      %v570 = vpop.f32.mrb[0].mxu0
      %v571 = vadd.f32 %v333, %v570
      %v572 = vpop.f32.mrb[0].mxu0
      %v573 = vpop.f32.mrb[0].mxu0
      %v574 = vadd.f32 %v333, %v573
      %v575 = vpop.f32.mrb[0].mxu0
      %576 = vmatprep.mubr.bf16.mxu0 0
      %577 = vmatmul.mubr.bf16.gmra.mrb[0].mxu0 %v462
      %v578 = vpop.f32.mrb[0].mxu0
      %v579 = vadd.f32 %v333, %v578
      %v580 = vpop.f32.mrb[0].mxu0
      %v581 = vpop.f32.mrb[0].mxu0
      %v582 = vadd.f32 %v333, %v581
      %v583 = vpop.f32.mrb[0].mxu0
      %584 = vmatprep.mubr.bf16.mxu0 0
      %585 = vmatmul.mubr.bf16.gmra.mrb[0].mxu0 %v465
      %v586 = vpop.f32.mrb[0].mxu0
      %v587 = vadd.f32 %v333, %v586
      %v588 = vpop.f32.mrb[0].mxu0
      %v589 = vpop.f32.mrb[0].mxu0
      %v590 = vadd.f32 %v333, %v589
      %v591 = vpop.f32.mrb[0].mxu0
      %592 = vmatprep.mubr.bf16.mxu0 0
      %593 = vmatmul.mubr.bf16.gmra.mrb[0].mxu0 %v468
      %v594 = vpop.f32.mrb[0].mxu0
      %v595 = vadd.f32 %v333, %v594
      %v596 = vpop.f32.mrb[0].mxu0
      %v597 = vpop.f32.mrb[0].mxu0
      %v598 = vadd.f32 %v333, %v597
      %v599 = vpop.f32.mrb[0].mxu0
      %600 = vmatprep.mubr.bf16.mxu0 0
      %601 = vmatmul.mubr.bf16.gmra.mrb[0].mxu0 %v471
      %v602 = vpop.f32.mrb[0].mxu0
      %v603 = vadd.f32 %v333, %v602
      %v604 = vpop.f32.mrb[0].mxu0
      %v605 = vpop.f32.mrb[0].mxu0
      %v606 = vadd.f32 %v333, %v605
      %v607 = vpop.f32.mrb[0].mxu0
      %608 = vmatprep.mubr.bf16.mxu0 0
      %609 = vmatmul.mubr.bf16.gmra.mrb[0].mxu0 %v474
      %v610 = vpop.f32.mrb[0].mxu0
      %v611 = vadd.f32 %v333, %v610
      %v612 = vpop.f32.mrb[0].mxu0
      %v613 = vpop.f32.mrb[0].mxu0
      %v614 = vadd.f32 %v333, %v613
      %v615 = vpop.f32.mrb[0].mxu0
      %616 = vmatprep.mubr.bf16.mxu0 0
      %617 = vmatmul.mubr.bf16.gmra.mrb[0].mxu0 %v477
      %v618 = vpop.f32.mrb[0].mxu0
      %v619 = vadd.f32 %v333, %v618
      %v620 = vpop.f32.mrb[0].mxu0
      %v621 = vpop.f32.mrb[0].mxu0
      %v622 = vadd.f32 %v333, %v621
      %v623 = vpop.f32.mrb[0].mxu0
      %624 = vmatprep.mubr.bf16.mxu0 0
      %625 = vmatmul.mubr.bf16.gmra.mrb[0].mxu0 %v480
      %v626 = vpop.f32.mrb[0].mxu0
      %v627 = vadd.f32 %v333, %v626
      %v628 = vpop.f32.mrb[0].mxu0
      %v629 = vpop.f32.mrb[0].mxu0
      %v630 = vadd.f32 %v333, %v629
      %v631 = vpop.f32.mrb[0].mxu0
      %632 = vmatprep.mubr.bf16.mxu0 0
      %633 = vmatmul.mubr.bf16.gmra.mrb[0].mxu0 %v483
      %v634 = vpop.f32.mrb[0].mxu0
      %v635 = vadd.f32 %v333, %v634
      %v636 = vpop.f32.mrb[0].mxu0
      %v637 = vpop.f32.mrb[0].mxu0
      %v638 = vadd.f32 %v333, %v637
      %v639 = vpop.f32.mrb[0].mxu0
      %640 = vmatprep.mubr.bf16.mxu0 0
      %641 = vmatmul.mubr.bf16.gmra.mrb[0].mxu0 %v486
      %v642 = vpop.f32.mrb[0].mxu0
      %v643 = vadd.f32 %v333, %v642
      %v644 = vpop.f32.mrb[0].mxu0
      %v645 = vpop.f32.mrb[0].mxu0
      %v646 = vadd.f32 %v333, %v645
      %v647 = vpop.f32.mrb[0].mxu0
      %648 = vdwg.mxu0
      %v649 = vxor.u32 %v523, 2147483648
      %v650 = vxor.u32 %v526, 2147483648
      %v651 = vxor.u32 %v531, 2147483648
      %v652 = vxor.u32 %v534, 2147483648
      %v653 = vxor.u32 %v539, 2147483648
      %v654 = vxor.u32 %v542, 2147483648
      %v655 = vxor.u32 %v547, 2147483648
      %v656 = vxor.u32 %v550, 2147483648
      %v657 = vxor.u32 %v555, 2147483648
      %v658 = vxor.u32 %v558, 2147483648
      %v659 = vxor.u32 %v563, 2147483648
      %v660 = vxor.u32 %v566, 2147483648
      %v661 = vxor.u32 %v571, 2147483648
      %v662 = vxor.u32 %v574, 2147483648
      %v663 = vxor.u32 %v579, 2147483648
      %v664 = vxor.u32 %v582, 2147483648
      %v665 = vxor.u32 %v587, 2147483648
      %v666 = vxor.u32 %v590, 2147483648
      %v667 = vxor.u32 %v595, 2147483648
      %v668 = vxor.u32 %v598, 2147483648
      %v669 = vxor.u32 %v603, 2147483648
      %v670 = vxor.u32 %v606, 2147483648
      %v671 = vxor.u32 %v611, 2147483648
      %v672 = vxor.u32 %v614, 2147483648
      %v673 = vxor.u32 %v619, 2147483648
      %v674 = vxor.u32 %v622, 2147483648
      %v675 = vxor.u32 %v627, 2147483648
      %v676 = vxor.u32 %v630, 2147483648
      %v677 = vxor.u32 %v635, 2147483648
      %v678 = vxor.u32 %v638, 2147483648
      %v679 = vxor.u32 %v643, 2147483648
      %v680 = vxor.u32 %v646, 2147483648
      %v681 = vmul.f32 %v649, 1.442695
      %v682 = vpow.pop %v681
      %v683 = vmul.f32 %v650, 1.442695
      %v684 = vpow.pop %v683
      %v685 = vmul.f32 %v651, 1.442695
      %v686 = vpow.pop %v685
      %v687 = vmul.f32 %v652, 1.442695
      %v688 = vpow.pop %v687
      %v689 = vmul.f32 %v653, 1.442695
      %v690 = vpow.pop %v689
      %v691 = vmul.f32 %v654, 1.442695
      %v692 = vpow.pop %v691
      %v693 = vmul.f32 %v655, 1.442695
      %v694 = vpow.pop %v693
      %v695 = vmul.f32 %v656, 1.442695
      %v696 = vpow.pop %v695
      %v697 = vmul.f32 %v657, 1.442695
      %v698 = vpow.pop %v697
      %v699 = vmul.f32 %v658, 1.442695
      %v700 = vpow.pop %v699
      %v701 = vmul.f32 %v659, 1.442695
      %v702 = vpow.pop %v701
      %v703 = vmul.f32 %v660, 1.442695
      %v704 = vpow.pop %v703
      %v705 = vmul.f32 %v661, 1.442695
      %v706 = vpow.pop %v705
      %v707 = vmul.f32 %v662, 1.442695
      %v708 = vpow.pop %v707
      %v709 = vmul.f32 %v663, 1.442695
      %v710 = vpow.pop %v709
      %v711 = vmul.f32 %v664, 1.442695
      %v712 = vpow.pop %v711
      %v713 = vmul.f32 %v665, 1.442695
      %v714 = vpow.pop %v713
      %v715 = vmul.f32 %v666, 1.442695
      %v716 = vpow.pop %v715
      %v717 = vmul.f32 %v667, 1.442695
      %v718 = vpow.pop %v717
      %v719 = vmul.f32 %v668, 1.442695
      %v720 = vpow.pop %v719
      %v721 = vmul.f32 %v669, 1.442695
      %v722 = vpow.pop %v721
      %v723 = vmul.f32 %v670, 1.442695
      %v724 = vpow.pop %v723
      %v725 = vmul.f32 %v671, 1.442695
      %v726 = vpow.pop %v725
      %v727 = vmul.f32 %v672, 1.442695
      %v728 = vpow.pop %v727
      %v729 = vmul.f32 %v673, 1.442695
      %v730 = vpow.pop %v729
      %v731 = vmul.f32 %v674, 1.442695
      %v732 = vpow.pop %v731
      %v733 = vmul.f32 %v675, 1.442695
      %v734 = vpow.pop %v733
      %v735 = vmul.f32 %v676, 1.442695
      %v736 = vpow.pop %v735
      %v737 = vmul.f32 %v677, 1.442695
      %v738 = vpow.pop %v737
      %v739 = vmul.f32 %v678, 1.442695
      %v740 = vpow.pop %v739
      %v741 = vmul.f32 %v679, 1.442695
      %v742 = vpow.pop %v741
      %v743 = vmul.f32 %v680, 1.442695
      %v744 = vpow.pop %v743
      %v745 = vadd.f32 %v682, 1.0
      %v746 = vadd.f32 %v684, 1.0
      %v747 = vadd.f32 %v686, 1.0
      %v748 = vadd.f32 %v688, 1.0
      %v749 = vadd.f32 %v690, 1.0
      %v750 = vadd.f32 %v692, 1.0
      %v751 = vadd.f32 %v694, 1.0
      %v752 = vadd.f32 %v696, 1.0
      %v753 = vadd.f32 %v698, 1.0
      %v754 = vadd.f32 %v700, 1.0
      %v755 = vadd.f32 %v702, 1.0
      %v756 = vadd.f32 %v704, 1.0
      %v757 = vadd.f32 %v706, 1.0
      %v758 = vadd.f32 %v708, 1.0
      %v759 = vadd.f32 %v710, 1.0
      %v760 = vadd.f32 %v712, 1.0
      %v761 = vadd.f32 %v714, 1.0
      %v762 = vadd.f32 %v716, 1.0
      %v763 = vadd.f32 %v718, 1.0
      %v764 = vadd.f32 %v720, 1.0
      %v765 = vadd.f32 %v722, 1.0
      %v766 = vadd.f32 %v724, 1.0
      %v767 = vadd.f32 %v726, 1.0
      %v768 = vadd.f32 %v728, 1.0
      %v769 = vadd.f32 %v730, 1.0
      %v770 = vadd.f32 %v732, 1.0
      %v771 = vadd.f32 %v734, 1.0
      %v772 = vadd.f32 %v736, 1.0
      %v773 = vadd.f32 %v738, 1.0
      %v774 = vadd.f32 %v740, 1.0
      %v775 = vadd.f32 %v742, 1.0
      %v776 = vadd.f32 %v744, 1.0
      %v777 = vrcp.pop %v745
      %v778 = vmul.f32 1.0, %v777
      %v779 = vrcp.pop %v746
      %v780 = vmul.f32 1.0, %v779
      %v781 = vrcp.pop %v747
      %v782 = vmul.f32 1.0, %v781
      %v783 = vrcp.pop %v748
      %v784 = vmul.f32 1.0, %v783
      %v785 = vrcp.pop %v749
      %v786 = vmul.f32 1.0, %v785
      %v787 = vrcp.pop %v750
      %v788 = vmul.f32 1.0, %v787
      %v789 = vrcp.pop %v751
      %v790 = vmul.f32 1.0, %v789
      %v791 = vrcp.pop %v752
      %v792 = vmul.f32 1.0, %v791
      %v793 = vrcp.pop %v753
      %v794 = vmul.f32 1.0, %v793
      %v795 = vrcp.pop %v754
      %v796 = vmul.f32 1.0, %v795
      %v797 = vrcp.pop %v755
      %v798 = vmul.f32 1.0, %v797
      %v799 = vrcp.pop %v756
      %v800 = vmul.f32 1.0, %v799
      %v801 = vrcp.pop %v757
      %v802 = vmul.f32 1.0, %v801
      %v803 = vrcp.pop %v758
      %v804 = vmul.f32 1.0, %v803
      %v805 = vrcp.pop %v759
      %v806 = vmul.f32 1.0, %v805
      %v807 = vrcp.pop %v760
      %v808 = vmul.f32 1.0, %v807
      %v809 = vrcp.pop %v761
      %v810 = vmul.f32 1.0, %v809
      %v811 = vrcp.pop %v762
      %v812 = vmul.f32 1.0, %v811
      %v813 = vrcp.pop %v763
      %v814 = vmul.f32 1.0, %v813
      %v815 = vrcp.pop %v764
      %v816 = vmul.f32 1.0, %v815
      %v817 = vrcp.pop %v765
      %v818 = vmul.f32 1.0, %v817
      %v819 = vrcp.pop %v766
      %v820 = vmul.f32 1.0, %v819
      %v821 = vrcp.pop %v767
      %v822 = vmul.f32 1.0, %v821
      %v823 = vrcp.pop %v768
      %v824 = vmul.f32 1.0, %v823
      %v825 = vrcp.pop %v769
      %v826 = vmul.f32 1.0, %v825
      %v827 = vrcp.pop %v770
      %v828 = vmul.f32 1.0, %v827
      %v829 = vrcp.pop %v771
      %v830 = vmul.f32 1.0, %v829
      %v831 = vrcp.pop %v772
      %v832 = vmul.f32 1.0, %v831
      %v833 = vrcp.pop %v773
      %v834 = vmul.f32 1.0, %v833
      %v835 = vrcp.pop %v774
      %v836 = vmul.f32 1.0, %v835
      %v837 = vrcp.pop %v775
      %v838 = vmul.f32 1.0, %v837
      %v839 = vrcp.pop %v776
      %v840 = vmul.f32 1.0, %v839
      %v841 = vmul.f32 %v288, %v778
      %v842 = vmul.f32 %v289, %v780
      %v843 = vmul.f32 %v290, %v782
      %v844 = vmul.f32 %v291, %v784
      %v845 = vmul.f32 %v292, %v786
      %v846 = vmul.f32 %v293, %v788
      %v847 = vmul.f32 %v294, %v790
      %v848 = vmul.f32 %v295, %v792
      %v849 = vmul.f32 %v296, %v794
      %v850 = vmul.f32 %v297, %v796
      %v851 = vmul.f32 %v298, %v798
      %v852 = vmul.f32 %v299, %v800
      %v853 = vmul.f32 %v300, %v802
      %v854 = vmul.f32 %v301, %v804
      %v855 = vmul.f32 %v302, %v806
      %v856 = vmul.f32 %v303, %v808
      %v857 = vmul.f32 %v304, %v810
      %v858 = vmul.f32 %v305, %v812
      %v859 = vmul.f32 %v306, %v814
      %v860 = vmul.f32 %v307, %v816
      %v861 = vmul.f32 %v308, %v818
      %v862 = vmul.f32 %v309, %v820
      %v863 = vmul.f32 %v310, %v822
      %v864 = vmul.f32 %v311, %v824
      %v865 = vmul.f32 %v312, %v826
      %v866 = vmul.f32 %v313, %v828
      %v867 = vmul.f32 %v314, %v830
      %v868 = vmul.f32 %v315, %v832
      %v869 = vmul.f32 %v316, %v834
      %v870 = vmul.f32 %v317, %v836
      %v871 = vmul.f32 %v318, %v838
      %v872 = vmul.f32 %v319, %v840
      %905 = vrot.lane.b32.xlu0 %v841, 96
      %v906 = vpop.permute.xlu0 %905
      %907 = vrot.lane.b32.xlu0 %v842, 96
      %v908 = vpop.permute.xlu0 %907
      %909 = vrot.lane.b32.xlu0 %v843, 96
      %v910 = vpop.permute.xlu0 %909
      %911 = vrot.lane.b32.xlu0 %v844, 96
      %v912 = vpop.permute.xlu0 %911
      %913 = vrot.lane.b32.xlu0 %v845, 96
      %v914 = vpop.permute.xlu0 %913
      %915 = vrot.lane.b32.xlu0 %v846, 96
      %v916 = vpop.permute.xlu0 %915
      %917 = vrot.lane.b32.xlu0 %v847, 96
      %v918 = vpop.permute.xlu0 %917
      %919 = vrot.lane.b32.xlu0 %v848, 96
      %v920 = vpop.permute.xlu0 %919
      %921 = vrot.lane.b32.xlu0 %v849, 96
      %v922 = vpop.permute.xlu0 %921
      %923 = vrot.lane.b32.xlu0 %v850, 96
      %v924 = vpop.permute.xlu0 %923
      %925 = vrot.lane.b32.xlu0 %v851, 96
      %v926 = vpop.permute.xlu0 %925
      %927 = vrot.lane.b32.xlu0 %v852, 96
      %v928 = vpop.permute.xlu0 %927
      %929 = vrot.lane.b32.xlu0 %v853, 96
      %v930 = vpop.permute.xlu0 %929
      %931 = vrot.lane.b32.xlu0 %v854, 96
      %v932 = vpop.permute.xlu0 %931
      %933 = vrot.lane.b32.xlu0 %v855, 96
      %v934 = vpop.permute.xlu0 %933
      %935 = vrot.lane.b32.xlu0 %v856, 96
      %v936 = vpop.permute.xlu0 %935
      %937 = vrot.lane.b32.xlu0 %v857, 96
      %v938 = vpop.permute.xlu0 %937
      %939 = vrot.lane.b32.xlu0 %v858, 96
      %v940 = vpop.permute.xlu0 %939
      %941 = vrot.lane.b32.xlu0 %v859, 96
      %v942 = vpop.permute.xlu0 %941
      %943 = vrot.lane.b32.xlu0 %v860, 96
      %v944 = vpop.permute.xlu0 %943
      %945 = vrot.lane.b32.xlu0 %v861, 96
      %v946 = vpop.permute.xlu0 %945
      %947 = vrot.lane.b32.xlu0 %v862, 96
      %v948 = vpop.permute.xlu0 %947
      %949 = vrot.lane.b32.xlu0 %v863, 96
      %v950 = vpop.permute.xlu0 %949
      %951 = vrot.lane.b32.xlu0 %v864, 96
      %v952 = vpop.permute.xlu0 %951
      %953 = vrot.lane.b32.xlu0 %v865, 96
      %v954 = vpop.permute.xlu0 %953
      %955 = vrot.lane.b32.xlu0 %v866, 96
      %v956 = vpop.permute.xlu0 %955
      %957 = vrot.lane.b32.xlu0 %v867, 96
      %v958 = vpop.permute.xlu0 %957
      %959 = vrot.lane.b32.xlu0 %v868, 96
      %v960 = vpop.permute.xlu0 %959
      %961 = vrot.lane.b32.xlu0 %v869, 96
      %v962 = vpop.permute.xlu0 %961
      %963 = vrot.lane.b32.xlu0 %v870, 96
      %v964 = vpop.permute.xlu0 %963
      %965 = vrot.lane.b32.xlu0 %v871, 96
      %v966 = vpop.permute.xlu0 %965
      %967 = vrot.lane.b32.xlu0 %v872, 96
      %v968 = vpop.permute.xlu0 %967
      %v1001 = vsub.f32 %v841, %v906
      %v1002 = vsub.f32 %v842, %v908
      %v1003 = vsub.f32 %v843, %v910
      %v1004 = vsub.f32 %v844, %v912
      %v1005 = vsub.f32 %v845, %v914
      %v1006 = vsub.f32 %v846, %v916
      %v1007 = vsub.f32 %v847, %v918
      %v1008 = vsub.f32 %v848, %v920
      %v1009 = vsub.f32 %v849, %v922
      %v1010 = vsub.f32 %v850, %v924
      %v1011 = vsub.f32 %v851, %v926
      %v1012 = vsub.f32 %v852, %v928
      %v1013 = vsub.f32 %v853, %v930
      %v1014 = vsub.f32 %v854, %v932
      %v1015 = vsub.f32 %v855, %v934
      %v1016 = vsub.f32 %v856, %v936
      %v1017 = vsub.f32 %v857, %v938
      %v1018 = vsub.f32 %v858, %v940
      %v1019 = vsub.f32 %v859, %v942
      %v1020 = vsub.f32 %v860, %v944
      %v1021 = vsub.f32 %v861, %v946
      %v1022 = vsub.f32 %v862, %v948
      %v1023 = vsub.f32 %v863, %v950
      %v1024 = vsub.f32 %v864, %v952
      %v1025 = vsub.f32 %v865, %v954
      %v1026 = vsub.f32 %v866, %v956
      %v1027 = vsub.f32 %v867, %v958
      %v1028 = vsub.f32 %v868, %v960
      %v1029 = vsub.f32 %v869, %v962
      %v1030 = vsub.f32 %v870, %v964
      %v1031 = vsub.f32 %v871, %v966
      %v1032 = vsub.f32 %v872, %v968
      %v1033 = vxor.u32 %v1001, 2147483648
      %v1034 = vxor.u32 %v1002, 2147483648
      %v1035 = vxor.u32 %v1003, 2147483648
      %v1036 = vxor.u32 %v1004, 2147483648
      %v1037 = vxor.u32 %v1005, 2147483648
      %v1038 = vxor.u32 %v1006, 2147483648
      %v1039 = vxor.u32 %v1007, 2147483648
      %v1040 = vxor.u32 %v1008, 2147483648
      %v1041 = vxor.u32 %v1009, 2147483648
      %v1042 = vxor.u32 %v1010, 2147483648
      %v1043 = vxor.u32 %v1011, 2147483648
      %v1044 = vxor.u32 %v1012, 2147483648
      %v1045 = vxor.u32 %v1013, 2147483648
      %v1046 = vxor.u32 %v1014, 2147483648
      %v1047 = vxor.u32 %v1015, 2147483648
      %v1048 = vxor.u32 %v1016, 2147483648
      %v1049 = vxor.u32 %v1017, 2147483648
      %v1050 = vxor.u32 %v1018, 2147483648
      %v1051 = vxor.u32 %v1019, 2147483648
      %v1052 = vxor.u32 %v1020, 2147483648
      %v1053 = vxor.u32 %v1021, 2147483648
      %v1054 = vxor.u32 %v1022, 2147483648
      %v1055 = vxor.u32 %v1023, 2147483648
      %v1056 = vxor.u32 %v1024, 2147483648
      %v1057 = vxor.u32 %v1025, 2147483648
      %v1058 = vxor.u32 %v1026, 2147483648
      %v1059 = vxor.u32 %v1027, 2147483648
      %v1060 = vxor.u32 %v1028, 2147483648
      %v1061 = vxor.u32 %v1029, 2147483648
      %v1062 = vxor.u32 %v1030, 2147483648
      %v1063 = vxor.u32 %v1031, 2147483648
      %v1064 = vxor.u32 %v1032, 2147483648
      %v1065 = vmul.f32 %v1033, 1.442695
      %v1066 = vpow.pop %v1065
      %v1067 = vmul.f32 %v1034, 1.442695
      %v1068 = vpow.pop %v1067
      %v1069 = vmul.f32 %v1035, 1.442695
      %v1070 = vpow.pop %v1069
      %v1071 = vmul.f32 %v1036, 1.442695
      %v1072 = vpow.pop %v1071
      %v1073 = vmul.f32 %v1037, 1.442695
      %v1074 = vpow.pop %v1073
      %v1075 = vmul.f32 %v1038, 1.442695
      %v1076 = vpow.pop %v1075
      %v1077 = vmul.f32 %v1039, 1.442695
      %v1078 = vpow.pop %v1077
      %v1079 = vmul.f32 %v1040, 1.442695
      %v1080 = vpow.pop %v1079
      %v1081 = vmul.f32 %v1041, 1.442695
      %v1082 = vpow.pop %v1081
      %v1083 = vmul.f32 %v1042, 1.442695
      %v1084 = vpow.pop %v1083
      %v1085 = vmul.f32 %v1043, 1.442695
      %v1086 = vpow.pop %v1085
      %v1087 = vmul.f32 %v1044, 1.442695
      %v1088 = vpow.pop %v1087
      %v1089 = vmul.f32 %v1045, 1.442695
      %v1090 = vpow.pop %v1089
      %v1091 = vmul.f32 %v1046, 1.442695
      %v1092 = vpow.pop %v1091
      %v1093 = vmul.f32 %v1047, 1.442695
      %v1094 = vpow.pop %v1093
      %v1095 = vmul.f32 %v1048, 1.442695
      %v1096 = vpow.pop %v1095
      %v1097 = vmul.f32 %v1049, 1.442695
      %v1098 = vpow.pop %v1097
      %v1099 = vmul.f32 %v1050, 1.442695
      %v1100 = vpow.pop %v1099
      %v1101 = vmul.f32 %v1051, 1.442695
      %v1102 = vpow.pop %v1101
      %v1103 = vmul.f32 %v1052, 1.442695
      %v1104 = vpow.pop %v1103
      %v1105 = vmul.f32 %v1053, 1.442695
      %v1106 = vpow.pop %v1105
      %v1107 = vmul.f32 %v1054, 1.442695
      %v1108 = vpow.pop %v1107
      %v1109 = vmul.f32 %v1055, 1.442695
      %v1110 = vpow.pop %v1109
      %v1111 = vmul.f32 %v1056, 1.442695
      %v1112 = vpow.pop %v1111
      %v1113 = vmul.f32 %v1057, 1.442695
      %v1114 = vpow.pop %v1113
      %v1115 = vmul.f32 %v1058, 1.442695
      %v1116 = vpow.pop %v1115
      %v1117 = vmul.f32 %v1059, 1.442695
      %v1118 = vpow.pop %v1117
      %v1119 = vmul.f32 %v1060, 1.442695
      %v1120 = vpow.pop %v1119
      %v1121 = vmul.f32 %v1061, 1.442695
      %v1122 = vpow.pop %v1121
      %v1123 = vmul.f32 %v1062, 1.442695
      %v1124 = vpow.pop %v1123
      %v1125 = vmul.f32 %v1063, 1.442695
      %v1126 = vpow.pop %v1125
      %v1127 = vmul.f32 %v1064, 1.442695
      %v1128 = vpow.pop %v1127
      %v1129 = vadd.f32 %v1066, 1.0
      %v1130 = vadd.f32 %v1068, 1.0
      %v1131 = vadd.f32 %v1070, 1.0
      %v1132 = vadd.f32 %v1072, 1.0
      %v1133 = vadd.f32 %v1074, 1.0
      %v1134 = vadd.f32 %v1076, 1.0
      %v1135 = vadd.f32 %v1078, 1.0
      %v1136 = vadd.f32 %v1080, 1.0
      %v1137 = vadd.f32 %v1082, 1.0
      %v1138 = vadd.f32 %v1084, 1.0
      %v1139 = vadd.f32 %v1086, 1.0
      %v1140 = vadd.f32 %v1088, 1.0
      %v1141 = vadd.f32 %v1090, 1.0
      %v1142 = vadd.f32 %v1092, 1.0
      %v1143 = vadd.f32 %v1094, 1.0
      %v1144 = vadd.f32 %v1096, 1.0
      %v1145 = vadd.f32 %v1098, 1.0
      %v1146 = vadd.f32 %v1100, 1.0
      %v1147 = vadd.f32 %v1102, 1.0
      %v1148 = vadd.f32 %v1104, 1.0
      %v1149 = vadd.f32 %v1106, 1.0
      %v1150 = vadd.f32 %v1108, 1.0
      %v1151 = vadd.f32 %v1110, 1.0
      %v1152 = vadd.f32 %v1112, 1.0
      %v1153 = vadd.f32 %v1114, 1.0
      %v1154 = vadd.f32 %v1116, 1.0
      %v1155 = vadd.f32 %v1118, 1.0
      %v1156 = vadd.f32 %v1120, 1.0
      %v1157 = vadd.f32 %v1122, 1.0
      %v1158 = vadd.f32 %v1124, 1.0
      %v1159 = vadd.f32 %v1126, 1.0
      %v1160 = vadd.f32 %v1128, 1.0
      %v1161 = vrcp.pop %v1129
      %v1162 = vmul.f32 1.0, %v1161
      %v1163 = vrcp.pop %v1130
      %v1164 = vmul.f32 1.0, %v1163
      %v1165 = vrcp.pop %v1131
      %v1166 = vmul.f32 1.0, %v1165
      %v1167 = vrcp.pop %v1132
      %v1168 = vmul.f32 1.0, %v1167
      %v1169 = vrcp.pop %v1133
      %v1170 = vmul.f32 1.0, %v1169
      %v1171 = vrcp.pop %v1134
      %v1172 = vmul.f32 1.0, %v1171
      %v1173 = vrcp.pop %v1135
      %v1174 = vmul.f32 1.0, %v1173
      %v1175 = vrcp.pop %v1136
      %v1176 = vmul.f32 1.0, %v1175
      %v1177 = vrcp.pop %v1137
      %v1178 = vmul.f32 1.0, %v1177
      %v1179 = vrcp.pop %v1138
      %v1180 = vmul.f32 1.0, %v1179
      %v1181 = vrcp.pop %v1139
      %v1182 = vmul.f32 1.0, %v1181
      %v1183 = vrcp.pop %v1140
      %v1184 = vmul.f32 1.0, %v1183
      %v1185 = vrcp.pop %v1141
      %v1186 = vmul.f32 1.0, %v1185
      %v1187 = vrcp.pop %v1142
      %v1188 = vmul.f32 1.0, %v1187
      %v1189 = vrcp.pop %v1143
      %v1190 = vmul.f32 1.0, %v1189
      %v1191 = vrcp.pop %v1144
      %v1192 = vmul.f32 1.0, %v1191
      %v1193 = vrcp.pop %v1145
      %v1194 = vmul.f32 1.0, %v1193
      %v1195 = vrcp.pop %v1146
      %v1196 = vmul.f32 1.0, %v1195
      %v1197 = vrcp.pop %v1147
      %v1198 = vmul.f32 1.0, %v1197
      %v1199 = vrcp.pop %v1148
      %v1200 = vmul.f32 1.0, %v1199
      %v1201 = vrcp.pop %v1149
      %v1202 = vmul.f32 1.0, %v1201
      %v1203 = vrcp.pop %v1150
      %v1204 = vmul.f32 1.0, %v1203
      %v1205 = vrcp.pop %v1151
      %v1206 = vmul.f32 1.0, %v1205
      %v1207 = vrcp.pop %v1152
      %v1208 = vmul.f32 1.0, %v1207
      %v1209 = vrcp.pop %v1153
      %v1210 = vmul.f32 1.0, %v1209
      %v1211 = vrcp.pop %v1154
      %v1212 = vmul.f32 1.0, %v1211
      %v1213 = vrcp.pop %v1155
      %v1214 = vmul.f32 1.0, %v1213
      %v1215 = vrcp.pop %v1156
      %v1216 = vmul.f32 1.0, %v1215
      %v1217 = vrcp.pop %v1157
      %v1218 = vmul.f32 1.0, %v1217
      %v1219 = vrcp.pop %v1158
      %v1220 = vmul.f32 1.0, %v1219
      %v1221 = vrcp.pop %v1159
      %v1222 = vmul.f32 1.0, %v1221
      %v1223 = vrcp.pop %v1160
      %v1224 = vmul.f32 1.0, %v1223
      %1257 = vrot.lane.b32.xlu0 %v288, 96
      %v1258 = vpop.permute.xlu0 %1257
      %1259 = vrot.lane.b32.xlu0 %v289, 96
      %v1260 = vpop.permute.xlu0 %1259
      %1261 = vrot.lane.b32.xlu0 %v290, 96
      %v1262 = vpop.permute.xlu0 %1261
      %1263 = vrot.lane.b32.xlu0 %v291, 96
      %v1264 = vpop.permute.xlu0 %1263
      %1265 = vrot.lane.b32.xlu0 %v292, 96
      %v1266 = vpop.permute.xlu0 %1265
      %1267 = vrot.lane.b32.xlu0 %v293, 96
      %v1268 = vpop.permute.xlu0 %1267
      %1269 = vrot.lane.b32.xlu0 %v294, 96
      %v1270 = vpop.permute.xlu0 %1269
      %1271 = vrot.lane.b32.xlu0 %v295, 96
      %v1272 = vpop.permute.xlu0 %1271
      %1273 = vrot.lane.b32.xlu0 %v296, 96
      %v1274 = vpop.permute.xlu0 %1273
      %1275 = vrot.lane.b32.xlu0 %v297, 96
      %v1276 = vpop.permute.xlu0 %1275
      %1277 = vrot.lane.b32.xlu0 %v298, 96
      %v1278 = vpop.permute.xlu0 %1277
      %1279 = vrot.lane.b32.xlu0 %v299, 96
      %v1280 = vpop.permute.xlu0 %1279
      %1281 = vrot.lane.b32.xlu0 %v300, 96
      %v1282 = vpop.permute.xlu0 %1281
      %1283 = vrot.lane.b32.xlu0 %v301, 96
      %v1284 = vpop.permute.xlu0 %1283
      %1285 = vrot.lane.b32.xlu0 %v302, 96
      %v1286 = vpop.permute.xlu0 %1285
      %1287 = vrot.lane.b32.xlu0 %v303, 96
      %v1288 = vpop.permute.xlu0 %1287
      %1289 = vrot.lane.b32.xlu0 %v304, 96
      %v1290 = vpop.permute.xlu0 %1289
      %1291 = vrot.lane.b32.xlu0 %v305, 96
      %v1292 = vpop.permute.xlu0 %1291
      %1293 = vrot.lane.b32.xlu0 %v306, 96
      %v1294 = vpop.permute.xlu0 %1293
      %1295 = vrot.lane.b32.xlu0 %v307, 96
      %v1296 = vpop.permute.xlu0 %1295
      %1297 = vrot.lane.b32.xlu0 %v308, 96
      %v1298 = vpop.permute.xlu0 %1297
      %1299 = vrot.lane.b32.xlu0 %v309, 96
      %v1300 = vpop.permute.xlu0 %1299
      %1301 = vrot.lane.b32.xlu0 %v310, 96
      %v1302 = vpop.permute.xlu0 %1301
      %1303 = vrot.lane.b32.xlu0 %v311, 96
      %v1304 = vpop.permute.xlu0 %1303
      %1305 = vrot.lane.b32.xlu0 %v312, 96
      %v1306 = vpop.permute.xlu0 %1305
      %1307 = vrot.lane.b32.xlu0 %v313, 96
      %v1308 = vpop.permute.xlu0 %1307
      %1309 = vrot.lane.b32.xlu0 %v314, 96
      %v1310 = vpop.permute.xlu0 %1309
      %1311 = vrot.lane.b32.xlu0 %v315, 96
      %v1312 = vpop.permute.xlu0 %1311
      %1313 = vrot.lane.b32.xlu0 %v316, 96
      %v1314 = vpop.permute.xlu0 %1313
      %1315 = vrot.lane.b32.xlu0 %v317, 96
      %v1316 = vpop.permute.xlu0 %1315
      %1317 = vrot.lane.b32.xlu0 %v318, 96
      %v1318 = vpop.permute.xlu0 %1317
      %1319 = vrot.lane.b32.xlu0 %v319, 96
      %v1320 = vpop.permute.xlu0 %1319
      %v1353 = vsub.f32 %v288, %v1258
      %v1354 = vsub.f32 %v289, %v1260
      %v1355 = vsub.f32 %v290, %v1262
      %v1356 = vsub.f32 %v291, %v1264
      %v1357 = vsub.f32 %v292, %v1266
      %v1358 = vsub.f32 %v293, %v1268
      %v1359 = vsub.f32 %v294, %v1270
      %v1360 = vsub.f32 %v295, %v1272
      %v1361 = vsub.f32 %v296, %v1274
      %v1362 = vsub.f32 %v297, %v1276
      %v1363 = vsub.f32 %v298, %v1278
      %v1364 = vsub.f32 %v299, %v1280
      %v1365 = vsub.f32 %v300, %v1282
      %v1366 = vsub.f32 %v301, %v1284
      %v1367 = vsub.f32 %v302, %v1286
      %v1368 = vsub.f32 %v303, %v1288
      %v1369 = vsub.f32 %v304, %v1290
      %v1370 = vsub.f32 %v305, %v1292
      %v1371 = vsub.f32 %v306, %v1294
      %v1372 = vsub.f32 %v307, %v1296
      %v1373 = vsub.f32 %v308, %v1298
      %v1374 = vsub.f32 %v309, %v1300
      %v1375 = vsub.f32 %v310, %v1302
      %v1376 = vsub.f32 %v311, %v1304
      %v1377 = vsub.f32 %v312, %v1306
      %v1378 = vsub.f32 %v313, %v1308
      %v1379 = vsub.f32 %v314, %v1310
      %v1380 = vsub.f32 %v315, %v1312
      %v1381 = vsub.f32 %v316, %v1314
      %v1382 = vsub.f32 %v317, %v1316
      %v1383 = vsub.f32 %v318, %v1318
      %v1384 = vsub.f32 %v319, %v1320
      %v1385 = vmul.f32 %v1353, %v1162
      %v1386 = vmul.f32 %v1354, %v1164
      %v1387 = vmul.f32 %v1355, %v1166
      %v1388 = vmul.f32 %v1356, %v1168
      %v1389 = vmul.f32 %v1357, %v1170
      %v1390 = vmul.f32 %v1358, %v1172
      %v1391 = vmul.f32 %v1359, %v1174
      %v1392 = vmul.f32 %v1360, %v1176
      %v1393 = vmul.f32 %v1361, %v1178
      %v1394 = vmul.f32 %v1362, %v1180
      %v1395 = vmul.f32 %v1363, %v1182
      %v1396 = vmul.f32 %v1364, %v1184
      %v1397 = vmul.f32 %v1365, %v1186
      %v1398 = vmul.f32 %v1366, %v1188
      %v1399 = vmul.f32 %v1367, %v1190
      %v1400 = vmul.f32 %v1368, %v1192
      %v1401 = vmul.f32 %v1369, %v1194
      %v1402 = vmul.f32 %v1370, %v1196
      %v1403 = vmul.f32 %v1371, %v1198
      %v1404 = vmul.f32 %v1372, %v1200
      %v1405 = vmul.f32 %v1373, %v1202
      %v1406 = vmul.f32 %v1374, %v1204
      %v1407 = vmul.f32 %v1375, %v1206
      %v1408 = vmul.f32 %v1376, %v1208
      %v1409 = vmul.f32 %v1377, %v1210
      %v1410 = vmul.f32 %v1378, %v1212
      %v1411 = vmul.f32 %v1379, %v1214
      %v1412 = vmul.f32 %v1380, %v1216
      %v1413 = vmul.f32 %v1381, %v1218
      %v1414 = vmul.f32 %v1382, %v1220
      %v1415 = vmul.f32 %v1383, %v1222
      %v1416 = vmul.f32 %v1384, %v1224
      %1449 = vrot.lane.b32.xlu0 %v1385, 32
      %v1450 = vpop.permute.xlu0 %1449
      %1451 = vrot.lane.b32.xlu0 %v1386, 32
      %v1452 = vpop.permute.xlu0 %1451
      %1453 = vrot.lane.b32.xlu0 %v1387, 32
      %v1454 = vpop.permute.xlu0 %1453
      %1455 = vrot.lane.b32.xlu0 %v1388, 32
      %v1456 = vpop.permute.xlu0 %1455
      %1457 = vrot.lane.b32.xlu0 %v1389, 32
      %v1458 = vpop.permute.xlu0 %1457
      %1459 = vrot.lane.b32.xlu0 %v1390, 32
      %v1460 = vpop.permute.xlu0 %1459
      %1461 = vrot.lane.b32.xlu0 %v1391, 32
      %v1462 = vpop.permute.xlu0 %1461
      %1463 = vrot.lane.b32.xlu0 %v1392, 32
      %v1464 = vpop.permute.xlu0 %1463
      %1465 = vrot.lane.b32.xlu0 %v1393, 32
      %v1466 = vpop.permute.xlu0 %1465
      %1467 = vrot.lane.b32.xlu0 %v1394, 32
      %v1468 = vpop.permute.xlu0 %1467
      %1469 = vrot.lane.b32.xlu0 %v1395, 32
      %v1470 = vpop.permute.xlu0 %1469
      %1471 = vrot.lane.b32.xlu0 %v1396, 32
      %v1472 = vpop.permute.xlu0 %1471
      %1473 = vrot.lane.b32.xlu0 %v1397, 32
      %v1474 = vpop.permute.xlu0 %1473
      %1475 = vrot.lane.b32.xlu0 %v1398, 32
      %v1476 = vpop.permute.xlu0 %1475
      %1477 = vrot.lane.b32.xlu0 %v1399, 32
      %v1478 = vpop.permute.xlu0 %1477
      %1479 = vrot.lane.b32.xlu0 %v1400, 32
      %v1480 = vpop.permute.xlu0 %1479
      %1481 = vrot.lane.b32.xlu0 %v1401, 32
      %v1482 = vpop.permute.xlu0 %1481
      %1483 = vrot.lane.b32.xlu0 %v1402, 32
      %v1484 = vpop.permute.xlu0 %1483
      %1485 = vrot.lane.b32.xlu0 %v1403, 32
      %v1486 = vpop.permute.xlu0 %1485
      %1487 = vrot.lane.b32.xlu0 %v1404, 32
      %v1488 = vpop.permute.xlu0 %1487
      %1489 = vrot.lane.b32.xlu0 %v1405, 32
      %v1490 = vpop.permute.xlu0 %1489
      %1491 = vrot.lane.b32.xlu0 %v1406, 32
      %v1492 = vpop.permute.xlu0 %1491
      %1493 = vrot.lane.b32.xlu0 %v1407, 32
      %v1494 = vpop.permute.xlu0 %1493
      %1495 = vrot.lane.b32.xlu0 %v1408, 32
      %v1496 = vpop.permute.xlu0 %1495
      %1497 = vrot.lane.b32.xlu0 %v1409, 32
      %v1498 = vpop.permute.xlu0 %1497
      %1499 = vrot.lane.b32.xlu0 %v1410, 32
      %v1500 = vpop.permute.xlu0 %1499
      %1501 = vrot.lane.b32.xlu0 %v1411, 32
      %v1502 = vpop.permute.xlu0 %1501
      %1503 = vrot.lane.b32.xlu0 %v1412, 32
      %v1504 = vpop.permute.xlu0 %1503
      %1505 = vrot.lane.b32.xlu0 %v1413, 32
      %v1506 = vpop.permute.xlu0 %1505
      %1507 = vrot.lane.b32.xlu0 %v1414, 32
      %v1508 = vpop.permute.xlu0 %1507
      %1509 = vrot.lane.b32.xlu0 %v1415, 32
      %v1510 = vpop.permute.xlu0 %1509
      %1511 = vrot.lane.b32.xlu0 %v1416, 32
      %v1512 = vpop.permute.xlu0 %1511
      %v1545 = vadd.f32 %v288, %v1450
      %v1546 = vadd.f32 %v289, %v1452
      %v1547 = vadd.f32 %v290, %v1454
      %v1548 = vadd.f32 %v291, %v1456
      %v1549 = vadd.f32 %v292, %v1458
      %v1550 = vadd.f32 %v293, %v1460
      %v1551 = vadd.f32 %v294, %v1462
      %v1552 = vadd.f32 %v295, %v1464
      %v1553 = vadd.f32 %v296, %v1466
      %v1554 = vadd.f32 %v297, %v1468
      %v1555 = vadd.f32 %v298, %v1470
      %v1556 = vadd.f32 %v299, %v1472
      %v1557 = vadd.f32 %v300, %v1474
      %v1558 = vadd.f32 %v301, %v1476
      %v1559 = vadd.f32 %v302, %v1478
      %v1560 = vadd.f32 %v303, %v1480
      %v1561 = vadd.f32 %v304, %v1482
      %v1562 = vadd.f32 %v305, %v1484
      %v1563 = vadd.f32 %v306, %v1486
      %v1564 = vadd.f32 %v307, %v1488
      %v1565 = vadd.f32 %v308, %v1490
      %v1566 = vadd.f32 %v309, %v1492
      %v1567 = vadd.f32 %v310, %v1494
      %v1568 = vadd.f32 %v311, %v1496
      %v1569 = vadd.f32 %v312, %v1498
      %v1570 = vadd.f32 %v313, %v1500
      %v1571 = vadd.f32 %v314, %v1502
      %v1572 = vadd.f32 %v315, %v1504
      %v1573 = vadd.f32 %v316, %v1506
      %v1574 = vadd.f32 %v317, %v1508
      %v1575 = vadd.f32 %v318, %v1510
      %v1576 = vadd.f32 %v319, %v1512
      %v1577 = vld [vmem:[%s5] sm:$0xff]
      %v1578 = vld [vmem:[%s5 + $0x8] sm:$0xff]
      %v1579 = vld [vmem:[%s5 + $0x10] sm:$0xff]
      %v1580 = vld [vmem:[%s5 + $0x18] sm:$0xff]
      %v1581 = vld [vmem:[%s5 + $0x20] sm:$0xff]
      %v1582 = vld [vmem:[%s5 + $0x28] sm:$0xff]
      %v1583 = vld [vmem:[%s5 + $0x30] sm:$0xff]
      %v1584 = vld [vmem:[%s5 + $0x38] sm:$0xff]
      %v1585 = vld [vmem:[%s5 + $0x40] sm:$0xff]
      %v1586 = vld [vmem:[%s5 + $0x48] sm:$0xff]
      %v1587 = vld [vmem:[%s5 + $0x50] sm:$0xff]
      %v1588 = vld [vmem:[%s5 + $0x58] sm:$0xff]
      %v1589 = vld [vmem:[%s5 + $0x60] sm:$0xff]
      %v1590 = vld [vmem:[%s5 + $0x68] sm:$0xff]
      %v1591 = vld [vmem:[%s5 + $0x70] sm:$0xff]
      %v1592 = vld [vmem:[%s5 + $0x78] sm:$0xff]
      %v1593 = vld [vmem:[%s5 + $0x80] sm:$0xff]
      %v1594 = vld [vmem:[%s5 + $0x88] sm:$0xff]
      %v1595 = vld [vmem:[%s5 + $0x90] sm:$0xff]
      %v1596 = vld [vmem:[%s5 + $0x98] sm:$0xff]
      %v1597 = vld [vmem:[%s5 + $0xa0] sm:$0xff]
      %v1598 = vld [vmem:[%s5 + $0xa8] sm:$0xff]
      %v1599 = vld [vmem:[%s5 + $0xb0] sm:$0xff]
      %v1600 = vld [vmem:[%s5 + $0xb8] sm:$0xff]
      %v1601 = vld [vmem:[%s5 + $0xc0] sm:$0xff]
      %v1602 = vld [vmem:[%s5 + $0xc8] sm:$0xff]
      %v1603 = vld [vmem:[%s5 + $0xd0] sm:$0xff]
      %v1604 = vld [vmem:[%s5 + $0xd8] sm:$0xff]
      %v1605 = vld [vmem:[%s5 + $0xe0] sm:$0xff]
      %v1606 = vld [vmem:[%s5 + $0xe8] sm:$0xff]
      %v1607 = vld [vmem:[%s5 + $0xf0] sm:$0xff]
      %v1608 = vld [vmem:[%s5 + $0xf8] sm:$0xff]
      %1641 = vrot.lane.b32.xlu0 %v1545, 96
      %v1642 = vpop.permute.xlu0 %1641
      %1643 = vrot.lane.b32.xlu0 %v1546, 96
      %v1644 = vpop.permute.xlu0 %1643
      %1645 = vrot.lane.b32.xlu0 %v1547, 96
      %v1646 = vpop.permute.xlu0 %1645
      %1647 = vrot.lane.b32.xlu0 %v1548, 96
      %v1648 = vpop.permute.xlu0 %1647
      %1649 = vrot.lane.b32.xlu0 %v1549, 96
      %v1650 = vpop.permute.xlu0 %1649
      %1651 = vrot.lane.b32.xlu0 %v1550, 96
      %v1652 = vpop.permute.xlu0 %1651
      %1653 = vrot.lane.b32.xlu0 %v1551, 96
      %v1654 = vpop.permute.xlu0 %1653
      %1655 = vrot.lane.b32.xlu0 %v1552, 96
      %v1656 = vpop.permute.xlu0 %1655
      %1657 = vrot.lane.b32.xlu0 %v1553, 96
      %v1658 = vpop.permute.xlu0 %1657
      %1659 = vrot.lane.b32.xlu0 %v1554, 96
      %v1660 = vpop.permute.xlu0 %1659
      %1661 = vrot.lane.b32.xlu0 %v1555, 96
      %v1662 = vpop.permute.xlu0 %1661
      %1663 = vrot.lane.b32.xlu0 %v1556, 96
      %v1664 = vpop.permute.xlu0 %1663
      %1665 = vrot.lane.b32.xlu0 %v1557, 96
      %v1666 = vpop.permute.xlu0 %1665
      %1667 = vrot.lane.b32.xlu0 %v1558, 96
      %v1668 = vpop.permute.xlu0 %1667
      %1669 = vrot.lane.b32.xlu0 %v1559, 96
      %v1670 = vpop.permute.xlu0 %1669
      %1671 = vrot.lane.b32.xlu0 %v1560, 96
      %v1672 = vpop.permute.xlu0 %1671
      %1673 = vrot.lane.b32.xlu0 %v1561, 96
      %v1674 = vpop.permute.xlu0 %1673
      %1675 = vrot.lane.b32.xlu0 %v1562, 96
      %v1676 = vpop.permute.xlu0 %1675
      %1677 = vrot.lane.b32.xlu0 %v1563, 96
      %v1678 = vpop.permute.xlu0 %1677
      %1679 = vrot.lane.b32.xlu0 %v1564, 96
      %v1680 = vpop.permute.xlu0 %1679
      %1681 = vrot.lane.b32.xlu0 %v1565, 96
      %v1682 = vpop.permute.xlu0 %1681
      %1683 = vrot.lane.b32.xlu0 %v1566, 96
      %v1684 = vpop.permute.xlu0 %1683
      %1685 = vrot.lane.b32.xlu0 %v1567, 96
      %v1686 = vpop.permute.xlu0 %1685
      %1687 = vrot.lane.b32.xlu0 %v1568, 96
      %v1688 = vpop.permute.xlu0 %1687
      %1689 = vrot.lane.b32.xlu0 %v1569, 96
      %v1690 = vpop.permute.xlu0 %1689
      %1691 = vrot.lane.b32.xlu0 %v1570, 96
      %v1692 = vpop.permute.xlu0 %1691
      %1693 = vrot.lane.b32.xlu0 %v1571, 96
      %v1694 = vpop.permute.xlu0 %1693
      %1695 = vrot.lane.b32.xlu0 %v1572, 96
      %v1696 = vpop.permute.xlu0 %1695
      %1697 = vrot.lane.b32.xlu0 %v1573, 96
      %v1698 = vpop.permute.xlu0 %1697
      %1699 = vrot.lane.b32.xlu0 %v1574, 96
      %v1700 = vpop.permute.xlu0 %1699
      %1701 = vrot.lane.b32.xlu0 %v1575, 96
      %v1702 = vpop.permute.xlu0 %1701
      %1703 = vrot.lane.b32.xlu0 %v1576, 96
      %v1704 = vpop.permute.xlu0 %1703
      %v1737 = vrot.slane %v1642, 7
      %v1738 = vrot.slane %v1644, 7
      %v1739 = vrot.slane %v1646, 7
      %v1740 = vrot.slane %v1648, 7
      %v1741 = vrot.slane %v1650, 7
      %v1742 = vrot.slane %v1652, 7
      %v1743 = vrot.slane %v1654, 7
      %v1744 = vrot.slane %v1656, 7
      %v1745 = vrot.slane %v1658, 7
      %v1746 = vrot.slane %v1660, 7
      %v1747 = vrot.slane %v1662, 7
      %v1748 = vrot.slane %v1664, 7
      %v1749 = vrot.slane %v1666, 7
      %v1750 = vrot.slane %v1668, 7
      %v1751 = vrot.slane %v1670, 7
      %v1752 = vrot.slane %v1672, 7
      %v1753 = vrot.slane %v1674, 7
      %v1754 = vrot.slane %v1676, 7
      %v1755 = vrot.slane %v1678, 7
      %v1756 = vrot.slane %v1680, 7
      %v1757 = vrot.slane %v1682, 7
      %v1758 = vrot.slane %v1684, 7
      %v1759 = vrot.slane %v1686, 7
      %v1760 = vrot.slane %v1688, 7
      %v1761 = vrot.slane %v1690, 7
      %v1762 = vrot.slane %v1692, 7
      %v1763 = vrot.slane %v1694, 7
      %v1764 = vrot.slane %v1696, 7
      %v1765 = vrot.slane %v1698, 7
      %v1766 = vrot.slane %v1700, 7
      %v1767 = vrot.slane %v1702, 7
      %v1768 = vrot.slane %v1704, 7
      %v1769 = vlaneseq
      %v1770 = vshrl.u32 %v1769, 7
      %vm1771 = vcmp.lt.s32.totalorder %v1770, 1
      %v1772 = vsel %vm1771, %v1767, %v1768
      %v1773 = vsel %vm1771, %v1766, %v1767
      %v1774 = vsel %vm1771, %v1765, %v1766
      %v1775 = vsel %vm1771, %v1764, %v1765
      %v1776 = vsel %vm1771, %v1763, %v1764
      %v1777 = vsel %vm1771, %v1762, %v1763
      %v1778 = vsel %vm1771, %v1761, %v1762
      %v1779 = vsel %vm1771, %v1760, %v1761
      %v1780 = vsel %vm1771, %v1759, %v1760
      %v1781 = vsel %vm1771, %v1758, %v1759
      %v1782 = vsel %vm1771, %v1757, %v1758
      %v1783 = vsel %vm1771, %v1756, %v1757
      %v1784 = vsel %vm1771, %v1755, %v1756
      %v1785 = vsel %vm1771, %v1754, %v1755
      %v1786 = vsel %vm1771, %v1753, %v1754
      %v1787 = vsel %vm1771, %v1752, %v1753
      %v1788 = vsel %vm1771, %v1751, %v1752
      %v1789 = vsel %vm1771, %v1750, %v1751
      %v1790 = vsel %vm1771, %v1749, %v1750
      %v1791 = vsel %vm1771, %v1748, %v1749
      %v1792 = vsel %vm1771, %v1747, %v1748
      %v1793 = vsel %vm1771, %v1746, %v1747
      %v1794 = vsel %vm1771, %v1745, %v1746
      %v1795 = vsel %vm1771, %v1744, %v1745
      %v1796 = vsel %vm1771, %v1743, %v1744
      %v1797 = vsel %vm1771, %v1742, %v1743
      %v1798 = vsel %vm1771, %v1741, %v1742
      %v1799 = vsel %vm1771, %v1740, %v1741
      %v1800 = vsel %vm1771, %v1739, %v1740
      %v1801 = vsel %vm1771, %v1738, %v1739
      %v1802 = vsel %vm1771, %v1737, %v1738
      %v1803 = vsel %vm1771, %v1768, %v1737
      %1805 = vset.pattern.permute.xlu0 0
      %1806 = vperm.xlu0 %1805, %v1577
      %v1807 = vpop.permute.xlu0 %1806
      %1810 = vset.pattern.permute.xlu0 0
      %1811 = vperm.xlu0 %1810, %v1578
      %v1812 = vpop.permute.xlu0 %1811
      %1815 = vset.pattern.permute.xlu0 0
      %1816 = vperm.xlu0 %1815, %v1579
      %v1817 = vpop.permute.xlu0 %1816
      %1820 = vset.pattern.permute.xlu0 0
      %1821 = vperm.xlu0 %1820, %v1580
      %v1822 = vpop.permute.xlu0 %1821
      %1825 = vset.pattern.permute.xlu0 0
      %1826 = vperm.xlu0 %1825, %v1581
      %v1827 = vpop.permute.xlu0 %1826
      %1830 = vset.pattern.permute.xlu0 0
      %1831 = vperm.xlu0 %1830, %v1582
      %v1832 = vpop.permute.xlu0 %1831
      %1835 = vset.pattern.permute.xlu0 0
      %1836 = vperm.xlu0 %1835, %v1583
      %v1837 = vpop.permute.xlu0 %1836
      %1840 = vset.pattern.permute.xlu0 0
      %1841 = vperm.xlu0 %1840, %v1584
      %v1842 = vpop.permute.xlu0 %1841
      %1845 = vset.pattern.permute.xlu0 0
      %1846 = vperm.xlu0 %1845, %v1585
      %v1847 = vpop.permute.xlu0 %1846
      %1850 = vset.pattern.permute.xlu0 0
      %1851 = vperm.xlu0 %1850, %v1586
      %v1852 = vpop.permute.xlu0 %1851
      %1855 = vset.pattern.permute.xlu0 0
      %1856 = vperm.xlu0 %1855, %v1587
      %v1857 = vpop.permute.xlu0 %1856
      %1860 = vset.pattern.permute.xlu0 0
      %1861 = vperm.xlu0 %1860, %v1588
      %v1862 = vpop.permute.xlu0 %1861
      %1865 = vset.pattern.permute.xlu0 0
      %1866 = vperm.xlu0 %1865, %v1589
      %v1867 = vpop.permute.xlu0 %1866
      %1870 = vset.pattern.permute.xlu0 0
      %1871 = vperm.xlu0 %1870, %v1590
      %v1872 = vpop.permute.xlu0 %1871
      %1875 = vset.pattern.permute.xlu0 0
      %1876 = vperm.xlu0 %1875, %v1591
      %v1877 = vpop.permute.xlu0 %1876
      %1880 = vset.pattern.permute.xlu0 0
      %1881 = vperm.xlu0 %1880, %v1592
      %v1882 = vpop.permute.xlu0 %1881
      %1885 = vset.pattern.permute.xlu0 0
      %1886 = vperm.xlu0 %1885, %v1593
      %v1887 = vpop.permute.xlu0 %1886
      %1890 = vset.pattern.permute.xlu0 0
      %1891 = vperm.xlu0 %1890, %v1594
      %v1892 = vpop.permute.xlu0 %1891
      %1895 = vset.pattern.permute.xlu0 0
      %1896 = vperm.xlu0 %1895, %v1595
      %v1897 = vpop.permute.xlu0 %1896
      %1900 = vset.pattern.permute.xlu0 0
      %1901 = vperm.xlu0 %1900, %v1596
      %v1902 = vpop.permute.xlu0 %1901
      %1905 = vset.pattern.permute.xlu0 0
      %1906 = vperm.xlu0 %1905, %v1597
      %v1907 = vpop.permute.xlu0 %1906
      %1910 = vset.pattern.permute.xlu0 0
      %1911 = vperm.xlu0 %1910, %v1598
      %v1912 = vpop.permute.xlu0 %1911
      %1915 = vset.pattern.permute.xlu0 0
      %1916 = vperm.xlu0 %1915, %v1599
      %v1917 = vpop.permute.xlu0 %1916
      %1920 = vset.pattern.permute.xlu0 0
      %1921 = vperm.xlu0 %1920, %v1600
      %v1922 = vpop.permute.xlu0 %1921
      %1925 = vset.pattern.permute.xlu0 0
      %1926 = vperm.xlu0 %1925, %v1601
      %v1927 = vpop.permute.xlu0 %1926
      %1930 = vset.pattern.permute.xlu0 0
      %1931 = vperm.xlu0 %1930, %v1602
      %v1932 = vpop.permute.xlu0 %1931
      %1935 = vset.pattern.permute.xlu0 0
      %1936 = vperm.xlu0 %1935, %v1603
      %v1937 = vpop.permute.xlu0 %1936
      %1940 = vset.pattern.permute.xlu0 0
      %1941 = vperm.xlu0 %1940, %v1604
      %v1942 = vpop.permute.xlu0 %1941
      %1945 = vset.pattern.permute.xlu0 0
      %1946 = vperm.xlu0 %1945, %v1605
      %v1947 = vpop.permute.xlu0 %1946
      %1950 = vset.pattern.permute.xlu0 0
      %1951 = vperm.xlu0 %1950, %v1606
      %v1952 = vpop.permute.xlu0 %1951
      %1955 = vset.pattern.permute.xlu0 0
      %1956 = vperm.xlu0 %1955, %v1607
      %v1957 = vpop.permute.xlu0 %1956
      %1960 = vset.pattern.permute.xlu0 0
      %1961 = vperm.xlu0 %1960, %v1608
      %v1962 = vpop.permute.xlu0 %1961
      %v1964 = vmul.f32 %v1773, %v1807
      %v1965 = vmul.f32 %v1772, %v1812
      %v1966 = vmul.f32 %v1803, %v1817
      %v1967 = vmul.f32 %v1802, %v1822
      %v1968 = vmul.f32 %v1801, %v1827
      %v1969 = vmul.f32 %v1800, %v1832
      %v1970 = vmul.f32 %v1799, %v1837
      %v1971 = vmul.f32 %v1798, %v1842
      %v1972 = vmul.f32 %v1797, %v1847
      %v1973 = vmul.f32 %v1796, %v1852
      %v1974 = vmul.f32 %v1795, %v1857
      %v1975 = vmul.f32 %v1794, %v1862
      %v1976 = vmul.f32 %v1793, %v1867
      %v1977 = vmul.f32 %v1792, %v1872
      %v1978 = vmul.f32 %v1791, %v1877
      %v1979 = vmul.f32 %v1790, %v1882
      %v1980 = vmul.f32 %v1789, %v1887
      %v1981 = vmul.f32 %v1788, %v1892
      %v1982 = vmul.f32 %v1787, %v1897
      %v1983 = vmul.f32 %v1786, %v1902
      %v1984 = vmul.f32 %v1785, %v1907
      %v1985 = vmul.f32 %v1784, %v1912
      %v1986 = vmul.f32 %v1783, %v1917
      %v1987 = vmul.f32 %v1782, %v1922
      %v1988 = vmul.f32 %v1781, %v1927
      %v1989 = vmul.f32 %v1780, %v1932
      %v1990 = vmul.f32 %v1779, %v1937
      %v1991 = vmul.f32 %v1778, %v1942
      %v1992 = vmul.f32 %v1777, %v1947
      %v1993 = vmul.f32 %v1776, %v1952
      %v1994 = vmul.f32 %v1775, %v1957
      %v1995 = vmul.f32 %v1774, %v1962
      %v1996 = vpack.c.bf16 %v1965, %v1964
      %v1997 = vpack.c.bf16 %v1967, %v1966
      %v1998 = vpack.c.bf16 %v1969, %v1968
      %v1999 = vpack.c.bf16 %v1971, %v1970
      %v2000 = vpack.c.bf16 %v1973, %v1972
      %v2001 = vpack.c.bf16 %v1975, %v1974
      %v2002 = vpack.c.bf16 %v1977, %v1976
      %v2003 = vpack.c.bf16 %v1979, %v1978
      %v2004 = vpack.c.bf16 %v1981, %v1980
      %v2005 = vpack.c.bf16 %v1983, %v1982
      %v2006 = vpack.c.bf16 %v1985, %v1984
      %v2007 = vpack.c.bf16 %v1987, %v1986
      %v2008 = vpack.c.bf16 %v1989, %v1988
      %v2009 = vpack.c.bf16 %v1991, %v1990
      %v2010 = vpack.c.bf16 %v1993, %v1992
      %v2011 = vpack.c.bf16 %v1995, %v1994
      %2012 = vset.pattern.permute.xlu0 1
      %2013 = vperm.xlu0 %2012, %v1577
      %v2014 = vpop.permute.xlu0 %2013
      %2016 = vset.pattern.permute.xlu0 1
      %2017 = vperm.xlu0 %2016, %v1578
      %v2018 = vpop.permute.xlu0 %2017
      %2020 = vset.pattern.permute.xlu0 1
      %2021 = vperm.xlu0 %2020, %v1579
      %v2022 = vpop.permute.xlu0 %2021
      %2024 = vset.pattern.permute.xlu0 1
      %2025 = vperm.xlu0 %2024, %v1580
      %v2026 = vpop.permute.xlu0 %2025
      %2028 = vset.pattern.permute.xlu0 1
      %2029 = vperm.xlu0 %2028, %v1581
      %v2030 = vpop.permute.xlu0 %2029
      %2032 = vset.pattern.permute.xlu0 1
      %2033 = vperm.xlu0 %2032, %v1582
      %v2034 = vpop.permute.xlu0 %2033
      %2036 = vset.pattern.permute.xlu0 1
      %2037 = vperm.xlu0 %2036, %v1583
      %v2038 = vpop.permute.xlu0 %2037
      %2040 = vset.pattern.permute.xlu0 1
      %2041 = vperm.xlu0 %2040, %v1584
      %v2042 = vpop.permute.xlu0 %2041
      %2044 = vset.pattern.permute.xlu0 1
      %2045 = vperm.xlu0 %2044, %v1585
      %v2046 = vpop.permute.xlu0 %2045
      %2048 = vset.pattern.permute.xlu0 1
      %2049 = vperm.xlu0 %2048, %v1586
      %v2050 = vpop.permute.xlu0 %2049
      %2052 = vset.pattern.permute.xlu0 1
      %2053 = vperm.xlu0 %2052, %v1587
      %v2054 = vpop.permute.xlu0 %2053
      %2056 = vset.pattern.permute.xlu0 1
      %2057 = vperm.xlu0 %2056, %v1588
      %v2058 = vpop.permute.xlu0 %2057
      %2060 = vset.pattern.permute.xlu0 1
      %2061 = vperm.xlu0 %2060, %v1589
      %v2062 = vpop.permute.xlu0 %2061
      %2064 = vset.pattern.permute.xlu0 1
      %2065 = vperm.xlu0 %2064, %v1590
      %v2066 = vpop.permute.xlu0 %2065
      %2068 = vset.pattern.permute.xlu0 1
      %2069 = vperm.xlu0 %2068, %v1591
      %v2070 = vpop.permute.xlu0 %2069
      %2072 = vset.pattern.permute.xlu0 1
      %2073 = vperm.xlu0 %2072, %v1592
      %v2074 = vpop.permute.xlu0 %2073
      %2076 = vset.pattern.permute.xlu0 1
      %2077 = vperm.xlu0 %2076, %v1593
      %v2078 = vpop.permute.xlu0 %2077
      %2080 = vset.pattern.permute.xlu0 1
      %2081 = vperm.xlu0 %2080, %v1594
      %v2082 = vpop.permute.xlu0 %2081
      %2084 = vset.pattern.permute.xlu0 1
      %2085 = vperm.xlu0 %2084, %v1595
      %v2086 = vpop.permute.xlu0 %2085
      %2088 = vset.pattern.permute.xlu0 1
      %2089 = vperm.xlu0 %2088, %v1596
      %v2090 = vpop.permute.xlu0 %2089
      %2092 = vset.pattern.permute.xlu0 1
      %2093 = vperm.xlu0 %2092, %v1597
      %v2094 = vpop.permute.xlu0 %2093
      %2096 = vset.pattern.permute.xlu0 1
      %2097 = vperm.xlu0 %2096, %v1598
      %v2098 = vpop.permute.xlu0 %2097
      %2100 = vset.pattern.permute.xlu0 1
      %2101 = vperm.xlu0 %2100, %v1599
      %v2102 = vpop.permute.xlu0 %2101
      %2104 = vset.pattern.permute.xlu0 1
      %2105 = vperm.xlu0 %2104, %v1600
      %v2106 = vpop.permute.xlu0 %2105
      %2108 = vset.pattern.permute.xlu0 1
      %2109 = vperm.xlu0 %2108, %v1601
      %v2110 = vpop.permute.xlu0 %2109
      %2112 = vset.pattern.permute.xlu0 1
      %2113 = vperm.xlu0 %2112, %v1602
      %v2114 = vpop.permute.xlu0 %2113
      %2116 = vset.pattern.permute.xlu0 1
      %2117 = vperm.xlu0 %2116, %v1603
      %v2118 = vpop.permute.xlu0 %2117
      %2120 = vset.pattern.permute.xlu0 1
      %2121 = vperm.xlu0 %2120, %v1604
      %v2122 = vpop.permute.xlu0 %2121
      %2124 = vset.pattern.permute.xlu0 1
      %2125 = vperm.xlu0 %2124, %v1605
      %v2126 = vpop.permute.xlu0 %2125
      %2128 = vset.pattern.permute.xlu0 1
      %2129 = vperm.xlu0 %2128, %v1606
      %v2130 = vpop.permute.xlu0 %2129
      %2132 = vset.pattern.permute.xlu0 1
      %2133 = vperm.xlu0 %2132, %v1607
      %v2134 = vpop.permute.xlu0 %2133
      %2136 = vset.pattern.permute.xlu0 1
      %2137 = vperm.xlu0 %2136, %v1608
      %v2138 = vpop.permute.xlu0 %2137
      %v2140 = vmul.f32 %v1702, %v2014
      %v2141 = vmul.f32 %v1704, %v2018
      %v2142 = vmul.f32 %v1642, %v2022
      %v2143 = vmul.f32 %v1644, %v2026
      %v2144 = vmul.f32 %v1646, %v2030
      %v2145 = vmul.f32 %v1648, %v2034
      %v2146 = vmul.f32 %v1650, %v2038
      %v2147 = vmul.f32 %v1652, %v2042
      %v2148 = vmul.f32 %v1654, %v2046
      %v2149 = vmul.f32 %v1656, %v2050
      %v2150 = vmul.f32 %v1658, %v2054
      %v2151 = vmul.f32 %v1660, %v2058
      %v2152 = vmul.f32 %v1662, %v2062
      %v2153 = vmul.f32 %v1664, %v2066
      %v2154 = vmul.f32 %v1666, %v2070
      %v2155 = vmul.f32 %v1668, %v2074
      %v2156 = vmul.f32 %v1670, %v2078
      %v2157 = vmul.f32 %v1672, %v2082
      %v2158 = vmul.f32 %v1674, %v2086
      %v2159 = vmul.f32 %v1676, %v2090
      %v2160 = vmul.f32 %v1678, %v2094
      %v2161 = vmul.f32 %v1680, %v2098
      %v2162 = vmul.f32 %v1682, %v2102
      %v2163 = vmul.f32 %v1684, %v2106
      %v2164 = vmul.f32 %v1686, %v2110
      %v2165 = vmul.f32 %v1688, %v2114
      %v2166 = vmul.f32 %v1690, %v2118
      %v2167 = vmul.f32 %v1692, %v2122
      %v2168 = vmul.f32 %v1694, %v2126
      %v2169 = vmul.f32 %v1696, %v2130
      %v2170 = vmul.f32 %v1698, %v2134
      %v2171 = vmul.f32 %v1700, %v2138
      %v2172 = vpack.c.bf16 %v2141, %v2140
      %v2173 = vpack.c.bf16 %v2143, %v2142
      %v2174 = vpack.c.bf16 %v2145, %v2144
      %v2175 = vpack.c.bf16 %v2147, %v2146
      %v2176 = vpack.c.bf16 %v2149, %v2148
      %v2177 = vpack.c.bf16 %v2151, %v2150
      %v2178 = vpack.c.bf16 %v2153, %v2152
      %v2179 = vpack.c.bf16 %v2155, %v2154
      %v2180 = vpack.c.bf16 %v2157, %v2156
      %v2181 = vpack.c.bf16 %v2159, %v2158
      %v2182 = vpack.c.bf16 %v2161, %v2160
      %v2183 = vpack.c.bf16 %v2163, %v2162
      %v2184 = vpack.c.bf16 %v2165, %v2164
      %v2185 = vpack.c.bf16 %v2167, %v2166
      %v2186 = vpack.c.bf16 %v2169, %v2168
      %v2187 = vpack.c.bf16 %v2171, %v2170
      %v2188 = vrot.slane %v1642, 1
      %v2189 = vrot.slane %v1644, 1
      %v2190 = vrot.slane %v1646, 1
      %v2191 = vrot.slane %v1648, 1
      %v2192 = vrot.slane %v1650, 1
      %v2193 = vrot.slane %v1652, 1
      %v2194 = vrot.slane %v1654, 1
      %v2195 = vrot.slane %v1656, 1
      %v2196 = vrot.slane %v1658, 1
      %v2197 = vrot.slane %v1660, 1
      %v2198 = vrot.slane %v1662, 1
      %v2199 = vrot.slane %v1664, 1
      %v2200 = vrot.slane %v1666, 1
      %v2201 = vrot.slane %v1668, 1
      %v2202 = vrot.slane %v1670, 1
      %v2203 = vrot.slane %v1672, 1
      %v2204 = vrot.slane %v1674, 1
      %v2205 = vrot.slane %v1676, 1
      %v2206 = vrot.slane %v1678, 1
      %v2207 = vrot.slane %v1680, 1
      %v2208 = vrot.slane %v1682, 1
      %v2209 = vrot.slane %v1684, 1
      %v2210 = vrot.slane %v1686, 1
      %v2211 = vrot.slane %v1688, 1
      %v2212 = vrot.slane %v1690, 1
      %v2213 = vrot.slane %v1692, 1
      %v2214 = vrot.slane %v1694, 1
      %v2215 = vrot.slane %v1696, 1
      %v2216 = vrot.slane %v1698, 1
      %v2217 = vrot.slane %v1700, 1
      %v2218 = vrot.slane %v1702, 1
      %v2219 = vrot.slane %v1704, 1
      %vm2220 = vcmp.lt.s32.totalorder %v1770, 7
      %v2221 = vsel %vm2220, %v2218, %v2219
      %v2222 = vsel %vm2220, %v2217, %v2218
      %v2223 = vsel %vm2220, %v2216, %v2217
      %v2224 = vsel %vm2220, %v2215, %v2216
      %v2225 = vsel %vm2220, %v2214, %v2215
      %v2226 = vsel %vm2220, %v2213, %v2214
      %v2227 = vsel %vm2220, %v2212, %v2213
      %v2228 = vsel %vm2220, %v2211, %v2212
      %v2229 = vsel %vm2220, %v2210, %v2211
      %v2230 = vsel %vm2220, %v2209, %v2210
      %v2231 = vsel %vm2220, %v2208, %v2209
      %v2232 = vsel %vm2220, %v2207, %v2208
      %v2233 = vsel %vm2220, %v2206, %v2207
      %v2234 = vsel %vm2220, %v2205, %v2206
      %v2235 = vsel %vm2220, %v2204, %v2205
      %v2236 = vsel %vm2220, %v2203, %v2204
      %v2237 = vsel %vm2220, %v2202, %v2203
      %v2238 = vsel %vm2220, %v2201, %v2202
      %v2239 = vsel %vm2220, %v2200, %v2201
      %v2240 = vsel %vm2220, %v2199, %v2200
      %v2241 = vsel %vm2220, %v2198, %v2199
      %v2242 = vsel %vm2220, %v2197, %v2198
      %v2243 = vsel %vm2220, %v2196, %v2197
      %v2244 = vsel %vm2220, %v2195, %v2196
      %v2245 = vsel %vm2220, %v2194, %v2195
      %v2246 = vsel %vm2220, %v2193, %v2194
      %v2247 = vsel %vm2220, %v2192, %v2193
      %v2248 = vsel %vm2220, %v2191, %v2192
      %v2249 = vsel %vm2220, %v2190, %v2191
      %v2250 = vsel %vm2220, %v2189, %v2190
      %v2251 = vsel %vm2220, %v2188, %v2189
      %v2252 = vsel %vm2220, %v2219, %v2188
      %2253 = vset.pattern.permute.xlu0 2
      %2254 = vperm.xlu0 %2253, %v1577
      %v2255 = vpop.permute.xlu0 %2254
      %2257 = vset.pattern.permute.xlu0 2
      %2258 = vperm.xlu0 %2257, %v1578
      %v2259 = vpop.permute.xlu0 %2258
      %2261 = vset.pattern.permute.xlu0 2
      %2262 = vperm.xlu0 %2261, %v1579
      %v2263 = vpop.permute.xlu0 %2262
      %2265 = vset.pattern.permute.xlu0 2
      %2266 = vperm.xlu0 %2265, %v1580
      %v2267 = vpop.permute.xlu0 %2266
      %2269 = vset.pattern.permute.xlu0 2
      %2270 = vperm.xlu0 %2269, %v1581
      %v2271 = vpop.permute.xlu0 %2270
      %2273 = vset.pattern.permute.xlu0 2
      %2274 = vperm.xlu0 %2273, %v1582
      %v2275 = vpop.permute.xlu0 %2274
      %2277 = vset.pattern.permute.xlu0 2
      %2278 = vperm.xlu0 %2277, %v1583
      %v2279 = vpop.permute.xlu0 %2278
      %2281 = vset.pattern.permute.xlu0 2
      %2282 = vperm.xlu0 %2281, %v1584
      %v2283 = vpop.permute.xlu0 %2282
      %2285 = vset.pattern.permute.xlu0 2
      %2286 = vperm.xlu0 %2285, %v1585
      %v2287 = vpop.permute.xlu0 %2286
      %2289 = vset.pattern.permute.xlu0 2
      %2290 = vperm.xlu0 %2289, %v1586
      %v2291 = vpop.permute.xlu0 %2290
      %2293 = vset.pattern.permute.xlu0 2
      %2294 = vperm.xlu0 %2293, %v1587
      %v2295 = vpop.permute.xlu0 %2294
      %2297 = vset.pattern.permute.xlu0 2
      %2298 = vperm.xlu0 %2297, %v1588
      %v2299 = vpop.permute.xlu0 %2298
      %2301 = vset.pattern.permute.xlu0 2
      %2302 = vperm.xlu0 %2301, %v1589
      %v2303 = vpop.permute.xlu0 %2302
      %2305 = vset.pattern.permute.xlu0 2
      %2306 = vperm.xlu0 %2305, %v1590
      %v2307 = vpop.permute.xlu0 %2306
      %2309 = vset.pattern.permute.xlu0 2
      %2310 = vperm.xlu0 %2309, %v1591
      %v2311 = vpop.permute.xlu0 %2310
      %2313 = vset.pattern.permute.xlu0 2
      %2314 = vperm.xlu0 %2313, %v1592
      %v2315 = vpop.permute.xlu0 %2314
      %2317 = vset.pattern.permute.xlu0 2
      %2318 = vperm.xlu0 %2317, %v1593
      %v2319 = vpop.permute.xlu0 %2318
      %2321 = vset.pattern.permute.xlu0 2
      %2322 = vperm.xlu0 %2321, %v1594
      %v2323 = vpop.permute.xlu0 %2322
      %2325 = vset.pattern.permute.xlu0 2
      %2326 = vperm.xlu0 %2325, %v1595
      %v2327 = vpop.permute.xlu0 %2326
      %2329 = vset.pattern.permute.xlu0 2
      %2330 = vperm.xlu0 %2329, %v1596
      %v2331 = vpop.permute.xlu0 %2330
      %2333 = vset.pattern.permute.xlu0 2
      %2334 = vperm.xlu0 %2333, %v1597
      %v2335 = vpop.permute.xlu0 %2334
      %2337 = vset.pattern.permute.xlu0 2
      %2338 = vperm.xlu0 %2337, %v1598
      %v2339 = vpop.permute.xlu0 %2338
      %2341 = vset.pattern.permute.xlu0 2
      %2342 = vperm.xlu0 %2341, %v1599
      %v2343 = vpop.permute.xlu0 %2342
      %2345 = vset.pattern.permute.xlu0 2
      %2346 = vperm.xlu0 %2345, %v1600
      %v2347 = vpop.permute.xlu0 %2346
      %2349 = vset.pattern.permute.xlu0 2
      %2350 = vperm.xlu0 %2349, %v1601
      %v2351 = vpop.permute.xlu0 %2350
      %2353 = vset.pattern.permute.xlu0 2
      %2354 = vperm.xlu0 %2353, %v1602
      %v2355 = vpop.permute.xlu0 %2354
      %2357 = vset.pattern.permute.xlu0 2
      %2358 = vperm.xlu0 %2357, %v1603
      %v2359 = vpop.permute.xlu0 %2358
      %2361 = vset.pattern.permute.xlu0 2
      %2362 = vperm.xlu0 %2361, %v1604
      %v2363 = vpop.permute.xlu0 %2362
      %2365 = vset.pattern.permute.xlu0 2
      %2366 = vperm.xlu0 %2365, %v1605
      %v2367 = vpop.permute.xlu0 %2366
      %2369 = vset.pattern.permute.xlu0 2
      %2370 = vperm.xlu0 %2369, %v1606
      %v2371 = vpop.permute.xlu0 %2370
      %2373 = vset.pattern.permute.xlu0 2
      %2374 = vperm.xlu0 %2373, %v1607
      %v2375 = vpop.permute.xlu0 %2374
      %2377 = vset.pattern.permute.xlu0 2
      %2378 = vperm.xlu0 %2377, %v1608
      %v2379 = vpop.permute.xlu0 %2378
      %v2381 = vmul.f32 %v2221, %v2255
      %v2382 = vmul.f32 %v2252, %v2259
      %v2383 = vmul.f32 %v2251, %v2263
      %v2384 = vmul.f32 %v2250, %v2267
      %v2385 = vmul.f32 %v2249, %v2271
      %v2386 = vmul.f32 %v2248, %v2275
      %v2387 = vmul.f32 %v2247, %v2279
      %v2388 = vmul.f32 %v2246, %v2283
      %v2389 = vmul.f32 %v2245, %v2287
      %v2390 = vmul.f32 %v2244, %v2291
      %v2391 = vmul.f32 %v2243, %v2295
      %v2392 = vmul.f32 %v2242, %v2299
      %v2393 = vmul.f32 %v2241, %v2303
      %v2394 = vmul.f32 %v2240, %v2307
      %v2395 = vmul.f32 %v2239, %v2311
      %v2396 = vmul.f32 %v2238, %v2315
      %v2397 = vmul.f32 %v2237, %v2319
      %v2398 = vmul.f32 %v2236, %v2323
      %v2399 = vmul.f32 %v2235, %v2327
      %v2400 = vmul.f32 %v2234, %v2331
      %v2401 = vmul.f32 %v2233, %v2335
      %v2402 = vmul.f32 %v2232, %v2339
      %v2403 = vmul.f32 %v2231, %v2343
      %v2404 = vmul.f32 %v2230, %v2347
      %v2405 = vmul.f32 %v2229, %v2351
      %v2406 = vmul.f32 %v2228, %v2355
      %v2407 = vmul.f32 %v2227, %v2359
      %v2408 = vmul.f32 %v2226, %v2363
      %v2409 = vmul.f32 %v2225, %v2367
      %v2410 = vmul.f32 %v2224, %v2371
      %v2411 = vmul.f32 %v2223, %v2375
      %v2412 = vmul.f32 %v2222, %v2379
      %v2413 = vpack.c.bf16 %v2382, %v2381
      %v2414 = vpack.c.bf16 %v2384, %v2383
      %v2415 = vpack.c.bf16 %v2386, %v2385
      %v2416 = vpack.c.bf16 %v2388, %v2387
      %v2417 = vpack.c.bf16 %v2390, %v2389
      %v2418 = vpack.c.bf16 %v2392, %v2391
      %v2419 = vpack.c.bf16 %v2394, %v2393
      %v2420 = vpack.c.bf16 %v2396, %v2395
      %v2421 = vpack.c.bf16 %v2398, %v2397
      %v2422 = vpack.c.bf16 %v2400, %v2399
      %v2423 = vpack.c.bf16 %v2402, %v2401
      %v2424 = vpack.c.bf16 %v2404, %v2403
      %v2425 = vpack.c.bf16 %v2406, %v2405
      %v2426 = vpack.c.bf16 %v2408, %v2407
      %v2427 = vpack.c.bf16 %v2410, %v2409
      %v2428 = vpack.c.bf16 %v2412, %v2411
      %2429 = vset.pattern.permute.xlu0 3
      %2430 = vperm.xlu0 %2429, %v1577
      %v2431 = vpop.permute.xlu0 %2430
      %2433 = vset.pattern.permute.xlu0 3
      %2434 = vperm.xlu0 %2433, %v1578
      %v2435 = vpop.permute.xlu0 %2434
      %2437 = vset.pattern.permute.xlu0 3
      %2438 = vperm.xlu0 %2437, %v1579
      %v2439 = vpop.permute.xlu0 %2438
      %2441 = vset.pattern.permute.xlu0 3
      %2442 = vperm.xlu0 %2441, %v1580
      %v2443 = vpop.permute.xlu0 %2442
      %2445 = vset.pattern.permute.xlu0 3
      %2446 = vperm.xlu0 %2445, %v1581
      %v2447 = vpop.permute.xlu0 %2446
      %2449 = vset.pattern.permute.xlu0 3
      %2450 = vperm.xlu0 %2449, %v1582
      %v2451 = vpop.permute.xlu0 %2450
      %2453 = vset.pattern.permute.xlu0 3
      %2454 = vperm.xlu0 %2453, %v1583
      %v2455 = vpop.permute.xlu0 %2454
      %2457 = vset.pattern.permute.xlu0 3
      %2458 = vperm.xlu0 %2457, %v1584
      %v2459 = vpop.permute.xlu0 %2458
      %2461 = vset.pattern.permute.xlu0 3
      %2462 = vperm.xlu0 %2461, %v1585
      %v2463 = vpop.permute.xlu0 %2462
      %2465 = vset.pattern.permute.xlu0 3
      %2466 = vperm.xlu0 %2465, %v1586
      %v2467 = vpop.permute.xlu0 %2466
      %2469 = vset.pattern.permute.xlu0 3
      %2470 = vperm.xlu0 %2469, %v1587
      %v2471 = vpop.permute.xlu0 %2470
      %2473 = vset.pattern.permute.xlu0 3
      %2474 = vperm.xlu0 %2473, %v1588
      %v2475 = vpop.permute.xlu0 %2474
      %2477 = vset.pattern.permute.xlu0 3
      %2478 = vperm.xlu0 %2477, %v1589
      %v2479 = vpop.permute.xlu0 %2478
      %2481 = vset.pattern.permute.xlu0 3
      %2482 = vperm.xlu0 %2481, %v1590
      %v2483 = vpop.permute.xlu0 %2482
      %2485 = vset.pattern.permute.xlu0 3
      %2486 = vperm.xlu0 %2485, %v1591
      %v2487 = vpop.permute.xlu0 %2486
      %2489 = vset.pattern.permute.xlu0 3
      %2490 = vperm.xlu0 %2489, %v1592
      %v2491 = vpop.permute.xlu0 %2490
      %2493 = vset.pattern.permute.xlu0 3
      %2494 = vperm.xlu0 %2493, %v1593
      %v2495 = vpop.permute.xlu0 %2494
      %2497 = vset.pattern.permute.xlu0 3
      %2498 = vperm.xlu0 %2497, %v1594
      %v2499 = vpop.permute.xlu0 %2498
      %2501 = vset.pattern.permute.xlu0 3
      %2502 = vperm.xlu0 %2501, %v1595
      %v2503 = vpop.permute.xlu0 %2502
      %2505 = vset.pattern.permute.xlu0 3
      %2506 = vperm.xlu0 %2505, %v1596
      %v2507 = vpop.permute.xlu0 %2506
      %2509 = vset.pattern.permute.xlu0 3
      %2510 = vperm.xlu0 %2509, %v1597
      %v2511 = vpop.permute.xlu0 %2510
      %2513 = vset.pattern.permute.xlu0 3
      %2514 = vperm.xlu0 %2513, %v1598
      %v2515 = vpop.permute.xlu0 %2514
      %2517 = vset.pattern.permute.xlu0 3
      %2518 = vperm.xlu0 %2517, %v1599
      %v2519 = vpop.permute.xlu0 %2518
      %2521 = vset.pattern.permute.xlu0 3
      %2522 = vperm.xlu0 %2521, %v1600
      %v2523 = vpop.permute.xlu0 %2522
      %2525 = vset.pattern.permute.xlu0 3
      %2526 = vperm.xlu0 %2525, %v1601
      %v2527 = vpop.permute.xlu0 %2526
      %2529 = vset.pattern.permute.xlu0 3
      %2530 = vperm.xlu0 %2529, %v1602
      %v2531 = vpop.permute.xlu0 %2530
      %2533 = vset.pattern.permute.xlu0 3
      %2534 = vperm.xlu0 %2533, %v1603
      %v2535 = vpop.permute.xlu0 %2534
      %2537 = vset.pattern.permute.xlu0 3
      %2538 = vperm.xlu0 %2537, %v1604
      %v2539 = vpop.permute.xlu0 %2538
      %2541 = vset.pattern.permute.xlu0 3
      %2542 = vperm.xlu0 %2541, %v1605
      %v2543 = vpop.permute.xlu0 %2542
      %2545 = vset.pattern.permute.xlu0 3
      %2546 = vperm.xlu0 %2545, %v1606
      %v2547 = vpop.permute.xlu0 %2546
      %2549 = vset.pattern.permute.xlu0 3
      %2550 = vperm.xlu0 %2549, %v1607
      %v2551 = vpop.permute.xlu0 %2550
      %2553 = vset.pattern.permute.xlu0 3
      %2554 = vperm.xlu0 %2553, %v1608
      %v2555 = vpop.permute.xlu0 %2554
      %v2557 = vmul.f32 %v1803, %v2431
      %v2558 = vmul.f32 %v1802, %v2435
      %v2559 = vmul.f32 %v1801, %v2439
      %v2560 = vmul.f32 %v1800, %v2443
      %v2561 = vmul.f32 %v1799, %v2447
      %v2562 = vmul.f32 %v1798, %v2451
      %v2563 = vmul.f32 %v1797, %v2455
      %v2564 = vmul.f32 %v1796, %v2459
      %v2565 = vmul.f32 %v1795, %v2463
      %v2566 = vmul.f32 %v1794, %v2467
      %v2567 = vmul.f32 %v1793, %v2471
      %v2568 = vmul.f32 %v1792, %v2475
      %v2569 = vmul.f32 %v1791, %v2479
      %v2570 = vmul.f32 %v1790, %v2483
      %v2571 = vmul.f32 %v1789, %v2487
      %v2572 = vmul.f32 %v1788, %v2491
      %v2573 = vmul.f32 %v1787, %v2495
      %v2574 = vmul.f32 %v1786, %v2499
      %v2575 = vmul.f32 %v1785, %v2503
      %v2576 = vmul.f32 %v1784, %v2507
      %v2577 = vmul.f32 %v1783, %v2511
      %v2578 = vmul.f32 %v1782, %v2515
      %v2579 = vmul.f32 %v1781, %v2519
      %v2580 = vmul.f32 %v1780, %v2523
      %v2581 = vmul.f32 %v1779, %v2527
      %v2582 = vmul.f32 %v1778, %v2531
      %v2583 = vmul.f32 %v1777, %v2535
      %v2584 = vmul.f32 %v1776, %v2539
      %v2585 = vmul.f32 %v1775, %v2543
      %v2586 = vmul.f32 %v1774, %v2547
      %v2587 = vmul.f32 %v1773, %v2551
      %v2588 = vmul.f32 %v1772, %v2555
      %v2589 = vpack.c.bf16 %v2558, %v2557
      %v2590 = vpack.c.bf16 %v2560, %v2559
      %v2591 = vpack.c.bf16 %v2562, %v2561
      %v2592 = vpack.c.bf16 %v2564, %v2563
      %v2593 = vpack.c.bf16 %v2566, %v2565
      %v2594 = vpack.c.bf16 %v2568, %v2567
      %v2595 = vpack.c.bf16 %v2570, %v2569
      %v2596 = vpack.c.bf16 %v2572, %v2571
      %v2597 = vpack.c.bf16 %v2574, %v2573
      %v2598 = vpack.c.bf16 %v2576, %v2575
      %v2599 = vpack.c.bf16 %v2578, %v2577
      %v2600 = vpack.c.bf16 %v2580, %v2579
      %v2601 = vpack.c.bf16 %v2582, %v2581
      %v2602 = vpack.c.bf16 %v2584, %v2583
      %v2603 = vpack.c.bf16 %v2586, %v2585
      %v2604 = vpack.c.bf16 %v2588, %v2587
      %v2605 = vpack.c.bf16 %v1546, %v1545
      %v2606 = vpack.c.bf16 %v1548, %v1547
      %v2607 = vpack.c.bf16 %v1550, %v1549
      %v2608 = vpack.c.bf16 %v1552, %v1551
      %v2609 = vpack.c.bf16 %v1554, %v1553
      %v2610 = vpack.c.bf16 %v1556, %v1555
      %v2611 = vpack.c.bf16 %v1558, %v1557
      %v2612 = vpack.c.bf16 %v1560, %v1559
      %v2613 = vpack.c.bf16 %v1562, %v1561
      %v2614 = vpack.c.bf16 %v1564, %v1563
      %v2615 = vpack.c.bf16 %v1566, %v1565
      %v2616 = vpack.c.bf16 %v1568, %v1567
      %v2617 = vpack.c.bf16 %v1570, %v1569
      %v2618 = vpack.c.bf16 %v1572, %v1571
      %v2619 = vpack.c.bf16 %v1574, %v1573
      %v2620 = vpack.c.bf16 %v1576, %v1575
      %2621 = vset.pattern.permute.xlu0 5
      %2622 = vperm.xlu0 %2621, %v1577
      %v2623 = vpop.permute.xlu0 %2622
      %2625 = vset.pattern.permute.xlu0 5
      %2626 = vperm.xlu0 %2625, %v1578
      %v2627 = vpop.permute.xlu0 %2626
      %2629 = vset.pattern.permute.xlu0 5
      %2630 = vperm.xlu0 %2629, %v1579
      %v2631 = vpop.permute.xlu0 %2630
      %2633 = vset.pattern.permute.xlu0 5
      %2634 = vperm.xlu0 %2633, %v1580
      %v2635 = vpop.permute.xlu0 %2634
      %2637 = vset.pattern.permute.xlu0 5
      %2638 = vperm.xlu0 %2637, %v1581
      %v2639 = vpop.permute.xlu0 %2638
      %2641 = vset.pattern.permute.xlu0 5
      %2642 = vperm.xlu0 %2641, %v1582
      %v2643 = vpop.permute.xlu0 %2642
      %2645 = vset.pattern.permute.xlu0 5
      %2646 = vperm.xlu0 %2645, %v1583
      %v2647 = vpop.permute.xlu0 %2646
      %2649 = vset.pattern.permute.xlu0 5
      %2650 = vperm.xlu0 %2649, %v1584
      %v2651 = vpop.permute.xlu0 %2650
      %2653 = vset.pattern.permute.xlu0 5
      %2654 = vperm.xlu0 %2653, %v1585
      %v2655 = vpop.permute.xlu0 %2654
      %2657 = vset.pattern.permute.xlu0 5
      %2658 = vperm.xlu0 %2657, %v1586
      %v2659 = vpop.permute.xlu0 %2658
      %2661 = vset.pattern.permute.xlu0 5
      %2662 = vperm.xlu0 %2661, %v1587
      %v2663 = vpop.permute.xlu0 %2662
      %2665 = vset.pattern.permute.xlu0 5
      %2666 = vperm.xlu0 %2665, %v1588
      %v2667 = vpop.permute.xlu0 %2666
      %2669 = vset.pattern.permute.xlu0 5
      %2670 = vperm.xlu0 %2669, %v1589
      %v2671 = vpop.permute.xlu0 %2670
      %2673 = vset.pattern.permute.xlu0 5
      %2674 = vperm.xlu0 %2673, %v1590
      %v2675 = vpop.permute.xlu0 %2674
      %2677 = vset.pattern.permute.xlu0 5
      %2678 = vperm.xlu0 %2677, %v1591
      %v2679 = vpop.permute.xlu0 %2678
      %2681 = vset.pattern.permute.xlu0 5
      %2682 = vperm.xlu0 %2681, %v1592
      %v2683 = vpop.permute.xlu0 %2682
      %2685 = vset.pattern.permute.xlu0 5
      %2686 = vperm.xlu0 %2685, %v1593
      %v2687 = vpop.permute.xlu0 %2686
      %2689 = vset.pattern.permute.xlu0 5
      %2690 = vperm.xlu0 %2689, %v1594
      %v2691 = vpop.permute.xlu0 %2690
      %2693 = vset.pattern.permute.xlu0 5
      %2694 = vperm.xlu0 %2693, %v1595
      %v2695 = vpop.permute.xlu0 %2694
      %2697 = vset.pattern.permute.xlu0 5
      %2698 = vperm.xlu0 %2697, %v1596
      %v2699 = vpop.permute.xlu0 %2698
      %2701 = vset.pattern.permute.xlu0 5
      %2702 = vperm.xlu0 %2701, %v1597
      %v2703 = vpop.permute.xlu0 %2702
      %2705 = vset.pattern.permute.xlu0 5
      %2706 = vperm.xlu0 %2705, %v1598
      %v2707 = vpop.permute.xlu0 %2706
      %2709 = vset.pattern.permute.xlu0 5
      %2710 = vperm.xlu0 %2709, %v1599
      %v2711 = vpop.permute.xlu0 %2710
      %2713 = vset.pattern.permute.xlu0 5
      %2714 = vperm.xlu0 %2713, %v1600
      %v2715 = vpop.permute.xlu0 %2714
      %2717 = vset.pattern.permute.xlu0 5
      %2718 = vperm.xlu0 %2717, %v1601
      %v2719 = vpop.permute.xlu0 %2718
      %2721 = vset.pattern.permute.xlu0 5
      %2722 = vperm.xlu0 %2721, %v1602
      %v2723 = vpop.permute.xlu0 %2722
      %2725 = vset.pattern.permute.xlu0 5
      %2726 = vperm.xlu0 %2725, %v1603
      %v2727 = vpop.permute.xlu0 %2726
      %2729 = vset.pattern.permute.xlu0 5
      %2730 = vperm.xlu0 %2729, %v1604
      %v2731 = vpop.permute.xlu0 %2730
      %2733 = vset.pattern.permute.xlu0 5
      %2734 = vperm.xlu0 %2733, %v1605
      %v2735 = vpop.permute.xlu0 %2734
      %2737 = vset.pattern.permute.xlu0 5
      %2738 = vperm.xlu0 %2737, %v1606
      %v2739 = vpop.permute.xlu0 %2738
      %2741 = vset.pattern.permute.xlu0 5
      %2742 = vperm.xlu0 %2741, %v1607
      %v2743 = vpop.permute.xlu0 %2742
      %2745 = vset.pattern.permute.xlu0 5
      %2746 = vperm.xlu0 %2745, %v1608
      %v2747 = vpop.permute.xlu0 %2746
      %v2749 = vmul.f32 %v2251, %v2623
      %v2750 = vmul.f32 %v2250, %v2627
      %v2751 = vmul.f32 %v2249, %v2631
      %v2752 = vmul.f32 %v2248, %v2635
      %v2753 = vmul.f32 %v2247, %v2639
      %v2754 = vmul.f32 %v2246, %v2643
      %v2755 = vmul.f32 %v2245, %v2647
      %v2756 = vmul.f32 %v2244, %v2651
      %v2757 = vmul.f32 %v2243, %v2655
      %v2758 = vmul.f32 %v2242, %v2659
      %v2759 = vmul.f32 %v2241, %v2663
      %v2760 = vmul.f32 %v2240, %v2667
      %v2761 = vmul.f32 %v2239, %v2671
      %v2762 = vmul.f32 %v2238, %v2675
      %v2763 = vmul.f32 %v2237, %v2679
      %v2764 = vmul.f32 %v2236, %v2683
      %v2765 = vmul.f32 %v2235, %v2687
      %v2766 = vmul.f32 %v2234, %v2691
      %v2767 = vmul.f32 %v2233, %v2695
      %v2768 = vmul.f32 %v2232, %v2699
      %v2769 = vmul.f32 %v2231, %v2703
      %v2770 = vmul.f32 %v2230, %v2707
      %v2771 = vmul.f32 %v2229, %v2711
      %v2772 = vmul.f32 %v2228, %v2715
      %v2773 = vmul.f32 %v2227, %v2719
      %v2774 = vmul.f32 %v2226, %v2723
      %v2775 = vmul.f32 %v2225, %v2727
      %v2776 = vmul.f32 %v2224, %v2731
      %v2777 = vmul.f32 %v2223, %v2735
      %v2778 = vmul.f32 %v2222, %v2739
      %v2779 = vmul.f32 %v2221, %v2743
      %v2780 = vmul.f32 %v2252, %v2747
      %v2781 = vpack.c.bf16 %v2750, %v2749
      %v2782 = vpack.c.bf16 %v2752, %v2751
      %v2783 = vpack.c.bf16 %v2754, %v2753
      %v2784 = vpack.c.bf16 %v2756, %v2755
      %v2785 = vpack.c.bf16 %v2758, %v2757
      %v2786 = vpack.c.bf16 %v2760, %v2759
      %v2787 = vpack.c.bf16 %v2762, %v2761
      %v2788 = vpack.c.bf16 %v2764, %v2763
      %v2789 = vpack.c.bf16 %v2766, %v2765
      %v2790 = vpack.c.bf16 %v2768, %v2767
      %v2791 = vpack.c.bf16 %v2770, %v2769
      %v2792 = vpack.c.bf16 %v2772, %v2771
      %v2793 = vpack.c.bf16 %v2774, %v2773
      %v2794 = vpack.c.bf16 %v2776, %v2775
      %v2795 = vpack.c.bf16 %v2778, %v2777
      %v2796 = vpack.c.bf16 %v2780, %v2779
      %2797 = vset.pattern.permute.xlu0 6
      %2798 = vperm.xlu0 %2797, %v1577
      %v2799 = vpop.permute.xlu0 %2798
      %2801 = vset.pattern.permute.xlu0 6
      %2802 = vperm.xlu0 %2801, %v1578
      %v2803 = vpop.permute.xlu0 %2802
      %2805 = vset.pattern.permute.xlu0 6
      %2806 = vperm.xlu0 %2805, %v1579
      %v2807 = vpop.permute.xlu0 %2806
      %2809 = vset.pattern.permute.xlu0 6
      %2810 = vperm.xlu0 %2809, %v1580
      %v2811 = vpop.permute.xlu0 %2810
      %2813 = vset.pattern.permute.xlu0 6
      %2814 = vperm.xlu0 %2813, %v1581
      %v2815 = vpop.permute.xlu0 %2814
      %2817 = vset.pattern.permute.xlu0 6
      %2818 = vperm.xlu0 %2817, %v1582
      %v2819 = vpop.permute.xlu0 %2818
      %2821 = vset.pattern.permute.xlu0 6
      %2822 = vperm.xlu0 %2821, %v1583
      %v2823 = vpop.permute.xlu0 %2822
      %2825 = vset.pattern.permute.xlu0 6
      %2826 = vperm.xlu0 %2825, %v1584
      %v2827 = vpop.permute.xlu0 %2826
      %2829 = vset.pattern.permute.xlu0 6
      %2830 = vperm.xlu0 %2829, %v1585
      %v2831 = vpop.permute.xlu0 %2830
      %2833 = vset.pattern.permute.xlu0 6
      %2834 = vperm.xlu0 %2833, %v1586
      %v2835 = vpop.permute.xlu0 %2834
      %2837 = vset.pattern.permute.xlu0 6
      %2838 = vperm.xlu0 %2837, %v1587
      %v2839 = vpop.permute.xlu0 %2838
      %2841 = vset.pattern.permute.xlu0 6
      %2842 = vperm.xlu0 %2841, %v1588
      %v2843 = vpop.permute.xlu0 %2842
      %2845 = vset.pattern.permute.xlu0 6
      %2846 = vperm.xlu0 %2845, %v1589
      %v2847 = vpop.permute.xlu0 %2846
      %2849 = vset.pattern.permute.xlu0 6
      %2850 = vperm.xlu0 %2849, %v1590
      %v2851 = vpop.permute.xlu0 %2850
      %2853 = vset.pattern.permute.xlu0 6
      %2854 = vperm.xlu0 %2853, %v1591
      %v2855 = vpop.permute.xlu0 %2854
      %2857 = vset.pattern.permute.xlu0 6
      %2858 = vperm.xlu0 %2857, %v1592
      %v2859 = vpop.permute.xlu0 %2858
      %2861 = vset.pattern.permute.xlu0 6
      %2862 = vperm.xlu0 %2861, %v1593
      %v2863 = vpop.permute.xlu0 %2862
      %2865 = vset.pattern.permute.xlu0 6
      %2866 = vperm.xlu0 %2865, %v1594
      %v2867 = vpop.permute.xlu0 %2866
      %2869 = vset.pattern.permute.xlu0 6
      %2870 = vperm.xlu0 %2869, %v1595
      %v2871 = vpop.permute.xlu0 %2870
      %2873 = vset.pattern.permute.xlu0 6
      %2874 = vperm.xlu0 %2873, %v1596
      %v2875 = vpop.permute.xlu0 %2874
      %2877 = vset.pattern.permute.xlu0 6
      %2878 = vperm.xlu0 %2877, %v1597
      %v2879 = vpop.permute.xlu0 %2878
      %2881 = vset.pattern.permute.xlu0 6
      %2882 = vperm.xlu0 %2881, %v1598
      %v2883 = vpop.permute.xlu0 %2882
      %2885 = vset.pattern.permute.xlu0 6
      %2886 = vperm.xlu0 %2885, %v1599
      %v2887 = vpop.permute.xlu0 %2886
      %2889 = vset.pattern.permute.xlu0 6
      %2890 = vperm.xlu0 %2889, %v1600
      %v2891 = vpop.permute.xlu0 %2890
      %2893 = vset.pattern.permute.xlu0 6
      %2894 = vperm.xlu0 %2893, %v1601
      %v2895 = vpop.permute.xlu0 %2894
      %2897 = vset.pattern.permute.xlu0 6
      %2898 = vperm.xlu0 %2897, %v1602
      %v2899 = vpop.permute.xlu0 %2898
      %2901 = vset.pattern.permute.xlu0 6
      %2902 = vperm.xlu0 %2901, %v1603
      %v2903 = vpop.permute.xlu0 %2902
      %2905 = vset.pattern.permute.xlu0 6
      %2906 = vperm.xlu0 %2905, %v1604
      %v2907 = vpop.permute.xlu0 %2906
      %2909 = vset.pattern.permute.xlu0 6
      %2910 = vperm.xlu0 %2909, %v1605
      %v2911 = vpop.permute.xlu0 %2910
      %2913 = vset.pattern.permute.xlu0 6
      %2914 = vperm.xlu0 %2913, %v1606
      %v2915 = vpop.permute.xlu0 %2914
      %2917 = vset.pattern.permute.xlu0 6
      %2918 = vperm.xlu0 %2917, %v1607
      %v2919 = vpop.permute.xlu0 %2918
      %2921 = vset.pattern.permute.xlu0 6
      %2922 = vperm.xlu0 %2921, %v1608
      %v2923 = vpop.permute.xlu0 %2922
      %v2925 = vmul.f32 %v1801, %v2799
      %v2926 = vmul.f32 %v1800, %v2803
      %v2927 = vmul.f32 %v1799, %v2807
      %v2928 = vmul.f32 %v1798, %v2811
      %v2929 = vmul.f32 %v1797, %v2815
      %v2930 = vmul.f32 %v1796, %v2819
      %v2931 = vmul.f32 %v1795, %v2823
      %v2932 = vmul.f32 %v1794, %v2827
      %v2933 = vmul.f32 %v1793, %v2831
      %v2934 = vmul.f32 %v1792, %v2835
      %v2935 = vmul.f32 %v1791, %v2839
      %v2936 = vmul.f32 %v1790, %v2843
      %v2937 = vmul.f32 %v1789, %v2847
      %v2938 = vmul.f32 %v1788, %v2851
      %v2939 = vmul.f32 %v1787, %v2855
      %v2940 = vmul.f32 %v1786, %v2859
      %v2941 = vmul.f32 %v1785, %v2863
      %v2942 = vmul.f32 %v1784, %v2867
      %v2943 = vmul.f32 %v1783, %v2871
      %v2944 = vmul.f32 %v1782, %v2875
      %v2945 = vmul.f32 %v1781, %v2879
      %v2946 = vmul.f32 %v1780, %v2883
      %v2947 = vmul.f32 %v1779, %v2887
      %v2948 = vmul.f32 %v1778, %v2891
      %v2949 = vmul.f32 %v1777, %v2895
      %v2950 = vmul.f32 %v1776, %v2899
      %v2951 = vmul.f32 %v1775, %v2903
      %v2952 = vmul.f32 %v1774, %v2907
      %v2953 = vmul.f32 %v1773, %v2911
      %v2954 = vmul.f32 %v1772, %v2915
      %v2955 = vmul.f32 %v1803, %v2919
      %v2956 = vmul.f32 %v1802, %v2923
      %v2957 = vpack.c.bf16 %v2926, %v2925
      %v2958 = vpack.c.bf16 %v2928, %v2927
      %v2959 = vpack.c.bf16 %v2930, %v2929
      %v2960 = vpack.c.bf16 %v2932, %v2931
      %v2961 = vpack.c.bf16 %v2934, %v2933
      %v2962 = vpack.c.bf16 %v2936, %v2935
      %v2963 = vpack.c.bf16 %v2938, %v2937
      %v2964 = vpack.c.bf16 %v2940, %v2939
      %v2965 = vpack.c.bf16 %v2942, %v2941
      %v2966 = vpack.c.bf16 %v2944, %v2943
      %v2967 = vpack.c.bf16 %v2946, %v2945
      %v2968 = vpack.c.bf16 %v2948, %v2947
      %v2969 = vpack.c.bf16 %v2950, %v2949
      %v2970 = vpack.c.bf16 %v2952, %v2951
      %v2971 = vpack.c.bf16 %v2954, %v2953
      %v2972 = vpack.c.bf16 %v2956, %v2955
      %2973 = vset.pattern.permute.xlu0 7
      %2974 = vperm.xlu0 %2973, %v1577
      %v2975 = vpop.permute.xlu0 %2974
      %2977 = vset.pattern.permute.xlu0 7
      %2978 = vperm.xlu0 %2977, %v1578
      %v2979 = vpop.permute.xlu0 %2978
      %2981 = vset.pattern.permute.xlu0 7
      %2982 = vperm.xlu0 %2981, %v1579
      %v2983 = vpop.permute.xlu0 %2982
      %2985 = vset.pattern.permute.xlu0 7
      %2986 = vperm.xlu0 %2985, %v1580
      %v2987 = vpop.permute.xlu0 %2986
      %2989 = vset.pattern.permute.xlu0 7
      %2990 = vperm.xlu0 %2989, %v1581
      %v2991 = vpop.permute.xlu0 %2990
      %2993 = vset.pattern.permute.xlu0 7
      %2994 = vperm.xlu0 %2993, %v1582
      %v2995 = vpop.permute.xlu0 %2994
      %2997 = vset.pattern.permute.xlu0 7
      %2998 = vperm.xlu0 %2997, %v1583
      %v2999 = vpop.permute.xlu0 %2998
      %3001 = vset.pattern.permute.xlu0 7
      %3002 = vperm.xlu0 %3001, %v1584
      %v3003 = vpop.permute.xlu0 %3002
      %3005 = vset.pattern.permute.xlu0 7
      %3006 = vperm.xlu0 %3005, %v1585
      %v3007 = vpop.permute.xlu0 %3006
      %3009 = vset.pattern.permute.xlu0 7
      %3010 = vperm.xlu0 %3009, %v1586
      %v3011 = vpop.permute.xlu0 %3010
      %3013 = vset.pattern.permute.xlu0 7
      %3014 = vperm.xlu0 %3013, %v1587
      %v3015 = vpop.permute.xlu0 %3014
      %3017 = vset.pattern.permute.xlu0 7
      %3018 = vperm.xlu0 %3017, %v1588
      %v3019 = vpop.permute.xlu0 %3018
      %3021 = vset.pattern.permute.xlu0 7
      %3022 = vperm.xlu0 %3021, %v1589
      %v3023 = vpop.permute.xlu0 %3022
      %3025 = vset.pattern.permute.xlu0 7
      %3026 = vperm.xlu0 %3025, %v1590
      %v3027 = vpop.permute.xlu0 %3026
      %3029 = vset.pattern.permute.xlu0 7
      %3030 = vperm.xlu0 %3029, %v1591
      %v3031 = vpop.permute.xlu0 %3030
      %3033 = vset.pattern.permute.xlu0 7
      %3034 = vperm.xlu0 %3033, %v1592
      %v3035 = vpop.permute.xlu0 %3034
      %3037 = vset.pattern.permute.xlu0 7
      %3038 = vperm.xlu0 %3037, %v1593
      %v3039 = vpop.permute.xlu0 %3038
      %3041 = vset.pattern.permute.xlu0 7
      %3042 = vperm.xlu0 %3041, %v1594
      %v3043 = vpop.permute.xlu0 %3042
      %3045 = vset.pattern.permute.xlu0 7
      %3046 = vperm.xlu0 %3045, %v1595
      %v3047 = vpop.permute.xlu0 %3046
      %3049 = vset.pattern.permute.xlu0 7
      %3050 = vperm.xlu0 %3049, %v1596
      %v3051 = vpop.permute.xlu0 %3050
      %3053 = vset.pattern.permute.xlu0 7
      %3054 = vperm.xlu0 %3053, %v1597
      %v3055 = vpop.permute.xlu0 %3054
      %3057 = vset.pattern.permute.xlu0 7
      %3058 = vperm.xlu0 %3057, %v1598
      %v3059 = vpop.permute.xlu0 %3058
      %3061 = vset.pattern.permute.xlu0 7
      %3062 = vperm.xlu0 %3061, %v1599
      %v3063 = vpop.permute.xlu0 %3062
      %3065 = vset.pattern.permute.xlu0 7
      %3066 = vperm.xlu0 %3065, %v1600
      %v3067 = vpop.permute.xlu0 %3066
      %3069 = vset.pattern.permute.xlu0 7
      %3070 = vperm.xlu0 %3069, %v1601
      %v3071 = vpop.permute.xlu0 %3070
      %3073 = vset.pattern.permute.xlu0 7
      %3074 = vperm.xlu0 %3073, %v1602
      %v3075 = vpop.permute.xlu0 %3074
      %3077 = vset.pattern.permute.xlu0 7
      %3078 = vperm.xlu0 %3077, %v1603
      %v3079 = vpop.permute.xlu0 %3078
      %3081 = vset.pattern.permute.xlu0 7
      %3082 = vperm.xlu0 %3081, %v1604
      %v3083 = vpop.permute.xlu0 %3082
      %3085 = vset.pattern.permute.xlu0 7
      %3086 = vperm.xlu0 %3085, %v1605
      %v3087 = vpop.permute.xlu0 %3086
      %3089 = vset.pattern.permute.xlu0 7
      %3090 = vperm.xlu0 %3089, %v1606
      %v3091 = vpop.permute.xlu0 %3090
      %3093 = vset.pattern.permute.xlu0 7
      %3094 = vperm.xlu0 %3093, %v1607
      %v3095 = vpop.permute.xlu0 %3094
      %3097 = vset.pattern.permute.xlu0 7
      %3098 = vperm.xlu0 %3097, %v1608
      %v3099 = vpop.permute.xlu0 %3098
      %v3101 = vmul.f32 %v1646, %v2975
      %v3102 = vmul.f32 %v1648, %v2979
      %v3103 = vmul.f32 %v1650, %v2983
      %v3104 = vmul.f32 %v1652, %v2987
      %v3105 = vmul.f32 %v1654, %v2991
      %v3106 = vmul.f32 %v1656, %v2995
      %v3107 = vmul.f32 %v1658, %v2999
      %v3108 = vmul.f32 %v1660, %v3003
      %v3109 = vmul.f32 %v1662, %v3007
      %v3110 = vmul.f32 %v1664, %v3011
      %v3111 = vmul.f32 %v1666, %v3015
      %v3112 = vmul.f32 %v1668, %v3019
      %v3113 = vmul.f32 %v1670, %v3023
      %v3114 = vmul.f32 %v1672, %v3027
      %v3115 = vmul.f32 %v1674, %v3031
      %v3116 = vmul.f32 %v1676, %v3035
      %v3117 = vmul.f32 %v1678, %v3039
      %v3118 = vmul.f32 %v1680, %v3043
      %v3119 = vmul.f32 %v1682, %v3047
      %v3120 = vmul.f32 %v1684, %v3051
      %v3121 = vmul.f32 %v1686, %v3055
      %v3122 = vmul.f32 %v1688, %v3059
      %v3123 = vmul.f32 %v1690, %v3063
      %v3124 = vmul.f32 %v1692, %v3067
      %v3125 = vmul.f32 %v1694, %v3071
      %v3126 = vmul.f32 %v1696, %v3075
      %v3127 = vmul.f32 %v1698, %v3079
      %v3128 = vmul.f32 %v1700, %v3083
      %v3129 = vmul.f32 %v1702, %v3087
      %v3130 = vmul.f32 %v1704, %v3091
      %v3131 = vmul.f32 %v1642, %v3095
      %v3132 = vmul.f32 %v1644, %v3099
      %v3133 = vpack.c.bf16 %v3102, %v3101
      %v3134 = vpack.c.bf16 %v3104, %v3103
      %v3135 = vpack.c.bf16 %v3106, %v3105
      %v3136 = vpack.c.bf16 %v3108, %v3107
      %v3137 = vpack.c.bf16 %v3110, %v3109
      %v3138 = vpack.c.bf16 %v3112, %v3111
      %v3139 = vpack.c.bf16 %v3114, %v3113
      %v3140 = vpack.c.bf16 %v3116, %v3115
      %v3141 = vpack.c.bf16 %v3118, %v3117
      %v3142 = vpack.c.bf16 %v3120, %v3119
      %v3143 = vpack.c.bf16 %v3122, %v3121
      %v3144 = vpack.c.bf16 %v3124, %v3123
      %v3145 = vpack.c.bf16 %v3126, %v3125
      %v3146 = vpack.c.bf16 %v3128, %v3127
      %v3147 = vpack.c.bf16 %v3130, %v3129
      %v3148 = vpack.c.bf16 %v3132, %v3131
      %3149 = vset.pattern.permute.xlu0 8
      %3150 = vperm.xlu0 %3149, %v1577
      %v3151 = vpop.permute.xlu0 %3150
      %3153 = vset.pattern.permute.xlu0 8
      %3154 = vperm.xlu0 %3153, %v1578
      %v3155 = vpop.permute.xlu0 %3154
      %3157 = vset.pattern.permute.xlu0 8
      %3158 = vperm.xlu0 %3157, %v1579
      %v3159 = vpop.permute.xlu0 %3158
      %3161 = vset.pattern.permute.xlu0 8
      %3162 = vperm.xlu0 %3161, %v1580
      %v3163 = vpop.permute.xlu0 %3162
      %3165 = vset.pattern.permute.xlu0 8
      %3166 = vperm.xlu0 %3165, %v1581
      %v3167 = vpop.permute.xlu0 %3166
      %3169 = vset.pattern.permute.xlu0 8
      %3170 = vperm.xlu0 %3169, %v1582
      %v3171 = vpop.permute.xlu0 %3170
      %3173 = vset.pattern.permute.xlu0 8
      %3174 = vperm.xlu0 %3173, %v1583
      %v3175 = vpop.permute.xlu0 %3174
      %3177 = vset.pattern.permute.xlu0 8
      %3178 = vperm.xlu0 %3177, %v1584
      %v3179 = vpop.permute.xlu0 %3178
      %3181 = vset.pattern.permute.xlu0 8
      %3182 = vperm.xlu0 %3181, %v1585
      %v3183 = vpop.permute.xlu0 %3182
      %3185 = vset.pattern.permute.xlu0 8
      %3186 = vperm.xlu0 %3185, %v1586
      %v3187 = vpop.permute.xlu0 %3186
      %3189 = vset.pattern.permute.xlu0 8
      %3190 = vperm.xlu0 %3189, %v1587
      %v3191 = vpop.permute.xlu0 %3190
      %3193 = vset.pattern.permute.xlu0 8
      %3194 = vperm.xlu0 %3193, %v1588
      %v3195 = vpop.permute.xlu0 %3194
      %3197 = vset.pattern.permute.xlu0 8
      %3198 = vperm.xlu0 %3197, %v1589
      %v3199 = vpop.permute.xlu0 %3198
      %3201 = vset.pattern.permute.xlu0 8
      %3202 = vperm.xlu0 %3201, %v1590
      %v3203 = vpop.permute.xlu0 %3202
      %3205 = vset.pattern.permute.xlu0 8
      %3206 = vperm.xlu0 %3205, %v1591
      %v3207 = vpop.permute.xlu0 %3206
      %3209 = vset.pattern.permute.xlu0 8
      %3210 = vperm.xlu0 %3209, %v1592
      %v3211 = vpop.permute.xlu0 %3210
      %3213 = vset.pattern.permute.xlu0 8
      %3214 = vperm.xlu0 %3213, %v1593
      %v3215 = vpop.permute.xlu0 %3214
      %3217 = vset.pattern.permute.xlu0 8
      %3218 = vperm.xlu0 %3217, %v1594
      %v3219 = vpop.permute.xlu0 %3218
      %3221 = vset.pattern.permute.xlu0 8
      %3222 = vperm.xlu0 %3221, %v1595
      %v3223 = vpop.permute.xlu0 %3222
      %3225 = vset.pattern.permute.xlu0 8
      %3226 = vperm.xlu0 %3225, %v1596
      %v3227 = vpop.permute.xlu0 %3226
      %3229 = vset.pattern.permute.xlu0 8
      %3230 = vperm.xlu0 %3229, %v1597
      %v3231 = vpop.permute.xlu0 %3230
      %3233 = vset.pattern.permute.xlu0 8
      %3234 = vperm.xlu0 %3233, %v1598
      %v3235 = vpop.permute.xlu0 %3234
      %3237 = vset.pattern.permute.xlu0 8
      %3238 = vperm.xlu0 %3237, %v1599
      %v3239 = vpop.permute.xlu0 %3238
      %3241 = vset.pattern.permute.xlu0 8
      %3242 = vperm.xlu0 %3241, %v1600
      %v3243 = vpop.permute.xlu0 %3242
      %3245 = vset.pattern.permute.xlu0 8
      %3246 = vperm.xlu0 %3245, %v1601
      %v3247 = vpop.permute.xlu0 %3246
      %3249 = vset.pattern.permute.xlu0 8
      %3250 = vperm.xlu0 %3249, %v1602
      %v3251 = vpop.permute.xlu0 %3250
      %3253 = vset.pattern.permute.xlu0 8
      %3254 = vperm.xlu0 %3253, %v1603
      %v3255 = vpop.permute.xlu0 %3254
      %3257 = vset.pattern.permute.xlu0 8
      %3258 = vperm.xlu0 %3257, %v1604
      %v3259 = vpop.permute.xlu0 %3258
      %3261 = vset.pattern.permute.xlu0 8
      %3262 = vperm.xlu0 %3261, %v1605
      %v3263 = vpop.permute.xlu0 %3262
      %3265 = vset.pattern.permute.xlu0 8
      %3266 = vperm.xlu0 %3265, %v1606
      %v3267 = vpop.permute.xlu0 %3266
      %3269 = vset.pattern.permute.xlu0 8
      %3270 = vperm.xlu0 %3269, %v1607
      %v3271 = vpop.permute.xlu0 %3270
      %3273 = vset.pattern.permute.xlu0 8
      %3274 = vperm.xlu0 %3273, %v1608
      %v3275 = vpop.permute.xlu0 %3274
      %v3277 = vmul.f32 %v2249, %v3151
      %v3278 = vmul.f32 %v2248, %v3155
      %v3279 = vmul.f32 %v2247, %v3159
      %v3280 = vmul.f32 %v2246, %v3163
      %v3281 = vmul.f32 %v2245, %v3167
      %v3282 = vmul.f32 %v2244, %v3171
      %v3283 = vmul.f32 %v2243, %v3175
      %v3284 = vmul.f32 %v2242, %v3179
      %v3285 = vmul.f32 %v2241, %v3183
      %v3286 = vmul.f32 %v2240, %v3187
      %v3287 = vmul.f32 %v2239, %v3191
      %v3288 = vmul.f32 %v2238, %v3195
      %v3289 = vmul.f32 %v2237, %v3199
      %v3290 = vmul.f32 %v2236, %v3203
      %v3291 = vmul.f32 %v2235, %v3207
      %v3292 = vmul.f32 %v2234, %v3211
      %v3293 = vmul.f32 %v2233, %v3215
      %v3294 = vmul.f32 %v2232, %v3219
      %v3295 = vmul.f32 %v2231, %v3223
      %v3296 = vmul.f32 %v2230, %v3227
      %v3297 = vmul.f32 %v2229, %v3231
      %v3298 = vmul.f32 %v2228, %v3235
      %v3299 = vmul.f32 %v2227, %v3239
      %v3300 = vmul.f32 %v2226, %v3243
      %v3301 = vmul.f32 %v2225, %v3247
      %v3302 = vmul.f32 %v2224, %v3251
      %v3303 = vmul.f32 %v2223, %v3255
      %v3304 = vmul.f32 %v2222, %v3259
      %v3305 = vmul.f32 %v2221, %v3263
      %v3306 = vmul.f32 %v2252, %v3267
      %v3307 = vmul.f32 %v2251, %v3271
      %v3308 = vmul.f32 %v2250, %v3275
      %v3309 = vpack.c.bf16 %v3278, %v3277
      %v3310 = vpack.c.bf16 %v3280, %v3279
      %v3311 = vpack.c.bf16 %v3282, %v3281
      %v3312 = vpack.c.bf16 %v3284, %v3283
      %v3313 = vpack.c.bf16 %v3286, %v3285
      %v3314 = vpack.c.bf16 %v3288, %v3287
      %v3315 = vpack.c.bf16 %v3290, %v3289
      %v3316 = vpack.c.bf16 %v3292, %v3291
      %v3317 = vpack.c.bf16 %v3294, %v3293
      %v3318 = vpack.c.bf16 %v3296, %v3295
      %v3319 = vpack.c.bf16 %v3298, %v3297
      %v3320 = vpack.c.bf16 %v3300, %v3299
      %v3321 = vpack.c.bf16 %v3302, %v3301
      %v3322 = vpack.c.bf16 %v3304, %v3303
      %v3323 = vpack.c.bf16 %v3306, %v3305
      %v3324 = vpack.c.bf16 %v3308, %v3307
      %3341 = vrot.lane.b32.xlu0 %v2172, 32
      %v3342 = vpop.permute.xlu0 %3341
      %3343 = vrot.lane.b32.xlu0 %v2173, 32
      %v3344 = vpop.permute.xlu0 %3343
      %3345 = vrot.lane.b32.xlu0 %v2174, 32
      %v3346 = vpop.permute.xlu0 %3345
      %3347 = vrot.lane.b32.xlu0 %v2175, 32
      %v3348 = vpop.permute.xlu0 %3347
      %3349 = vrot.lane.b32.xlu0 %v2176, 32
      %v3350 = vpop.permute.xlu0 %3349
      %3351 = vrot.lane.b32.xlu0 %v2177, 32
      %v3352 = vpop.permute.xlu0 %3351
      %3353 = vrot.lane.b32.xlu0 %v2178, 32
      %v3354 = vpop.permute.xlu0 %3353
      %3355 = vrot.lane.b32.xlu0 %v2179, 32
      %v3356 = vpop.permute.xlu0 %3355
      %3357 = vrot.lane.b32.xlu0 %v2180, 32
      %v3358 = vpop.permute.xlu0 %3357
      %3359 = vrot.lane.b32.xlu0 %v2181, 32
      %v3360 = vpop.permute.xlu0 %3359
      %3361 = vrot.lane.b32.xlu0 %v2182, 32
      %v3362 = vpop.permute.xlu0 %3361
      %3363 = vrot.lane.b32.xlu0 %v2183, 32
      %v3364 = vpop.permute.xlu0 %3363
      %3365 = vrot.lane.b32.xlu0 %v2184, 32
      %v3366 = vpop.permute.xlu0 %3365
      %3367 = vrot.lane.b32.xlu0 %v2185, 32
      %v3368 = vpop.permute.xlu0 %3367
      %3369 = vrot.lane.b32.xlu0 %v2186, 32
      %v3370 = vpop.permute.xlu0 %3369
      %3371 = vrot.lane.b32.xlu0 %v2187, 32
      %v3372 = vpop.permute.xlu0 %3371
      %3389 = vrot.lane.b32.xlu0 %v2413, 64
      %v3390 = vpop.permute.xlu0 %3389
      %3391 = vrot.lane.b32.xlu0 %v2414, 64
      %v3392 = vpop.permute.xlu0 %3391
      %3393 = vrot.lane.b32.xlu0 %v2415, 64
      %v3394 = vpop.permute.xlu0 %3393
      %3395 = vrot.lane.b32.xlu0 %v2416, 64
      %v3396 = vpop.permute.xlu0 %3395
      %3397 = vrot.lane.b32.xlu0 %v2417, 64
      %v3398 = vpop.permute.xlu0 %3397
      %3399 = vrot.lane.b32.xlu0 %v2418, 64
      %v3400 = vpop.permute.xlu0 %3399
      %3401 = vrot.lane.b32.xlu0 %v2419, 64
      %v3402 = vpop.permute.xlu0 %3401
      %3403 = vrot.lane.b32.xlu0 %v2420, 64
      %v3404 = vpop.permute.xlu0 %3403
      %3405 = vrot.lane.b32.xlu0 %v2421, 64
      %v3406 = vpop.permute.xlu0 %3405
      %3407 = vrot.lane.b32.xlu0 %v2422, 64
      %v3408 = vpop.permute.xlu0 %3407
      %3409 = vrot.lane.b32.xlu0 %v2423, 64
      %v3410 = vpop.permute.xlu0 %3409
      %3411 = vrot.lane.b32.xlu0 %v2424, 64
      %v3412 = vpop.permute.xlu0 %3411
      %3413 = vrot.lane.b32.xlu0 %v2425, 64
      %v3414 = vpop.permute.xlu0 %3413
      %3415 = vrot.lane.b32.xlu0 %v2426, 64
      %v3416 = vpop.permute.xlu0 %3415
      %3417 = vrot.lane.b32.xlu0 %v2427, 64
      %v3418 = vpop.permute.xlu0 %3417
      %3419 = vrot.lane.b32.xlu0 %v2428, 64
      %v3420 = vpop.permute.xlu0 %3419
      %3437 = vrot.lane.b32.xlu0 %v2589, 96
      %v3438 = vpop.permute.xlu0 %3437
      %3439 = vrot.lane.b32.xlu0 %v2590, 96
      %v3440 = vpop.permute.xlu0 %3439
      %3441 = vrot.lane.b32.xlu0 %v2591, 96
      %v3442 = vpop.permute.xlu0 %3441
      %3443 = vrot.lane.b32.xlu0 %v2592, 96
      %v3444 = vpop.permute.xlu0 %3443
      %3445 = vrot.lane.b32.xlu0 %v2593, 96
      %v3446 = vpop.permute.xlu0 %3445
      %3447 = vrot.lane.b32.xlu0 %v2594, 96
      %v3448 = vpop.permute.xlu0 %3447
      %3449 = vrot.lane.b32.xlu0 %v2595, 96
      %v3450 = vpop.permute.xlu0 %3449
      %3451 = vrot.lane.b32.xlu0 %v2596, 96
      %v3452 = vpop.permute.xlu0 %3451
      %3453 = vrot.lane.b32.xlu0 %v2597, 96
      %v3454 = vpop.permute.xlu0 %3453
      %3455 = vrot.lane.b32.xlu0 %v2598, 96
      %v3456 = vpop.permute.xlu0 %3455
      %3457 = vrot.lane.b32.xlu0 %v2599, 96
      %v3458 = vpop.permute.xlu0 %3457
      %3459 = vrot.lane.b32.xlu0 %v2600, 96
      %v3460 = vpop.permute.xlu0 %3459
      %3461 = vrot.lane.b32.xlu0 %v2601, 96
      %v3462 = vpop.permute.xlu0 %3461
      %3463 = vrot.lane.b32.xlu0 %v2602, 96
      %v3464 = vpop.permute.xlu0 %3463
      %3465 = vrot.lane.b32.xlu0 %v2603, 96
      %v3466 = vpop.permute.xlu0 %3465
      %3467 = vrot.lane.b32.xlu0 %v2604, 96
      %v3468 = vpop.permute.xlu0 %3467
      %3485 = vrot.lane.b32.xlu0 %v2605, 96
      %v3486 = vpop.permute.xlu0 %3485
      %3487 = vrot.lane.b32.xlu0 %v2606, 96
      %v3488 = vpop.permute.xlu0 %3487
      %3489 = vrot.lane.b32.xlu0 %v2607, 96
      %v3490 = vpop.permute.xlu0 %3489
      %3491 = vrot.lane.b32.xlu0 %v2608, 96
      %v3492 = vpop.permute.xlu0 %3491
      %3493 = vrot.lane.b32.xlu0 %v2609, 96
      %v3494 = vpop.permute.xlu0 %3493
      %3495 = vrot.lane.b32.xlu0 %v2610, 96
      %v3496 = vpop.permute.xlu0 %3495
      %3497 = vrot.lane.b32.xlu0 %v2611, 96
      %v3498 = vpop.permute.xlu0 %3497
      %3499 = vrot.lane.b32.xlu0 %v2612, 96
      %v3500 = vpop.permute.xlu0 %3499
      %3501 = vrot.lane.b32.xlu0 %v2613, 96
      %v3502 = vpop.permute.xlu0 %3501
      %3503 = vrot.lane.b32.xlu0 %v2614, 96
      %v3504 = vpop.permute.xlu0 %3503
      %3505 = vrot.lane.b32.xlu0 %v2615, 96
      %v3506 = vpop.permute.xlu0 %3505
      %3507 = vrot.lane.b32.xlu0 %v2616, 96
      %v3508 = vpop.permute.xlu0 %3507
      %3509 = vrot.lane.b32.xlu0 %v2617, 96
      %v3510 = vpop.permute.xlu0 %3509
      %3511 = vrot.lane.b32.xlu0 %v2618, 96
      %v3512 = vpop.permute.xlu0 %3511
      %3513 = vrot.lane.b32.xlu0 %v2619, 96
      %v3514 = vpop.permute.xlu0 %3513
      %3515 = vrot.lane.b32.xlu0 %v2620, 96
      %v3516 = vpop.permute.xlu0 %3515
      %3533 = vrot.lane.b32.xlu0 %v2781, 32
      %v3534 = vpop.permute.xlu0 %3533
      %3535 = vrot.lane.b32.xlu0 %v2782, 32
      %v3536 = vpop.permute.xlu0 %3535
      %3537 = vrot.lane.b32.xlu0 %v2783, 32
      %v3538 = vpop.permute.xlu0 %3537
      %3539 = vrot.lane.b32.xlu0 %v2784, 32
      %v3540 = vpop.permute.xlu0 %3539
      %3541 = vrot.lane.b32.xlu0 %v2785, 32
      %v3542 = vpop.permute.xlu0 %3541
      %3543 = vrot.lane.b32.xlu0 %v2786, 32
      %v3544 = vpop.permute.xlu0 %3543
      %3545 = vrot.lane.b32.xlu0 %v2787, 32
      %v3546 = vpop.permute.xlu0 %3545
      %3547 = vrot.lane.b32.xlu0 %v2788, 32
      %v3548 = vpop.permute.xlu0 %3547
      %3549 = vrot.lane.b32.xlu0 %v2789, 32
      %v3550 = vpop.permute.xlu0 %3549
      %3551 = vrot.lane.b32.xlu0 %v2790, 32
      %v3552 = vpop.permute.xlu0 %3551
      %3553 = vrot.lane.b32.xlu0 %v2791, 32
      %v3554 = vpop.permute.xlu0 %3553
      %3555 = vrot.lane.b32.xlu0 %v2792, 32
      %v3556 = vpop.permute.xlu0 %3555
      %3557 = vrot.lane.b32.xlu0 %v2793, 32
      %v3558 = vpop.permute.xlu0 %3557
      %3559 = vrot.lane.b32.xlu0 %v2794, 32
      %v3560 = vpop.permute.xlu0 %3559
      %3561 = vrot.lane.b32.xlu0 %v2795, 32
      %v3562 = vpop.permute.xlu0 %3561
      %3563 = vrot.lane.b32.xlu0 %v2796, 32
      %v3564 = vpop.permute.xlu0 %3563
      %3581 = vrot.lane.b32.xlu0 %v2957, 64
      %v3582 = vpop.permute.xlu0 %3581
      %3583 = vrot.lane.b32.xlu0 %v2958, 64
      %v3584 = vpop.permute.xlu0 %3583
      %3585 = vrot.lane.b32.xlu0 %v2959, 64
      %v3586 = vpop.permute.xlu0 %3585
      %3587 = vrot.lane.b32.xlu0 %v2960, 64
      %v3588 = vpop.permute.xlu0 %3587
      %3589 = vrot.lane.b32.xlu0 %v2961, 64
      %v3590 = vpop.permute.xlu0 %3589
      %3591 = vrot.lane.b32.xlu0 %v2962, 64
      %v3592 = vpop.permute.xlu0 %3591
      %3593 = vrot.lane.b32.xlu0 %v2963, 64
      %v3594 = vpop.permute.xlu0 %3593
      %3595 = vrot.lane.b32.xlu0 %v2964, 64
      %v3596 = vpop.permute.xlu0 %3595
      %3597 = vrot.lane.b32.xlu0 %v2965, 64
      %v3598 = vpop.permute.xlu0 %3597
      %3599 = vrot.lane.b32.xlu0 %v2966, 64
      %v3600 = vpop.permute.xlu0 %3599
      %3601 = vrot.lane.b32.xlu0 %v2967, 64
      %v3602 = vpop.permute.xlu0 %3601
      %3603 = vrot.lane.b32.xlu0 %v2968, 64
      %v3604 = vpop.permute.xlu0 %3603
      %3605 = vrot.lane.b32.xlu0 %v2969, 64
      %v3606 = vpop.permute.xlu0 %3605
      %3607 = vrot.lane.b32.xlu0 %v2970, 64
      %v3608 = vpop.permute.xlu0 %3607
      %3609 = vrot.lane.b32.xlu0 %v2971, 64
      %v3610 = vpop.permute.xlu0 %3609
      %3611 = vrot.lane.b32.xlu0 %v2972, 64
      %v3612 = vpop.permute.xlu0 %3611
      %3629 = vrot.lane.b32.xlu0 %v3133, 96
      %v3630 = vpop.permute.xlu0 %3629
      %3631 = vrot.lane.b32.xlu0 %v3134, 96
      %v3632 = vpop.permute.xlu0 %3631
      %3633 = vrot.lane.b32.xlu0 %v3135, 96
      %v3634 = vpop.permute.xlu0 %3633
      %3635 = vrot.lane.b32.xlu0 %v3136, 96
      %v3636 = vpop.permute.xlu0 %3635
      %3637 = vrot.lane.b32.xlu0 %v3137, 96
      %v3638 = vpop.permute.xlu0 %3637
      %3639 = vrot.lane.b32.xlu0 %v3138, 96
      %v3640 = vpop.permute.xlu0 %3639
      %3641 = vrot.lane.b32.xlu0 %v3139, 96
      %v3642 = vpop.permute.xlu0 %3641
      %3643 = vrot.lane.b32.xlu0 %v3140, 96
      %v3644 = vpop.permute.xlu0 %3643
      %3645 = vrot.lane.b32.xlu0 %v3141, 96
      %v3646 = vpop.permute.xlu0 %3645
      %3647 = vrot.lane.b32.xlu0 %v3142, 96
      %v3648 = vpop.permute.xlu0 %3647
      %3649 = vrot.lane.b32.xlu0 %v3143, 96
      %v3650 = vpop.permute.xlu0 %3649
      %3651 = vrot.lane.b32.xlu0 %v3144, 96
      %v3652 = vpop.permute.xlu0 %3651
      %3653 = vrot.lane.b32.xlu0 %v3145, 96
      %v3654 = vpop.permute.xlu0 %3653
      %3655 = vrot.lane.b32.xlu0 %v3146, 96
      %v3656 = vpop.permute.xlu0 %3655
      %3657 = vrot.lane.b32.xlu0 %v3147, 96
      %v3658 = vpop.permute.xlu0 %3657
      %3659 = vrot.lane.b32.xlu0 %v3148, 96
      %v3660 = vpop.permute.xlu0 %3659
      %vm3661 = vcmask 261120
      %v3664 = vsel %vm3661, %v1996, %v3342
      %v3667 = vsel %vm3661, %v1997, %v3344
      %v3670 = vsel %vm3661, %v1998, %v3346
      %v3673 = vsel %vm3661, %v1999, %v3348
      %v3676 = vsel %vm3661, %v2000, %v3350
      %v3679 = vsel %vm3661, %v2001, %v3352
      %v3682 = vsel %vm3661, %v2002, %v3354
      %v3685 = vsel %vm3661, %v2003, %v3356
      %v3688 = vsel %vm3661, %v2004, %v3358
      %v3691 = vsel %vm3661, %v2005, %v3360
      %v3694 = vsel %vm3661, %v2006, %v3362
      %v3697 = vsel %vm3661, %v2007, %v3364
      %v3700 = vsel %vm3661, %v2008, %v3366
      %v3703 = vsel %vm3661, %v2009, %v3368
      %v3706 = vsel %vm3661, %v2010, %v3370
      %v3709 = vsel %vm3661, %v2011, %v3372
      %v3711 = vsel %vm439, %v3664, %v3390
      %v3713 = vsel %vm439, %v3667, %v3392
      %v3715 = vsel %vm439, %v3670, %v3394
      %v3717 = vsel %vm439, %v3673, %v3396
      %v3719 = vsel %vm439, %v3676, %v3398
      %v3721 = vsel %vm439, %v3679, %v3400
      %v3723 = vsel %vm439, %v3682, %v3402
      %v3725 = vsel %vm439, %v3685, %v3404
      %v3727 = vsel %vm439, %v3688, %v3406
      %v3729 = vsel %vm439, %v3691, %v3408
      %v3731 = vsel %vm439, %v3694, %v3410
      %v3733 = vsel %vm439, %v3697, %v3412
      %v3735 = vsel %vm439, %v3700, %v3414
      %v3737 = vsel %vm439, %v3703, %v3416
      %v3739 = vsel %vm439, %v3706, %v3418
      %v3741 = vsel %vm439, %v3709, %v3420
      %vm3742 = vcmask 785408
      %v3744 = vsel %vm3742, %v3711, %v3438
      %v3747 = vsel %vm3742, %v3713, %v3440
      %v3750 = vsel %vm3742, %v3715, %v3442
      %v3753 = vsel %vm3742, %v3717, %v3444
      %v3756 = vsel %vm3742, %v3719, %v3446
      %v3759 = vsel %vm3742, %v3721, %v3448
      %v3762 = vsel %vm3742, %v3723, %v3450
      %v3765 = vsel %vm3742, %v3725, %v3452
      %v3768 = vsel %vm3742, %v3727, %v3454
      %v3771 = vsel %vm3742, %v3729, %v3456
      %v3774 = vsel %vm3742, %v3731, %v3458
      %v3777 = vsel %vm3742, %v3733, %v3460
      %v3780 = vsel %vm3742, %v3735, %v3462
      %v3783 = vsel %vm3742, %v3737, %v3464
      %v3786 = vsel %vm3742, %v3739, %v3466
      %v3789 = vsel %vm3742, %v3741, %v3468
      %v3793 = vsel %vm3661, %v3486, %v3534
      %v3796 = vsel %vm3661, %v3488, %v3536
      %v3799 = vsel %vm3661, %v3490, %v3538
      %v3802 = vsel %vm3661, %v3492, %v3540
      %v3805 = vsel %vm3661, %v3494, %v3542
      %v3808 = vsel %vm3661, %v3496, %v3544
      %v3811 = vsel %vm3661, %v3498, %v3546
      %v3814 = vsel %vm3661, %v3500, %v3548
      %v3817 = vsel %vm3661, %v3502, %v3550
      %v3820 = vsel %vm3661, %v3504, %v3552
      %v3823 = vsel %vm3661, %v3506, %v3554
      %v3826 = vsel %vm3661, %v3508, %v3556
      %v3829 = vsel %vm3661, %v3510, %v3558
      %v3832 = vsel %vm3661, %v3512, %v3560
      %v3835 = vsel %vm3661, %v3514, %v3562
      %v3838 = vsel %vm3661, %v3516, %v3564
      %v3840 = vsel %vm439, %v3793, %v3582
      %v3842 = vsel %vm439, %v3796, %v3584
      %v3844 = vsel %vm439, %v3799, %v3586
      %v3846 = vsel %vm439, %v3802, %v3588
      %v3848 = vsel %vm439, %v3805, %v3590
      %v3850 = vsel %vm439, %v3808, %v3592
      %v3852 = vsel %vm439, %v3811, %v3594
      %v3854 = vsel %vm439, %v3814, %v3596
      %v3856 = vsel %vm439, %v3817, %v3598
      %v3858 = vsel %vm439, %v3820, %v3600
      %v3860 = vsel %vm439, %v3823, %v3602
      %v3862 = vsel %vm439, %v3826, %v3604
      %v3864 = vsel %vm439, %v3829, %v3606
      %v3866 = vsel %vm439, %v3832, %v3608
      %v3868 = vsel %vm439, %v3835, %v3610
      %v3870 = vsel %vm439, %v3838, %v3612
      %v3872 = vsel %vm3742, %v3840, %v3630
      %v3875 = vsel %vm3742, %v3842, %v3632
      %v3878 = vsel %vm3742, %v3844, %v3634
      %v3881 = vsel %vm3742, %v3846, %v3636
      %v3884 = vsel %vm3742, %v3848, %v3638
      %v3887 = vsel %vm3742, %v3850, %v3640
      %v3890 = vsel %vm3742, %v3852, %v3642
      %v3893 = vsel %vm3742, %v3854, %v3644
      %v3896 = vsel %vm3742, %v3856, %v3646
      %v3899 = vsel %vm3742, %v3858, %v3648
      %v3902 = vsel %vm3742, %v3860, %v3650
      %v3905 = vsel %vm3742, %v3862, %v3652
      %v3908 = vsel %vm3742, %v3864, %v3654
      %v3911 = vsel %vm3742, %v3866, %v3656
      %v3914 = vsel %vm3742, %v3868, %v3658
      %v3917 = vsel %vm3742, %v3870, %v3660
      %v3919 = vld [vmem:[%s3] sm:$0xf]
      %v3920 = vld [vmem:[%s3 + $0x4] sm:$0xf]
      %v3921 = vld [vmem:[%s3 + $0x8] sm:$0xf]
      %v3922 = vld [vmem:[%s3 + $0xc] sm:$0xf]
      %v3923 = vld [vmem:[%s3 + $0x10] sm:$0xf]
      %v3924 = vld [vmem:[%s3 + $0x14] sm:$0xf]
      %v3925 = vld [vmem:[%s3 + $0x18] sm:$0xf]
      %v3926 = vld [vmem:[%s3 + $0x1c] sm:$0xf]
      %v3927 = vld [vmem:[%s3 + $0x20] sm:$0xf]
      %v3928 = vld [vmem:[%s3 + $0x24] sm:$0xf]
      %v3929 = vld [vmem:[%s3 + $0x28] sm:$0xf]
      %v3930 = vld [vmem:[%s3 + $0x2c] sm:$0xf]
      %v3931 = vld [vmem:[%s3 + $0x30] sm:$0xf]
      %v3932 = vld [vmem:[%s3 + $0x34] sm:$0xf]
      %v3933 = vld [vmem:[%s3 + $0x38] sm:$0xf]
      %v3934 = vld [vmem:[%s3 + $0x3c] sm:$0xf]
      %v3935 = vld [vmem:[%s3 + $0x40] sm:$0xf]
      %v3936 = vld [vmem:[%s3 + $0x44] sm:$0xf]
      %v3937 = vld [vmem:[%s3 + $0x48] sm:$0xf]
      %v3938 = vld [vmem:[%s3 + $0x4c] sm:$0xf]
      %v3939 = vld [vmem:[%s3 + $0x50] sm:$0xf]
      %v3940 = vld [vmem:[%s3 + $0x54] sm:$0xf]
      %v3941 = vld [vmem:[%s3 + $0x58] sm:$0xf]
      %v3942 = vld [vmem:[%s3 + $0x5c] sm:$0xf]
      %v3943 = vld [vmem:[%s3 + $0x60] sm:$0xf]
      %v3944 = vld [vmem:[%s3 + $0x64] sm:$0xf]
      %v3945 = vld [vmem:[%s3 + $0x68] sm:$0xf]
      %v3946 = vld [vmem:[%s3 + $0x6c] sm:$0xf]
      %v3947 = vld [vmem:[%s3 + $0x70] sm:$0xf]
      %v3948 = vld [vmem:[%s3 + $0x74] sm:$0xf]
      %v3949 = vld [vmem:[%s3 + $0x78] sm:$0xf]
      %v3950 = vld [vmem:[%s3 + $0x7c] sm:$0xf]
      %v3951 = vld [vmem:[%s3 + $0x80] sm:$0xf]
      %v3952 = vld [vmem:[%s3 + $0x84] sm:$0xf]
      %v3953 = vld [vmem:[%s3 + $0x88] sm:$0xf]
      %v3954 = vld [vmem:[%s3 + $0x8c] sm:$0xf]
      %v3955 = vld [vmem:[%s4] sm:$0x1]
      %v3957 = vlaneseq
      %v3958 = vshrl.u32 %v3957, 7
      %v3959 = vsub.s32 0, %v3958
      %v3960 = vrot.slane %v3955, %v3959
      %v3998 = vunpack.c.l.b16 %v3919
      %v3999 = vunpack.c.l.b16 %v3920
      %v4000 = vunpack.c.l.b16 %v3921
      %v4001 = vunpack.c.l.b16 %v3922
      %v4002 = vunpack.c.l.b16 %v3923
      %v4003 = vunpack.c.l.b16 %v3924
      %v4004 = vunpack.c.l.b16 %v3925
      %v4005 = vunpack.c.l.b16 %v3926
      %v4006 = vunpack.c.l.b16 %v3927
      %v4007 = vunpack.c.l.b16 %v3928
      %v4008 = vunpack.c.l.b16 %v3929
      %v4009 = vunpack.c.l.b16 %v3930
      %v4010 = vunpack.c.l.b16 %v3931
      %v4011 = vunpack.c.l.b16 %v3932
      %v4012 = vunpack.c.l.b16 %v3933
      %v4013 = vunpack.c.l.b16 %v3934
      %v4014 = vunpack.c.l.b16 %v3935
      %v4015 = vunpack.c.l.b16 %v3936
      %v4016 = vunpack.c.l.b16 %v3937
      %v4017 = vunpack.c.l.b16 %v3938
      %v4018 = vunpack.c.l.b16 %v3939
      %v4019 = vunpack.c.l.b16 %v3940
      %v4020 = vunpack.c.l.b16 %v3941
      %v4021 = vunpack.c.l.b16 %v3942
      %v4022 = vunpack.c.l.b16 %v3943
      %v4023 = vunpack.c.l.b16 %v3944
      %v4024 = vunpack.c.l.b16 %v3945
      %v4025 = vunpack.c.l.b16 %v3946
      %v4026 = vunpack.c.l.b16 %v3947
      %v4027 = vunpack.c.l.b16 %v3948
      %v4028 = vunpack.c.l.b16 %v3949
      %v4029 = vunpack.c.l.b16 %v3950
      %v4030 = vunpack.c.l.b16 %v3951
      %v4031 = vunpack.c.l.b16 %v3952
      %v4032 = vunpack.c.l.b16 %v3953
      %v4033 = vunpack.c.l.b16 %v3954
      %v4034 = vpack.c.b16 %v3999, %v3998
      %v4035 = vpack.c.b16 %v4001, %v4000
      %v4036 = vpack.c.b16 %v4003, %v4002
      %v4037 = vpack.c.b16 %v4005, %v4004
      %v4038 = vpack.c.b16 %v4007, %v4006
      %v4039 = vpack.c.b16 %v4009, %v4008
      %v4040 = vpack.c.b16 %v4011, %v4010
      %v4041 = vpack.c.b16 %v4013, %v4012
      %v4042 = vpack.c.b16 %v4015, %v4014
      %v4043 = vpack.c.b16 %v4017, %v4016
      %v4044 = vpack.c.b16 %v4019, %v4018
      %v4045 = vpack.c.b16 %v4021, %v4020
      %v4046 = vpack.c.b16 %v4023, %v4022
      %v4047 = vpack.c.b16 %v4025, %v4024
      %v4048 = vpack.c.b16 %v4027, %v4026
      %v4049 = vpack.c.b16 %v4029, %v4028
      %v4050 = vpack.c.b16 %v4031, %v4030
      %v4051 = vpack.c.b16 %v4033, %v4032
      %v4071 = vsel %vm3661, %v3309, 0
      %v4074 = vsel %vm3661, %v3310, 0
      %v4077 = vsel %vm3661, %v3311, 0
      %v4080 = vsel %vm3661, %v3312, 0
      %v4083 = vsel %vm3661, %v3313, 0
      %v4086 = vsel %vm3661, %v3314, 0
      %v4089 = vsel %vm3661, %v3315, 0
      %v4092 = vsel %vm3661, %v3316, 0
      %v4095 = vsel %vm3661, %v3317, 0
      %v4098 = vsel %vm3661, %v3318, 0
      %v4101 = vsel %vm3661, %v3319, 0
      %v4104 = vsel %vm3661, %v3320, 0
      %v4107 = vsel %vm3661, %v3321, 0
      %v4110 = vsel %vm3661, %v3322, 0
      %v4113 = vsel %vm3661, %v3323, 0
      %v4116 = vsel %vm3661, %v3324, 0
      %4118 = vmatprep.subr.bf16.mxu0 0
      %4119 = vmatpush1.bf16.msra.mxu0 %v4034
      %4120 = vmatprep.subr.bf16.mxu0 0
      %4121 = vmatpush1.bf16.msra.mxu0 %v4035
      %4122 = vmatprep.subr.bf16.mxu0 0
      %4123 = vmatpush1.bf16.msra.mxu0 %v4036
      %4124 = vmatprep.subr.bf16.mxu0 0
      %4125 = vmatpush1.bf16.msra.mxu0 %v4037
      %4126 = vmatprep.subr.bf16.mxu0 0
      %4127 = vmatpush1.bf16.msra.mxu0 %v4038
      %4128 = vmatprep.subr.bf16.mxu0 0
      %4129 = vmatpush1.bf16.msra.mxu0 %v4039
      %4130 = vmatprep.subr.bf16.mxu0 0
      %4131 = vmatpush1.bf16.msra.mxu0 %v4040
      %4132 = vmatprep.subr.bf16.mxu0 0
      %4133 = vmatpush1.bf16.msra.mxu0 %v4041
      %4134 = vmatprep.subr.bf16.mxu0 0
      %4135 = vmatpush1.bf16.msra.mxu0 %v4042
      %4136 = vmatprep.subr.bf16.mxu0 0
      %4137 = vmatpush1.bf16.msra.mxu0 %v4043
      %4138 = vmatprep.subr.bf16.mxu0 0
      %4139 = vmatpush1.bf16.msra.mxu0 %v4044
      %4140 = vmatprep.subr.bf16.mxu0 0
      %4141 = vmatpush1.bf16.msra.mxu0 %v4045
      %4142 = vmatprep.subr.bf16.mxu0 0
      %4143 = vmatpush1.bf16.msra.mxu0 %v4046
      %4144 = vmatprep.subr.bf16.mxu0 0
      %4145 = vmatpush1.bf16.msra.mxu0 %v4047
      %4146 = vmatprep.subr.bf16.mxu0 0
      %4147 = vmatpush1.bf16.msra.mxu0 %v4048
      %4148 = vmatprep.subr.bf16.mxu0 0
      %4149 = vmatpush1.bf16.msra.mxu0 %v4049
      %4150 = vmatprep.mubr.bf16.mxu0 %v3872
      %4151 = vmatmul.mubr.bf16.gmra.mrb[0].mxu0 %v3744
      %v4152 = vpop.f32.mrb[0].mxu0
      %v4153 = vadd.f32 %v3960, %v4152
      %v4154 = vpop.f32.mrb[0].mxu0
      %v4155 = vpop.f32.mrb[0].mxu0
      %v4156 = vadd.f32 %v3960, %v4155
      %v4157 = vpop.f32.mrb[0].mxu0
      %4158 = vmatprep.mubr.bf16.mxu0 %v3875
      %4159 = vmatmul.mubr.bf16.gmra.mrb[0].mxu0 %v3747
      %v4160 = vpop.f32.mrb[0].mxu0
      %v4161 = vadd.f32 %v3960, %v4160
      %v4162 = vpop.f32.mrb[0].mxu0
      %v4163 = vpop.f32.mrb[0].mxu0
      %v4164 = vadd.f32 %v3960, %v4163
      %v4165 = vpop.f32.mrb[0].mxu0
      %4166 = vmatprep.mubr.bf16.mxu0 %v3878
      %4167 = vmatmul.mubr.bf16.gmra.mrb[0].mxu0 %v3750
      %v4168 = vpop.f32.mrb[0].mxu0
      %v4169 = vadd.f32 %v3960, %v4168
      %v4170 = vpop.f32.mrb[0].mxu0
      %v4171 = vpop.f32.mrb[0].mxu0
      %v4172 = vadd.f32 %v3960, %v4171
      %v4173 = vpop.f32.mrb[0].mxu0
      %4174 = vmatprep.mubr.bf16.mxu0 %v3881
      %4175 = vmatmul.mubr.bf16.gmra.mrb[0].mxu0 %v3753
      %v4176 = vpop.f32.mrb[0].mxu0
      %v4177 = vadd.f32 %v3960, %v4176
      %v4178 = vpop.f32.mrb[0].mxu0
      %v4179 = vpop.f32.mrb[0].mxu0
      %v4180 = vadd.f32 %v3960, %v4179
      %v4181 = vpop.f32.mrb[0].mxu0
      %4182 = vmatprep.mubr.bf16.mxu0 %v3884
      %4183 = vmatmul.mubr.bf16.gmra.mrb[0].mxu0 %v3756
      %v4184 = vpop.f32.mrb[0].mxu0
      %v4185 = vadd.f32 %v3960, %v4184
      %v4186 = vpop.f32.mrb[0].mxu0
      %v4187 = vpop.f32.mrb[0].mxu0
      %v4188 = vadd.f32 %v3960, %v4187
      %v4189 = vpop.f32.mrb[0].mxu0
      %4190 = vmatprep.mubr.bf16.mxu0 %v3887
      %4191 = vmatmul.mubr.bf16.gmra.mrb[0].mxu0 %v3759
      %v4192 = vpop.f32.mrb[0].mxu0
      %v4193 = vadd.f32 %v3960, %v4192
      %v4194 = vpop.f32.mrb[0].mxu0
      %v4195 = vpop.f32.mrb[0].mxu0
      %v4196 = vadd.f32 %v3960, %v4195
      %v4197 = vpop.f32.mrb[0].mxu0
      %4198 = vmatprep.mubr.bf16.mxu0 %v3890
      %4199 = vmatmul.mubr.bf16.gmra.mrb[0].mxu0 %v3762
      %v4200 = vpop.f32.mrb[0].mxu0
      %v4201 = vadd.f32 %v3960, %v4200
      %v4202 = vpop.f32.mrb[0].mxu0
      %v4203 = vpop.f32.mrb[0].mxu0
      %v4204 = vadd.f32 %v3960, %v4203
      %v4205 = vpop.f32.mrb[0].mxu0
      %4206 = vmatprep.mubr.bf16.mxu0 %v3893
      %4207 = vmatmul.mubr.bf16.gmra.mrb[0].mxu0 %v3765
      %v4208 = vpop.f32.mrb[0].mxu0
      %v4209 = vadd.f32 %v3960, %v4208
      %v4210 = vpop.f32.mrb[0].mxu0
      %v4211 = vpop.f32.mrb[0].mxu0
      %v4212 = vadd.f32 %v3960, %v4211
      %v4213 = vpop.f32.mrb[0].mxu0
      %4214 = vmatprep.mubr.bf16.mxu0 %v3896
      %4215 = vmatmul.mubr.bf16.gmra.mrb[0].mxu0 %v3768
      %v4216 = vpop.f32.mrb[0].mxu0
      %v4217 = vadd.f32 %v3960, %v4216
      %v4218 = vpop.f32.mrb[0].mxu0
      %v4219 = vpop.f32.mrb[0].mxu0
      %v4220 = vadd.f32 %v3960, %v4219
      %v4221 = vpop.f32.mrb[0].mxu0
      %4222 = vmatprep.mubr.bf16.mxu0 %v3899
      %4223 = vmatmul.mubr.bf16.gmra.mrb[0].mxu0 %v3771
      %v4224 = vpop.f32.mrb[0].mxu0
      %v4225 = vadd.f32 %v3960, %v4224
      %v4226 = vpop.f32.mrb[0].mxu0
      %v4227 = vpop.f32.mrb[0].mxu0
      %v4228 = vadd.f32 %v3960, %v4227
      %v4229 = vpop.f32.mrb[0].mxu0
      %4230 = vmatprep.mubr.bf16.mxu0 %v3902
      %4231 = vmatmul.mubr.bf16.gmra.mrb[0].mxu0 %v3774
      %v4232 = vpop.f32.mrb[0].mxu0
      %v4233 = vadd.f32 %v3960, %v4232
      %v4234 = vpop.f32.mrb[0].mxu0
      %v4235 = vpop.f32.mrb[0].mxu0
      %v4236 = vadd.f32 %v3960, %v4235
      %v4237 = vpop.f32.mrb[0].mxu0
      %4238 = vmatprep.mubr.bf16.mxu0 %v3905
      %4239 = vmatmul.mubr.bf16.gmra.mrb[0].mxu0 %v3777
      %v4240 = vpop.f32.mrb[0].mxu0
      %v4241 = vadd.f32 %v3960, %v4240
      %v4242 = vpop.f32.mrb[0].mxu0
      %v4243 = vpop.f32.mrb[0].mxu0
      %v4244 = vadd.f32 %v3960, %v4243
      %v4245 = vpop.f32.mrb[0].mxu0
      %4246 = vmatprep.mubr.bf16.mxu0 %v3908
      %4247 = vmatmul.mubr.bf16.gmra.mrb[0].mxu0 %v3780
      %v4248 = vpop.f32.mrb[0].mxu0
      %v4249 = vadd.f32 %v3960, %v4248
      %v4250 = vpop.f32.mrb[0].mxu0
      %v4251 = vpop.f32.mrb[0].mxu0
      %v4252 = vadd.f32 %v3960, %v4251
      %v4253 = vpop.f32.mrb[0].mxu0
      %4254 = vmatprep.mubr.bf16.mxu0 %v3911
      %4255 = vmatmul.mubr.bf16.gmra.mrb[0].mxu0 %v3783
      %v4256 = vpop.f32.mrb[0].mxu0
      %v4257 = vadd.f32 %v3960, %v4256
      %v4258 = vpop.f32.mrb[0].mxu0
      %v4259 = vpop.f32.mrb[0].mxu0
      %v4260 = vadd.f32 %v3960, %v4259
      %v4261 = vpop.f32.mrb[0].mxu0
      %4262 = vmatprep.mubr.bf16.mxu0 %v3914
      %4263 = vmatmul.mubr.bf16.gmra.mrb[0].mxu0 %v3786
      %v4264 = vpop.f32.mrb[0].mxu0
      %v4265 = vadd.f32 %v3960, %v4264
      %v4266 = vpop.f32.mrb[0].mxu0
      %v4267 = vpop.f32.mrb[0].mxu0
      %v4268 = vadd.f32 %v3960, %v4267
      %v4269 = vpop.f32.mrb[0].mxu0
      %4270 = vmatprep.mubr.bf16.mxu0 %v3917
      %4271 = vmatmul.mubr.bf16.gmra.mrb[0].mxu0 %v3789
      %v4272 = vpop.f32.mrb[0].mxu0
      %v4273 = vadd.f32 %v3960, %v4272
      %v4274 = vpop.f32.mrb[0].mxu0
      %v4275 = vpop.f32.mrb[0].mxu0
      %v4276 = vadd.f32 %v3960, %v4275
      %v4277 = vpop.f32.mrb[0].mxu0
      %4278 = vdwg.mxu0
      %4279 = vmatprep.subr.bf16.mxu0 0
      %4280 = vmatpush1.bf16.msra.mxu0 %v4050
      %4281 = vmatprep.subr.bf16.mxu0 0
      %4282 = vmatpush1.bf16.msra.mxu0 %v4051
      %4283 = vmatprep.subr.bf16.mxu0 0
      %4284 = vmatpush1.bf16.msra.mxu0 0
      %4285 = vmatprep.subr.bf16.mxu0 0
      %4286 = vmatpush1.bf16.msra.mxu0 0
      %4287 = vmatprep.subr.bf16.mxu0 0
      %4288 = vmatpush1.bf16.msra.mxu0 0
      %4289 = vmatprep.subr.bf16.mxu0 0
      %4290 = vmatpush1.bf16.msra.mxu0 0
      %4291 = vmatprep.subr.bf16.mxu0 0
      %4292 = vmatpush1.bf16.msra.mxu0 0
      %4293 = vmatprep.subr.bf16.mxu0 0
      %4294 = vmatpush1.bf16.msra.mxu0 0
      %4295 = vmatprep.subr.bf16.mxu0 0
      %4296 = vmatpush1.bf16.msra.mxu0 0
      %4297 = vmatprep.subr.bf16.mxu0 0
      %4298 = vmatpush1.bf16.msra.mxu0 0
      %4299 = vmatprep.subr.bf16.mxu0 0
      %4300 = vmatpush1.bf16.msra.mxu0 0
      %4301 = vmatprep.subr.bf16.mxu0 0
      %4302 = vmatpush1.bf16.msra.mxu0 0
      %4303 = vmatprep.subr.bf16.mxu0 0
      %4304 = vmatpush1.bf16.msra.mxu0 0
      %4305 = vmatprep.subr.bf16.mxu0 0
      %4306 = vmatpush1.bf16.msra.mxu0 0
      %4307 = vmatprep.subr.bf16.mxu0 0
      %4308 = vmatpush1.bf16.msra.mxu0 0
      %4309 = vmatprep.subr.bf16.mxu0 0
      %4310 = vmatpush1.bf16.msra.mxu0 0
      %4311 = vmatprep.mubr.bf16.mxu0 0
      %4312 = vmatmul.mubr.bf16.gmra.mrb[0].mxu0 %v4071
      %v4313 = vpop.f32.mrb[0].mxu0
      %v4314 = vadd.f32 %v4153, %v4313
      %v4315 = vpop.f32.mrb[0].mxu0
      %v4316 = vpop.f32.mrb[0].mxu0
      %v4317 = vadd.f32 %v4156, %v4316
      %v4318 = vpop.f32.mrb[0].mxu0
      %4319 = vmatprep.mubr.bf16.mxu0 0
      %4320 = vmatmul.mubr.bf16.gmra.mrb[0].mxu0 %v4074
      %v4321 = vpop.f32.mrb[0].mxu0
      %v4322 = vadd.f32 %v4161, %v4321
      %v4323 = vpop.f32.mrb[0].mxu0
      %v4324 = vpop.f32.mrb[0].mxu0
      %v4325 = vadd.f32 %v4164, %v4324
      %v4326 = vpop.f32.mrb[0].mxu0
      %4327 = vmatprep.mubr.bf16.mxu0 0
      %4328 = vmatmul.mubr.bf16.gmra.mrb[0].mxu0 %v4077
      %v4329 = vpop.f32.mrb[0].mxu0
      %v4330 = vadd.f32 %v4169, %v4329
      %v4331 = vpop.f32.mrb[0].mxu0
      %v4332 = vpop.f32.mrb[0].mxu0
      %v4333 = vadd.f32 %v4172, %v4332
      %v4334 = vpop.f32.mrb[0].mxu0
      %4335 = vmatprep.mubr.bf16.mxu0 0
      %4336 = vmatmul.mubr.bf16.gmra.mrb[0].mxu0 %v4080
      %v4337 = vpop.f32.mrb[0].mxu0
      %v4338 = vadd.f32 %v4177, %v4337
      %v4339 = vpop.f32.mrb[0].mxu0
      %v4340 = vpop.f32.mrb[0].mxu0
      %v4341 = vadd.f32 %v4180, %v4340
      %v4342 = vpop.f32.mrb[0].mxu0
      %4343 = vmatprep.mubr.bf16.mxu0 0
      %4344 = vmatmul.mubr.bf16.gmra.mrb[0].mxu0 %v4083
      %v4345 = vpop.f32.mrb[0].mxu0
      %v4346 = vadd.f32 %v4185, %v4345
      %v4347 = vpop.f32.mrb[0].mxu0
      %v4348 = vpop.f32.mrb[0].mxu0
      %v4349 = vadd.f32 %v4188, %v4348
      %v4350 = vpop.f32.mrb[0].mxu0
      %4351 = vmatprep.mubr.bf16.mxu0 0
      %4352 = vmatmul.mubr.bf16.gmra.mrb[0].mxu0 %v4086
      %v4353 = vpop.f32.mrb[0].mxu0
      %v4354 = vadd.f32 %v4193, %v4353
      %v4355 = vpop.f32.mrb[0].mxu0
      %v4356 = vpop.f32.mrb[0].mxu0
      %v4357 = vadd.f32 %v4196, %v4356
      %v4358 = vpop.f32.mrb[0].mxu0
      %4359 = vmatprep.mubr.bf16.mxu0 0
      %4360 = vmatmul.mubr.bf16.gmra.mrb[0].mxu0 %v4089
      %v4361 = vpop.f32.mrb[0].mxu0
      %v4362 = vadd.f32 %v4201, %v4361
      %v4363 = vpop.f32.mrb[0].mxu0
      %v4364 = vpop.f32.mrb[0].mxu0
      %v4365 = vadd.f32 %v4204, %v4364
      %v4366 = vpop.f32.mrb[0].mxu0
      %4367 = vmatprep.mubr.bf16.mxu0 0
      %4368 = vmatmul.mubr.bf16.gmra.mrb[0].mxu0 %v4092
      %v4369 = vpop.f32.mrb[0].mxu0
      %v4370 = vadd.f32 %v4209, %v4369
      %v4371 = vpop.f32.mrb[0].mxu0
      %v4372 = vpop.f32.mrb[0].mxu0
      %v4373 = vadd.f32 %v4212, %v4372
      %v4374 = vpop.f32.mrb[0].mxu0
      %4375 = vmatprep.mubr.bf16.mxu0 0
      %4376 = vmatmul.mubr.bf16.gmra.mrb[0].mxu0 %v4095
      %v4377 = vpop.f32.mrb[0].mxu0
      %v4378 = vadd.f32 %v4217, %v4377
      %v4379 = vpop.f32.mrb[0].mxu0
      %v4380 = vpop.f32.mrb[0].mxu0
      %v4381 = vadd.f32 %v4220, %v4380
      %v4382 = vpop.f32.mrb[0].mxu0
      %4383 = vmatprep.mubr.bf16.mxu0 0
      %4384 = vmatmul.mubr.bf16.gmra.mrb[0].mxu0 %v4098
      %v4385 = vpop.f32.mrb[0].mxu0
      %v4386 = vadd.f32 %v4225, %v4385
      %v4387 = vpop.f32.mrb[0].mxu0
      %v4388 = vpop.f32.mrb[0].mxu0
      %v4389 = vadd.f32 %v4228, %v4388
      %v4390 = vpop.f32.mrb[0].mxu0
      %4391 = vmatprep.mubr.bf16.mxu0 0
      %4392 = vmatmul.mubr.bf16.gmra.mrb[0].mxu0 %v4101
      %v4393 = vpop.f32.mrb[0].mxu0
      %v4394 = vadd.f32 %v4233, %v4393
      %v4395 = vpop.f32.mrb[0].mxu0
      %v4396 = vpop.f32.mrb[0].mxu0
      %v4397 = vadd.f32 %v4236, %v4396
      %v4398 = vpop.f32.mrb[0].mxu0
      %4399 = vmatprep.mubr.bf16.mxu0 0
      %4400 = vmatmul.mubr.bf16.gmra.mrb[0].mxu0 %v4104
      %v4401 = vpop.f32.mrb[0].mxu0
      %v4402 = vadd.f32 %v4241, %v4401
      %v4403 = vpop.f32.mrb[0].mxu0
      %v4404 = vpop.f32.mrb[0].mxu0
      %v4405 = vadd.f32 %v4244, %v4404
      %v4406 = vpop.f32.mrb[0].mxu0
      %4407 = vmatprep.mubr.bf16.mxu0 0
      %4408 = vmatmul.mubr.bf16.gmra.mrb[0].mxu0 %v4107
      %v4409 = vpop.f32.mrb[0].mxu0
      %v4410 = vadd.f32 %v4249, %v4409
      %v4411 = vpop.f32.mrb[0].mxu0
      %v4412 = vpop.f32.mrb[0].mxu0
      %v4413 = vadd.f32 %v4252, %v4412
      %v4414 = vpop.f32.mrb[0].mxu0
      %4415 = vmatprep.mubr.bf16.mxu0 0
      %4416 = vmatmul.mubr.bf16.gmra.mrb[0].mxu0 %v4110
      %v4417 = vpop.f32.mrb[0].mxu0
      %v4418 = vadd.f32 %v4257, %v4417
      %v4419 = vpop.f32.mrb[0].mxu0
      %v4420 = vpop.f32.mrb[0].mxu0
      %v4421 = vadd.f32 %v4260, %v4420
      %v4422 = vpop.f32.mrb[0].mxu0
      %4423 = vmatprep.mubr.bf16.mxu0 0
      %4424 = vmatmul.mubr.bf16.gmra.mrb[0].mxu0 %v4113
      %v4425 = vpop.f32.mrb[0].mxu0
      %v4426 = vadd.f32 %v4265, %v4425
      %v4427 = vpop.f32.mrb[0].mxu0
      %v4428 = vpop.f32.mrb[0].mxu0
      %v4429 = vadd.f32 %v4268, %v4428
      %v4430 = vpop.f32.mrb[0].mxu0
      %4431 = vmatprep.mubr.bf16.mxu0 0
      %4432 = vmatmul.mubr.bf16.gmra.mrb[0].mxu0 %v4116
      %v4433 = vpop.f32.mrb[0].mxu0
      %v4434 = vadd.f32 %v4273, %v4433
      %v4435 = vpop.f32.mrb[0].mxu0
      %v4436 = vpop.f32.mrb[0].mxu0
      %v4437 = vadd.f32 %v4276, %v4436
      %v4438 = vpop.f32.mrb[0].mxu0
      %4439 = vdwg.mxu0
      %v4440 = vpack.c.bf16 %v4317, %v4314
      %v4441 = vpack.c.bf16 %v4325, %v4322
      %v4442 = vpack.c.bf16 %v4333, %v4330
      %v4443 = vpack.c.bf16 %v4341, %v4338
      %v4444 = vpack.c.bf16 %v4349, %v4346
      %v4445 = vpack.c.bf16 %v4357, %v4354
      %v4446 = vpack.c.bf16 %v4365, %v4362
      %v4447 = vpack.c.bf16 %v4373, %v4370
      %v4448 = vpack.c.bf16 %v4381, %v4378
      %v4449 = vpack.c.bf16 %v4389, %v4386
      %v4450 = vpack.c.bf16 %v4397, %v4394
      %v4451 = vpack.c.bf16 %v4405, %v4402
      %v4452 = vpack.c.bf16 %v4413, %v4410
      %v4453 = vpack.c.bf16 %v4421, %v4418
      %v4454 = vpack.c.bf16 %v4429, %v4426
      %v4455 = vpack.c.bf16 %v4437, %v4434
      %v4472 = vunpack.c.l.b16 %v4440
      %v4473 = vunpack.c.h.b16 %v4440
      %v4474 = vunpack.c.l.b16 %v4441
      %v4475 = vunpack.c.h.b16 %v4441
      %v4476 = vunpack.c.l.b16 %v4442
      %v4477 = vunpack.c.h.b16 %v4442
      %v4478 = vunpack.c.l.b16 %v4443
      %v4479 = vunpack.c.h.b16 %v4443
      %v4480 = vunpack.c.l.b16 %v4444
      %v4481 = vunpack.c.h.b16 %v4444
      %v4482 = vunpack.c.l.b16 %v4445
      %v4483 = vunpack.c.h.b16 %v4445
      %v4484 = vunpack.c.l.b16 %v4446
      %v4485 = vunpack.c.h.b16 %v4446
      %v4486 = vunpack.c.l.b16 %v4447
      %v4487 = vunpack.c.h.b16 %v4447
      %v4488 = vunpack.c.l.b16 %v4448
      %v4489 = vunpack.c.h.b16 %v4448
      %v4490 = vunpack.c.l.b16 %v4449
      %v4491 = vunpack.c.h.b16 %v4449
      %v4492 = vunpack.c.l.b16 %v4450
      %v4493 = vunpack.c.h.b16 %v4450
      %v4494 = vunpack.c.l.b16 %v4451
      %v4495 = vunpack.c.h.b16 %v4451
      %v4496 = vunpack.c.l.b16 %v4452
      %v4497 = vunpack.c.h.b16 %v4452
      %v4498 = vunpack.c.l.b16 %v4453
      %v4499 = vunpack.c.h.b16 %v4453
      %v4500 = vunpack.c.l.b16 %v4454
      %v4501 = vunpack.c.h.b16 %v4454
      %v4502 = vunpack.c.l.b16 %v4455
      %v4503 = vunpack.c.h.b16 %v4455
      %v4504 = vpack.c.b16 %v4472, %v4472
      %v4505 = vpack.c.b16 %v4473, %v4473
      %v4506 = vpack.c.b16 %v4474, %v4474
      %v4507 = vpack.c.b16 %v4475, %v4475
      %v4508 = vpack.c.b16 %v4476, %v4476
      %v4509 = vpack.c.b16 %v4477, %v4477
      %v4510 = vpack.c.b16 %v4478, %v4478
      %v4511 = vpack.c.b16 %v4479, %v4479
      %v4512 = vpack.c.b16 %v4480, %v4480
      %v4513 = vpack.c.b16 %v4481, %v4481
      %v4514 = vpack.c.b16 %v4482, %v4482
      %v4515 = vpack.c.b16 %v4483, %v4483
      %v4516 = vpack.c.b16 %v4484, %v4484
      %v4517 = vpack.c.b16 %v4485, %v4485
      %v4518 = vpack.c.b16 %v4486, %v4486
      %v4519 = vpack.c.b16 %v4487, %v4487
      %v4520 = vpack.c.b16 %v4488, %v4488
      %v4521 = vpack.c.b16 %v4489, %v4489
      %v4522 = vpack.c.b16 %v4490, %v4490
      %v4523 = vpack.c.b16 %v4491, %v4491
      %v4524 = vpack.c.b16 %v4492, %v4492
      %v4525 = vpack.c.b16 %v4493, %v4493
      %v4526 = vpack.c.b16 %v4494, %v4494
      %v4527 = vpack.c.b16 %v4495, %v4495
      %v4528 = vpack.c.b16 %v4496, %v4496
      %v4529 = vpack.c.b16 %v4497, %v4497
      %v4530 = vpack.c.b16 %v4498, %v4498
      %v4531 = vpack.c.b16 %v4499, %v4499
      %v4532 = vpack.c.b16 %v4500, %v4500
      %v4533 = vpack.c.b16 %v4501, %v4501
      %v4534 = vpack.c.b16 %v4502, %v4502
      %v4535 = vpack.c.b16 %v4503, %v4503
      %4568 = vst [vmem:[%s253] sm:$0xf] %v4504
      %4569 = vst [vmem:[%s253 + $0x4] sm:$0xf] %v4505
      %4570 = vst [vmem:[%s253 + $0x8] sm:$0xf] %v4506
      %4571 = vst [vmem:[%s253 + $0xc] sm:$0xf] %v4507
      %4572 = vst [vmem:[%s253 + $0x10] sm:$0xf] %v4508
      %4573 = vst [vmem:[%s253 + $0x14] sm:$0xf] %v4509
      %4574 = vst [vmem:[%s253 + $0x18] sm:$0xf] %v4510
      %4575 = vst [vmem:[%s253 + $0x1c] sm:$0xf] %v4511
      %4576 = vst [vmem:[%s253 + $0x20] sm:$0xf] %v4512
      %4577 = vst [vmem:[%s253 + $0x24] sm:$0xf] %v4513
      %4578 = vst [vmem:[%s253 + $0x28] sm:$0xf] %v4514
      %4579 = vst [vmem:[%s253 + $0x2c] sm:$0xf] %v4515
      %4580 = vst [vmem:[%s253 + $0x30] sm:$0xf] %v4516
      %4581 = vst [vmem:[%s253 + $0x34] sm:$0xf] %v4517
      %4582 = vst [vmem:[%s253 + $0x38] sm:$0xf] %v4518
      %4583 = vst [vmem:[%s253 + $0x3c] sm:$0xf] %v4519
      %4584 = vst [vmem:[%s253 + $0x40] sm:$0xf] %v4520
      %4585 = vst [vmem:[%s253 + $0x44] sm:$0xf] %v4521
      %4586 = vst [vmem:[%s253 + $0x48] sm:$0xf] %v4522
      %4587 = vst [vmem:[%s253 + $0x4c] sm:$0xf] %v4523
      %4588 = vst [vmem:[%s253 + $0x50] sm:$0xf] %v4524
      %4589 = vst [vmem:[%s253 + $0x54] sm:$0xf] %v4525
      %4590 = vst [vmem:[%s253 + $0x58] sm:$0xf] %v4526
      %4591 = vst [vmem:[%s253 + $0x5c] sm:$0xf] %v4527
      %4592 = vst [vmem:[%s253 + $0x60] sm:$0xf] %v4528
      %4593 = vst [vmem:[%s253 + $0x64] sm:$0xf] %v4529
      %4594 = vst [vmem:[%s253 + $0x68] sm:$0xf] %v4530
      %4595 = vst [vmem:[%s253 + $0x6c] sm:$0xf] %v4531
      %4596 = vst [vmem:[%s253 + $0x70] sm:$0xf] %v4532
      %4597 = vst [vmem:[%s253 + $0x74] sm:$0xf] %v4533
      %4598 = vst [vmem:[%s253 + $0x78] sm:$0xf] %v4534
      %4599 = vst [vmem:[%s253 + $0x7c] sm:$0xf] %v4535
      %s4600 = smul.u32 32, %s17
      %p4601 = scmp.lt.s32.totalorder %s4600, 63
      %s4602 = scalar_select %p4601, %s4600, 63
      %s4603 = smul.addr %s4602, 4
      %s4604 = scalar_lea.vmem %s6, %s4603
      // Predicated region
      $region45: #{pxl_attn_forward.1} parent=43 // pred_check
        %p4605 = pneg %p166
      $region46: #{pxl_attn_forward.1} parent=43 // pred_check_branch
        %4607 = sbr.rel (%p4605) target = $region48
      $region47: #{pxl_attn_forward.1} parent=43 // pred_region
        %s4608 = smul.u32 32, %s17
      $region48: #{pxl_attn_forward.1} parent=43 // pred_fallthru
        _
    $region44: #{pxl_attn_forward.1} parent=5 // pred_fallthru
      _
    %p4609 = scmp.le.s32.totalorder 2, %s12
    // Predicated region
    $region49: #{pxl_attn_forward.1} parent=5 // pred_check
      %p4610 = pneg %p4609
    $region50: #{pxl_attn_forward.1} parent=5 // pred_check_branch
      %4612 = sbr.rel (%p4610) target = $region52
    $region51: #{pxl_attn_forward.1} parent=5 // pred_region
      %s4613 = ssub.s32 %s12, 2
      // Predicated region
      $region53: #{pxl_attn_forward.1} parent=51 // pred_check
        %p4614 = pneg %p172
      $region54: #{pxl_attn_forward.1} parent=51 // pred_check_branch
        %4616 = sbr.rel (%p4614) target = $region56
      $region55: #{pxl_attn_forward.1} parent=51 // pred_region
        %s4617 = smul.u32 32, %s18
        %p4618 = scmp.lt.s32.totalorder %s4617, 63
        %s4619 = scalar_select %p4618, %s4617, 63
        %s4620 = smul.addr %s4619, 4
        %s4621 = scalar_lea.vmem %s6, %s4620
      $region56: #{pxl_attn_forward.1} parent=51 // pred_fallthru
        _
    $region52: #{pxl_attn_forward.1} parent=5 // pred_fallthru
      _
  $region6: #{pxl_attn_forward.1} parent=0 // loop_footer
    %s16 = sadd.s32 1, %s12
  $region7: #{pxl_attn_forward.1} parent=0 // loop_footer_branch
    %11 = sbr.rel target = $region3
  $region8: #{pxl_attn_forward.1} parent=0 // loop_exit
    _

</llo_original>
